<compile_context>
chip_gen: v5e
topology: v5e:2x2
jax: 0.10.0
libtpu: 0.0.40
codegen_flags: <defaults>
</compile_context>

<pallas_src>
import jax
import jax.numpy as jnp
from jax.experimental import pallas as pl
from jax.experimental.pallas import tpu as pltpu


def _round_up(x, m):
    return (x + m - 1) // m * m


# ---------------------------------------------------------------------------
# Generic tiled matmul + bias kernel:  (M, K) @ (K, N) + b  ->  (M, N)
# Used twice:
#   1) gates_x = x @ W_ih^T + (b_ih + b_hh)   for ALL timesteps at once
#   2) logits  = hs @ W_lin + b_lin           for ALL timesteps at once
# ---------------------------------------------------------------------------
def matmul_bias_kernel(x_ref, w_ref, b_ref, o_ref):
    acc = jnp.dot(x_ref[...], w_ref[...], preferred_element_type=jnp.float32)
    o_ref[...] = (acc + b_ref[...]).astype(o_ref.dtype)


def _matmul_bias(x2d, w, b, *, out_dtype=jnp.float32):
    M, K = x2d.shape
    N = w.shape[1]
    # Lane-dense output tiles; larger tiles amortize per-grid-step overhead.
    tile_n = next((c for c in (1024, 512, 256, 128) if N % c == 0), N)
    tile_m = next((c for c in (512, 256, 128) if M % c == 0), M)
    return pl.pallas_call(
        matmul_bias_kernel,
        out_shape=jax.ShapeDtypeStruct((M, N), out_dtype),
        grid=(M // tile_m, N // tile_n),
        in_specs=[
            pl.BlockSpec((tile_m, K), lambda i, j: (i, 0)),
            pl.BlockSpec((K, tile_n), lambda i, j: (0, j)),
            pl.BlockSpec((1, tile_n), lambda i, j: (0, j)),
        ],
        out_specs=pl.BlockSpec((tile_m, tile_n), lambda i, j: (i, j)),
        compiler_params=pltpu.CompilerParams(
            dimension_semantics=("parallel", "parallel"),
            vmem_limit_bytes=32 * 1024 * 1024,
        ),
    )(x2d, w, b)


# ---------------------------------------------------------------------------
# LSTM recurrence over the whole sequence (single pallas_call per batch block).
# Only the hidden-to-hidden matmul remains on the serial critical path.
# ---------------------------------------------------------------------------
def lstm_seq_kernel(gx_ref, whh_ref, hs_ref):
    # gx_ref : (S, Bb, 4*Hp) f32   precomputed x @ W_ih^T + (b_ih + b_hh)
    # whh_ref: (Hp, 4*Hp)    bf16
    # hs_ref : (S, Bb, Hp)   bf16  per-step hidden states (output)
    S = gx_ref.shape[0]
    Bb = gx_ref.shape[1]
    Hg = whh_ref.shape[0]          # padded hidden width, multiple of 128

    whh = whh_ref[...]             # hoisted: loaded once for the whole loop

    def step(t, carry):
        h, c = carry               # h: bf16 (Bb, Hg), c: f32 (Bb, Hg)
        gates = gx_ref[t] + jnp.dot(h, whh, preferred_element_type=jnp.float32)
        # Gate slices are lane-tile aligned (Hg is a multiple of 128).
        i_g = jax.nn.sigmoid(gates[:, 0 * Hg:1 * Hg])
        f_g = jax.nn.sigmoid(gates[:, 1 * Hg:2 * Hg])
        g_g = jnp.tanh(gates[:, 2 * Hg:3 * Hg])
        o_g = jax.nn.sigmoid(gates[:, 3 * Hg:4 * Hg])
        c_new = f_g * c + i_g * g_g
        h_new = o_g * jnp.tanh(c_new)
        h_bf = h_new.astype(jnp.bfloat16)
        hs_ref[t] = h_bf
        return (h_bf, c_new)

    init = (jnp.zeros((Bb, Hg), jnp.bfloat16),    # h0 = 0 (PyTorch default)
            jnp.zeros((Bb, Hg), jnp.float32))     # c0 = 0
    unroll = S if S <= 16 else 8                  # bounded unroll for long seqs
    jax.lax.fori_loop(0, S, step, init, unroll=unroll)


# ---------------------------------------------------------------------------
# Parameter padding (zero padding placed per gate so it is inert).
# ---------------------------------------------------------------------------
def _prepare_padded(params, E, H, V, E_p, H_p, V_p):
    def pad_gate_weight(w, in_dim, in_p):
        w4 = w.reshape(in_dim, 4, H)
        w4 = jnp.pad(w4, ((0, in_p - in_dim), (0, 0), (0, H_p - H)))
        return w4.reshape(in_p, 4 * H_p).astype(jnp.bfloat16)

    wih_p = pad_gate_weight(params["w_ih_t"], E, E_p)
    whh_p = pad_gate_weight(params["w_hh_t"], H, H_p)

    b = (params["b_ih"] + params["b_hh"]).reshape(4, H)        # fused bias
    b_p = jnp.pad(b, ((0, 0), (0, H_p - H))).reshape(1, 4 * H_p).astype(jnp.float32)

    wlin_p = jnp.pad(params["w_lin"],
                     ((0, H_p - H), (0, V_p - V))).astype(jnp.bfloat16)
    blin_p = jnp.pad(params["b_lin"], ((0, 0), (0, V_p - V))).astype(jnp.float32)
    return wih_p, whh_p, b_p, wlin_p, blin_p


@jax.jit
def caption_decoder_forward(params, features, captions):
    """features: (B, E) f32, captions: (B, T) int32 -> (B, T+1, V) f32."""
    V, E = params["embed"].shape
    H = params["w_hh_t"].shape[0]
    B, T = captions.shape
    S = T + 1

    B_p = _round_up(B, 16)     # full bf16 sublane packing + MXU row occupancy
    E_p = _round_up(E, 128)
    H_p = _round_up(H, 128)
    V_p = _round_up(V, 128)

    wih_p, whh_p, b_p, wlin_p, blin_p = _prepare_padded(
        params, E, H, V, E_p, H_p, V_p)

    # Build the LSTM input seq-major, bf16 from the start (no extra cast pass,
    # no big HBM transpose).
    embed_bf = params["embed"].astype(jnp.bfloat16)
    feat_bf = features.astype(jnp.bfloat16)
    emb_sm = embed_bf[captions.T]                                   # (T, B, E)
    x_sm = jnp.concatenate([feat_bf[None, :, :], emb_sm], axis=0)   # (S, B, E)
    x_sm = jnp.pad(x_sm, ((0, 0), (0, B_p - B), (0, E_p - E)))
    x2d = x_sm.reshape(S * B_p, E_p)

    # (1) gates_x for all steps in one big MXU matmul, fused bias folded in.
    gx2d = _matmul_bias(x2d, wih_p, b_p, out_dtype=jnp.float32)     # (S*B_p, 4H_p)
    gx = gx2d.reshape(S, B_p, 4 * H_p)

    # (2) recurrence: only h @ W_hh remains inside the serial time loop.
    #     Batch-parallel grid axis engages both TensorCores (v7x) when B_p >= 32.
    n_b = 2 if B_p % 32 == 0 else 1
    B_blk = B_p // n_b
    hs = pl.pallas_call(
        lstm_seq_kernel,
        out_shape=jax.ShapeDtypeStruct((S, B_p, H_p), jnp.bfloat16),
        grid=(n_b,),
        in_specs=[
            pl.BlockSpec((S, B_blk, 4 * H_p), lambda b: (0, b, 0)),  # gates_x
            pl.BlockSpec((H_p, 4 * H_p), lambda b: (0, 0)),          # W_hh^T
        ],
        out_specs=pl.BlockSpec((S, B_blk, H_p), lambda b: (0, b, 0)),
        compiler_params=pltpu.CompilerParams(
            dimension_semantics=("parallel",),
            vmem_limit_bytes=32 * 1024 * 1024,
        ),
    )(gx, whh_p)
    # TODO(synk): for very long sequences / large models, chunk the time axis
    # (grid over S chunks with carried h/c scratch) instead of keeping gx/hs
    # fully VMEM-resident (matters first on v7x's 64 MiB VMEM).

    # Small bf16 transpose (S,Bp,Hp) -> (Bp,S,Hp) so the (large) projection
    # output is produced batch-first directly (no transpose of (B,S,V)).
    hs_bm = jnp.transpose(hs, (1, 0, 2)).reshape(B_p * S, H_p)

    # (3) output projection over all timesteps at once, (M, V)-tiled.
    out2d = _matmul_bias(hs_bm, wlin_p, blin_p, out_dtype=jnp.float32)

    return out2d.reshape(B_p, S, V_p)[:B, :, :V]                   # strip padding


# ---------------------------------------------------------------------------
# Pure-JAX reference (PyTorch LSTM semantics; matmul operands cast to bf16 with
# f32 accumulation to mirror the kernel's MXU numerics).
# ---------------------------------------------------------------------------
def reference_forward(params, features, captions):
    bf = lambda a: a.astype(jnp.bfloat16)
    emb = bf(params["embed"])[captions]                              # (B, T, E)
    x = jnp.concatenate([bf(features)[:, None, :], emb], axis=1)     # (B, S, E)
    B = x.shape[0]
    H = params["w_hh_t"].shape[0]
    x_sm = jnp.transpose(x, (1, 0, 2))                               # (S, B, E)

    wih = bf(params["w_ih_t"])
    whh = bf(params["w_hh_t"])
    bias = params["b_ih"][0] + params["b_hh"][0]

    def step(carry, xt):
        h, c = carry
        gx = jnp.dot(xt, wih, preferred_element_type=jnp.float32) + bias
        gates = gx + jnp.dot(bf(h), whh, preferred_element_type=jnp.float32)
        i = jax.nn.sigmoid(gates[:, :H])
        f = jax.nn.sigmoid(gates[:, H:2 * H])
        g = jnp.tanh(gates[:, 2 * H:3 * H])
        o = jax.nn.sigmoid(gates[:, 3 * H:])
        c = f * c + i * g
        h = o * jnp.tanh(c)
        return (h, c), h

    init = (jnp.zeros((B, H), jnp.float32), jnp.zeros((B, H), jnp.float32))
    _, hs = jax.lax.scan(step, init, x_sm)                           # (S, B, H)
    out = (jnp.dot(bf(hs), bf(params["w_lin"]),
                   preferred_element_type=jnp.float32)
           + params["b_lin"][0])
    return jnp.transpose(out, (1, 0, 2))


def init_params(key, embed_size, hidden_size, vocab_size):
    E, H, V = embed_size, hidden_size, vocab_size
    ks = jax.random.split(key, 7)
    scale = 0.1
    return {
        "embed":  scale * jax.random.normal(ks[0], (V, E), jnp.float32),
        # stored pre-transposed so kernels do x @ W_ih^T / h @ W_hh^T directly
        "w_ih_t": scale * jax.random.normal(ks[1], (E, 4 * H), jnp.float32),
        "w_hh_t": scale * jax.random.normal(ks[2], (H, 4 * H), jnp.float32),
        "b_ih":   scale * jax.random.normal(ks[3], (1, 4 * H), jnp.float32),
        "b_hh":   scale * jax.random.normal(ks[4], (1, 4 * H), jnp.float32),
        "w_lin":  scale * jax.random.normal(ks[5], (H, V), jnp.float32),
        "b_lin":  scale * jax.random.normal(ks[6], (1, V), jnp.float32),
    }


if __name__ == "__main__":
    # TODO(synk): multi-layer LSTM (num_layers > 1) not implemented; module default is 1.
    B, T = 2, 8
    embed_size, hidden_size, vocab_size = 32, 32, 64

    key = jax.random.PRNGKey(0)
    k_par, k_feat, k_cap = jax.random.split(key, 3)

    params = init_params(k_par, embed_size, hidden_size, vocab_size)
    features = jax.random.normal(k_feat, (B, embed_size), jnp.float32)
    captions = jax.random.randint(k_cap, (B, T), 0, vocab_size, jnp.int32)

    out = caption_decoder_forward(params, features, captions)
    out = jax.block_until_ready(out)

    ref = reference_forward(params, features, captions)
    assert out.shape == (B, T + 1, vocab_size)
    max_err = float(jnp.max(jnp.abs(out - ref)))
    assert max_err < 5e-3, max_err

    print("KERNEL_OK")
</pallas_src>

<mosaic_0001>
module attributes {stable_mosaic.version = 11 : i64} {
  func.func @matmul_bias_kernel(%arg0: i32, %arg1: i32, %arg2: memref<144x128xbf16, #tpu.memory_space<vmem>>, %arg3: memref<128x512xbf16, #tpu.memory_space<vmem>>, %arg4: memref<1x512xf32, #tpu.memory_space<vmem>>, %arg5: memref<144x512xf32, #tpu.memory_space<vmem>>) attributes {dimension_semantics = [#tpu.dimension_semantics<parallel>, #tpu.dimension_semantics<parallel>], iteration_bounds = array<i64: 1, 1>, scalar_prefetch = 0 : i64, scratch_operands = 0 : i64, tpu.core_type = #tpu.core_type<tc>, window_params = [{transform_indices = @transform_0, window_bounds = array<i64: 144, 128>}, {transform_indices = @transform_1, window_bounds = array<i64: 128, 512>}, {transform_indices = @transform_2, window_bounds = array<i64: 1, 512>}, {transform_indices = @transform_3, window_bounds = array<i64: 144, 512>}]} {
    %c0 = arith.constant 0 : index
    %c0_0 = arith.constant 0 : index
    %0 = vector.load %arg2[%c0, %c0_0] : memref<144x128xbf16, #tpu.memory_space<vmem>>, vector<144x128xbf16>
    %c0_1 = arith.constant 0 : index
    %c0_2 = arith.constant 0 : index
    %1 = vector.load %arg3[%c0_1, %c0_2] : memref<128x512xbf16, #tpu.memory_space<vmem>>, vector<128x512xbf16>
    %cst = arith.constant dense<0.000000e+00> : vector<144x512xf32>
    %2 = tpu.matmul %0, %1, %cst {dimension_numbers = #tpu.dot_dimension_numbers<[1], [0], [0], [1], [0, 0, 1, 1], [], []>} : vector<144x128xbf16>, vector<128x512xbf16>, vector<144x512xf32> -> vector<144x512xf32>
    %c0_3 = arith.constant 0 : index
    %c0_4 = arith.constant 0 : index
    %3 = vector.load %arg4[%c0_3, %c0_4] : memref<1x512xf32, #tpu.memory_space<vmem>>, vector<1x512xf32>
    %4 = vector.broadcast %3 : vector<1x512xf32> to vector<144x512xf32>
    %5 = arith.addf %2, %4 : vector<144x512xf32>
    %c0_5 = arith.constant 0 : index
    %c0_6 = arith.constant 0 : index
    %6 = vector.load %arg5[%c0_5, %c0_6] : memref<144x512xf32, #tpu.memory_space<vmem>>, vector<144x512xf32>
    tpu.vector_store %arg5[%c0_5, %c0_6], %5 {strides = array<i32>} : memref<144x512xf32, #tpu.memory_space<vmem>>, vector<144x512xf32>,
    return
  }
  func.func @transform_0(%arg0: i32, %arg1: i32) -> (i32, i32) {
    %c0_i32 = arith.constant 0 : i32
    %c0_i32_0 = arith.constant 0 : i32
    return %arg0, %c0_i32 : i32, i32
  }
  func.func @transform_1(%arg0: i32, %arg1: i32) -> (i32, i32) {
    %c0_i32 = arith.constant 0 : i32
    %c0_i32_0 = arith.constant 0 : i32
    return %c0_i32, %arg1 : i32, i32
  }
  func.func @transform_2(%arg0: i32, %arg1: i32) -> (i32, i32) {
    %c0_i32 = arith.constant 0 : i32
    %c0_i32_0 = arith.constant 0 : i32
    return %c0_i32, %arg1 : i32, i32
  }
  func.func @transform_3(%arg0: i32, %arg1: i32) -> (i32, i32) {
    %c0_i32 = arith.constant 0 : i32
    return %arg0, %arg1 : i32, i32
  }
}

module attributes {stable_mosaic.version = 11 : i64} {
  func.func @lstm_seq_kernel(%arg0: i32, %arg1: memref<9x16x512xf32, #tpu.memory_space<vmem>>, %arg2: memref<128x512xbf16, #tpu.memory_space<vmem>>, %arg3: memref<9x16x128xbf16, #tpu.memory_space<vmem>>) attributes {dimension_semantics = [#tpu.dimension_semantics<parallel>], iteration_bounds = array<i64: 1>, scalar_prefetch = 0 : i64, scratch_operands = 0 : i64, tpu.core_type = #tpu.core_type<tc>, window_params = [{transform_indices = @transform_0, window_bounds = array<i64: 9, 16, 512>}, {pipeline_mode = #tpu.pipeline_mode<synchronous>, transform_indices = @transform_1, window_bounds = array<i64: 128, 512>}, {transform_indices = @transform_2, window_bounds = array<i64: 9, 16, 128>}]} {
    %c0 = arith.constant 0 : index
    %c0_0 = arith.constant 0 : index
    %0 = vector.load %arg2[%c0, %c0_0] : memref<128x512xbf16, #tpu.memory_space<vmem>>, vector<128x512xbf16>
    %cst = arith.constant 0.000000e+00 : bf16
    %1 = vector.broadcast %cst : bf16 to vector<16x128xbf16>
    %cst_1 = arith.constant 0.000000e+00 : f32
    %2 = vector.broadcast %cst_1 : f32 to vector<16x128xf32>
    %c0_i32 = arith.constant 0 : i32
    %3 = arith.index_cast %c0_i32 : i32 to index
    %c0_2 = arith.constant 0 : index
    %c0_3 = arith.constant 0 : index
    %4 = vector.load %arg1[%3, %c0_2, %c0_3] : memref<9x16x512xf32, #tpu.memory_space<vmem>>, vector<1x16x512xf32>
    %5 = vector.shape_cast %4 : vector<1x16x512xf32> to vector<16x512xf32>
    %cst_4 = arith.constant dense<0.000000e+00> : vector<16x512xf32>
    %6 = tpu.matmul %1, %0, %cst_4 {dimension_numbers = #tpu.dot_dimension_numbers<[1], [0], [0], [1], [0, 0, 1, 1], [], []>} : vector<16x128xbf16>, vector<128x512xbf16>, vector<16x512xf32> -> vector<16x512xf32>
    %7 = arith.addf %5, %6 : vector<16x512xf32>
    %8 = vector.extract_strided_slice %7 {offsets = [0, 0], sizes = [16, 128], strides = [1, 1]} : vector<16x512xf32> to vector<16x128xf32>
    %9 = arith.negf %8 : vector<16x128xf32>
    %10 = math.exp %9 : vector<16x128xf32>
    %cst_5 = arith.constant 1.000000e+00 : f32
    %11 = vector.broadcast %cst_5 : f32 to vector<16x128xf32>
    %12 = arith.addf %11, %10 : vector<16x128xf32>
    %13 = arith.divf %11, %12 : vector<16x128xf32>
    %14 = vector.extract_strided_slice %7 {offsets = [0, 128], sizes = [16, 128], strides = [1, 1]} : vector<16x512xf32> to vector<16x128xf32>
    %15 = arith.negf %14 : vector<16x128xf32>
    %16 = math.exp %15 : vector<16x128xf32>
    %cst_6 = arith.constant 1.000000e+00 : f32
    %17 = vector.broadcast %cst_6 : f32 to vector<16x128xf32>
    %18 = arith.addf %17, %16 : vector<16x128xf32>
    %19 = arith.divf %17, %18 : vector<16x128xf32>
    %20 = vector.extract_strided_slice %7 {offsets = [0, 256], sizes = [16, 128], strides = [1, 1]} : vector<16x512xf32> to vector<16x128xf32>
    %21 = math.tanh %20 : vector<16x128xf32>
    %22 = vector.extract_strided_slice %7 {offsets = [0, 384], sizes = [16, 128], strides = [1, 1]} : vector<16x512xf32> to vector<16x128xf32>
    %23 = arith.negf %22 : vector<16x128xf32>
    %24 = math.exp %23 : vector<16x128xf32>
    %cst_7 = arith.constant 1.000000e+00 : f32
    %25 = vector.broadcast %cst_7 : f32 to vector<16x128xf32>
    %26 = arith.addf %25, %24 : vector<16x128xf32>
    %27 = arith.divf %25, %26 : vector<16x128xf32>
    %28 = arith.mulf %19, %2 : vector<16x128xf32>
    %29 = arith.mulf %13, %21 : vector<16x128xf32>
    %30 = arith.addf %28, %29 : vector<16x128xf32>
    %31 = math.tanh %30 : vector<16x128xf32>
    %32 = arith.mulf %27, %31 : vector<16x128xf32>
    %33 = arith.truncf %32 : vector<16x128xf32> to vector<16x128xbf16>
    %34 = arith.index_cast %c0_i32 : i32 to index
    %c0_8 = arith.constant 0 : index
    %c0_9 = arith.constant 0 : index
    %35 = vector.load %arg3[%34, %c0_8, %c0_9] : memref<9x16x128xbf16, #tpu.memory_space<vmem>>, vector<1x16x128xbf16>
    %36 = vector.shape_cast %35 : vector<1x16x128xbf16> to vector<16x128xbf16>
    %37 = vector.shape_cast %33 : vector<16x128xbf16> to vector<1x16x128xbf16>
    tpu.vector_store %arg3[%34, %c0_8, %c0_9], %37 {strides = array<i32>} : memref<9x16x128xbf16, #tpu.memory_space<vmem>>, vector<1x16x128xbf16>,
    %c1_i32 = arith.constant 1 : i32
    %38 = arith.index_cast %c1_i32 : i32 to index
    %c0_10 = arith.constant 0 : index
    %c0_11 = arith.constant 0 : index
    %39 = vector.load %arg1[%38, %c0_10, %c0_11] : memref<9x16x512xf32, #tpu.memory_space<vmem>>, vector<1x16x512xf32>
    %40 = vector.shape_cast %39 : vector<1x16x512xf32> to vector<16x512xf32>
    %cst_12 = arith.constant dense<0.000000e+00> : vector<16x512xf32>
    %41 = tpu.matmul %33, %0, %cst_12 {dimension_numbers = #tpu.dot_dimension_numbers<[1], [0], [0], [1], [0, 0, 1, 1], [], []>} : vector<16x128xbf16>, vector<128x512xbf16>, vector<16x512xf32> -> vector<16x512xf32>
    %42 = arith.addf %40, %41 : vector<16x512xf32>
    %43 = vector.extract_strided_slice %42 {offsets = [0, 0], sizes = [16, 128], strides = [1, 1]} : vector<16x512xf32> to vector<16x128xf32>
    %44 = arith.negf %43 : vector<16x128xf32>
    %45 = math.exp %44 : vector<16x128xf32>
    %cst_13 = arith.constant 1.000000e+00 : f32
    %46 = vector.broadcast %cst_13 : f32 to vector<16x128xf32>
    %47 = arith.addf %46, %45 : vector<16x128xf32>
    %48 = arith.divf %46, %47 : vector<16x128xf32>
    %49 = vector.extract_strided_slice %42 {offsets = [0, 128], sizes = [16, 128], strides = [1, 1]} : vector<16x512xf32> to vector<16x128xf32>
    %50 = arith.negf %49 : vector<16x128xf32>
    %51 = math.exp %50 : vector<16x128xf32>
    %cst_14 = arith.constant 1.000000e+00 : f32
    %52 = vector.broadcast %cst_14 : f32 to vector<16x128xf32>
    %53 = arith.addf %52, %51 : vector<16x128xf32>
    %54 = arith.divf %52, %53 : vector<16x128xf32>
    %55 = vector.extract_strided_slice %42 {offsets = [0, 256], sizes = [16, 128], strides = [1, 1]} : vector<16x512xf32> to vector<16x128xf32>
    %56 = math.tanh %55 : vector<16x128xf32>
    %57 = vector.extract_strided_slice %42 {offsets = [0, 384], sizes = [16, 128], strides = [1, 1]} : vector<16x512xf32> to vector<16x128xf32>
    %58 = arith.negf %57 : vector<16x128xf32>
    %59 = math.exp %58 : vector<16x128xf32>
    %cst_15 = arith.constant 1.000000e+00 : f32
    %60 = vector.broadcast %cst_15 : f32 to vector<16x128xf32>
    %61 = arith.addf %60, %59 : vector<16x128xf32>
    %62 = arith.divf %60, %61 : vector<16x128xf32>
    %63 = arith.mulf %54, %30 : vector<16x128xf32>
    %64 = arith.mulf %48, %56 : vector<16x128xf32>
    %65 = arith.addf %63, %64 : vector<16x128xf32>
    %66 = math.tanh %65 : vector<16x128xf32>
    %67 = arith.mulf %62, %66 : vector<16x128xf32>
    %68 = arith.truncf %67 : vector<16x128xf32> to vector<16x128xbf16>
    %69 = arith.index_cast %c1_i32 : i32 to index
    %c0_16 = arith.constant 0 : index
    %c0_17 = arith.constant 0 : index
    %70 = vector.load %arg3[%69, %c0_16, %c0_17] : memref<9x16x128xbf16, #tpu.memory_space<vmem>>, vector<1x16x128xbf16>
    %71 = vector.shape_cast %70 : vector<1x16x128xbf16> to vector<16x128xbf16>
    %72 = vector.shape_cast %68 : vector<16x128xbf16> to vector<1x16x128xbf16>
    tpu.vector_store %arg3[%69, %c0_16, %c0_17], %72 {strides = array<i32>} : memref<9x16x128xbf16, #tpu.memory_space<vmem>>, vector<1x16x128xbf16>,
    %c2_i32 = arith.constant 2 : i32
    %73 = arith.index_cast %c2_i32 : i32 to index
    %c0_18 = arith.constant 0 : index
    %c0_19 = arith.constant 0 : index
    %74 = vector.load %arg1[%73, %c0_18, %c0_19] : memref<9x16x512xf32, #tpu.memory_space<vmem>>, vector<1x16x512xf32>
    %75 = vector.shape_cast %74 : vector<1x16x512xf32> to vector<16x512xf32>
    %cst_20 = arith.constant dense<0.000000e+00> : vector<16x512xf32>
    %76 = tpu.matmul %68, %0, %cst_20 {dimension_numbers = #tpu.dot_dimension_numbers<[1], [0], [0], [1], [0, 0, 1, 1], [], []>} : vector<16x128xbf16>, vector<128x512xbf16>, vector<16x512xf32> -> vector<16x512xf32>
    %77 = arith.addf %75, %76 : vector<16x512xf32>
    %78 = vector.extract_strided_slice %77 {offsets = [0, 0], sizes = [16, 128], strides = [1, 1]} : vector<16x512xf32> to vector<16x128xf32>
    %79 = arith.negf %78 : vector<16x128xf32>
    %80 = math.exp %79 : vector<16x128xf32>
    %cst_21 = arith.constant 1.000000e+00 : f32
    %81 = vector.broadcast %cst_21 : f32 to vector<16x128xf32>
    %82 = arith.addf %81, %80 : vector<16x128xf32>
    %83 = arith.divf %81, %82 : vector<16x128xf32>
    %84 = vector.extract_strided_slice %77 {offsets = [0, 128], sizes = [16, 128], strides = [1, 1]} : vector<16x512xf32> to vector<16x128xf32>
    %85 = arith.negf %84 : vector<16x128xf32>
    %86 = math.exp %85 : vector<16x128xf32>
    %cst_22 = arith.constant 1.000000e+00 : f32
    %87 = vector.broadcast %cst_22 : f32 to vector<16x128xf32>
    %88 = arith.addf %87, %86 : vector<16x128xf32>
    %89 = arith.divf %87, %88 : vector<16x128xf32>
    %90 = vector.extract_strided_slice %77 {offsets = [0, 256], sizes = [16, 128], strides = [1, 1]} : vector<16x512xf32> to vector<16x128xf32>
    %91 = math.tanh %90 : vector<16x128xf32>
    %92 = vector.extract_strided_slice %77 {offsets = [0, 384], sizes = [16, 128], strides = [1, 1]} : vector<16x512xf32> to vector<16x128xf32>
    %93 = arith.negf %92 : vector<16x128xf32>
    %94 = math.exp %93 : vector<16x128xf32>
    %cst_23 = arith.constant 1.000000e+00 : f32
    %95 = vector.broadcast %cst_23 : f32 to vector<16x128xf32>
    %96 = arith.addf %95, %94 : vector<16x128xf32>
    %97 = arith.divf %95, %96 : vector<16x128xf32>
    %98 = arith.mulf %89, %65 : vector<16x128xf32>
    %99 = arith.mulf %83, %91 : vector<16x128xf32>
    %100 = arith.addf %98, %99 : vector<16x128xf32>
    %101 = math.tanh %100 : vector<16x128xf32>
    %102 = arith.mulf %97, %101 : vector<16x128xf32>
    %103 = arith.truncf %102 : vector<16x128xf32> to vector<16x128xbf16>
    %104 = arith.index_cast %c2_i32 : i32 to index
    %c0_24 = arith.constant 0 : index
    %c0_25 = arith.constant 0 : index
    %105 = vector.load %arg3[%104, %c0_24, %c0_25] : memref<9x16x128xbf16, #tpu.memory_space<vmem>>, vector<1x16x128xbf16>
    %106 = vector.shape_cast %105 : vector<1x16x128xbf16> to vector<16x128xbf16>
    %107 = vector.shape_cast %103 : vector<16x128xbf16> to vector<1x16x128xbf16>
    tpu.vector_store %arg3[%104, %c0_24, %c0_25], %107 {strides = array<i32>} : memref<9x16x128xbf16, #tpu.memory_space<vmem>>, vector<1x16x128xbf16>,
    %c3_i32 = arith.constant 3 : i32
    %108 = arith.index_cast %c3_i32 : i32 to index
    %c0_26 = arith.constant 0 : index
    %c0_27 = arith.constant 0 : index
    %109 = vector.load %arg1[%108, %c0_26, %c0_27] : memref<9x16x512xf32, #tpu.memory_space<vmem>>, vector<1x16x512xf32>
    %110 = vector.shape_cast %109 : vector<1x16x512xf32> to vector<16x512xf32>
    %cst_28 = arith.constant dense<0.000000e+00> : vector<16x512xf32>
    %111 = tpu.matmul %103, %0, %cst_28 {dimension_numbers = #tpu.dot_dimension_numbers<[1], [0], [0], [1], [0, 0, 1, 1], [], []>} : vector<16x128xbf16>, vector<128x512xbf16>, vector<16x512xf32> -> vector<16x512xf32>
    %112 = arith.addf %110, %111 : vector<16x512xf32>
    %113 = vector.extract_strided_slice %112 {offsets = [0, 0], sizes = [16, 128], strides = [1, 1]} : vector<16x512xf32> to vector<16x128xf32>
    %114 = arith.negf %113 : vector<16x128xf32>
    %115 = math.exp %114 : vector<16x128xf32>
    %cst_29 = arith.constant 1.000000e+00 : f32
    %116 = vector.broadcast %cst_29 : f32 to vector<16x128xf32>
    %117 = arith.addf %116, %115 : vector<16x128xf32>
    %118 = arith.divf %116, %117 : vector<16x128xf32>
    %119 = vector.extract_strided_slice %112 {offsets = [0, 128], sizes = [16, 128], strides = [1, 1]} : vector<16x512xf32> to vector<16x128xf32>
    %120 = arith.negf %119 : vector<16x128xf32>
    %121 = math.exp %120 : vector<16x128xf32>
    %cst_30 = arith.constant 1.000000e+00 : f32
    %122 = vector.broadcast %cst_30 : f32 to vector<16x128xf32>
    %123 = arith.addf %122, %121 : vector<16x128xf32>
    %124 = arith.divf %122, %123 : vector<16x128xf32>
    %125 = vector.extract_strided_slice %112 {offsets = [0, 256], sizes = [16, 128], strides = [1, 1]} : vector<16x512xf32> to vector<16x128xf32>
    %126 = math.tanh %125 : vector<16x128xf32>
    %127 = vector.extract_strided_slice %112 {offsets = [0, 384], sizes = [16, 128], strides = [1, 1]} : vector<16x512xf32> to vector<16x128xf32>
    %128 = arith.negf %127 : vector<16x128xf32>
    %129 = math.exp %128 : vector<16x128xf32>
    %cst_31 = arith.constant 1.000000e+00 : f32
    %130 = vector.broadcast %cst_31 : f32 to vector<16x128xf32>
    %131 = arith.addf %130, %129 : vector<16x128xf32>
    %132 = arith.divf %130, %131 : vector<16x128xf32>
    %133 = arith.mulf %124, %100 : vector<16x128xf32>
    %134 = arith.mulf %118, %126 : vector<16x128xf32>
    %135 = arith.addf %133, %134 : vector<16x128xf32>
    %136 = math.tanh %135 : vector<16x128xf32>
    %137 = arith.mulf %132, %136 : vector<16x128xf32>
    %138 = arith.truncf %137 : vector<16x128xf32> to vector<16x128xbf16>
    %139 = arith.index_cast %c3_i32 : i32 to index
    %c0_32 = arith.constant 0 : index
    %c0_33 = arith.constant 0 : index
    %140 = vector.load %arg3[%139, %c0_32, %c0_33] : memref<9x16x128xbf16, #tpu.memory_space<vmem>>, vector<1x16x128xbf16>
    %141 = vector.shape_cast %140 : vector<1x16x128xbf16> to vector<16x128xbf16>
    %142 = vector.shape_cast %138 : vector<16x128xbf16> to vector<1x16x128xbf16>
    tpu.vector_store %arg3[%139, %c0_32, %c0_33], %142 {strides = array<i32>} : memref<9x16x128xbf16, #tpu.memory_space<vmem>>, vector<1x16x128xbf16>,
    %c4_i32 = arith.constant 4 : i32
    %143 = arith.index_cast %c4_i32 : i32 to index
    %c0_34 = arith.constant 0 : index
    %c0_35 = arith.constant 0 : index
    %144 = vector.load %arg1[%143, %c0_34, %c0_35] : memref<9x16x512xf32, #tpu.memory_space<vmem>>, vector<1x16x512xf32>
    %145 = vector.shape_cast %144 : vector<1x16x512xf32> to vector<16x512xf32>
    %cst_36 = arith.constant dense<0.000000e+00> : vector<16x512xf32>
    %146 = tpu.matmul %138, %0, %cst_36 {dimension_numbers = #tpu.dot_dimension_numbers<[1], [0], [0], [1], [0, 0, 1, 1], [], []>} : vector<16x128xbf16>, vector<128x512xbf16>, vector<16x512xf32> -> vector<16x512xf32>
    %147 = arith.addf %145, %146 : vector<16x512xf32>
    %148 = vector.extract_strided_slice %147 {offsets = [0, 0], sizes = [16, 128], strides = [1, 1]} : vector<16x512xf32> to vector<16x128xf32>
    %149 = arith.negf %148 : vector<16x128xf32>
    %150 = math.exp %149 : vector<16x128xf32>
    %cst_37 = arith.constant 1.000000e+00 : f32
    %151 = vector.broadcast %cst_37 : f32 to vector<16x128xf32>
    %152 = arith.addf %151, %150 : vector<16x128xf32>
    %153 = arith.divf %151, %152 : vector<16x128xf32>
    %154 = vector.extract_strided_slice %147 {offsets = [0, 128], sizes = [16, 128], strides = [1, 1]} : vector<16x512xf32> to vector<16x128xf32>
    %155 = arith.negf %154 : vector<16x128xf32>
    %156 = math.exp %155 : vector<16x128xf32>
    %cst_38 = arith.constant 1.000000e+00 : f32
    %157 = vector.broadcast %cst_38 : f32 to vector<16x128xf32>
    %158 = arith.addf %157, %156 : vector<16x128xf32>
    %159 = arith.divf %157, %158 : vector<16x128xf32>
    %160 = vector.extract_strided_slice %147 {offsets = [0, 256], sizes = [16, 128], strides = [1, 1]} : vector<16x512xf32> to vector<16x128xf32>
    %161 = math.tanh %160 : vector<16x128xf32>
    %162 = vector.extract_strided_slice %147 {offsets = [0, 384], sizes = [16, 128], strides = [1, 1]} : vector<16x512xf32> to vector<16x128xf32>
    %163 = arith.negf %162 : vector<16x128xf32>
    %164 = math.exp %163 : vector<16x128xf32>
    %cst_39 = arith.constant 1.000000e+00 : f32
    %165 = vector.broadcast %cst_39 : f32 to vector<16x128xf32>
    %166 = arith.addf %165, %164 : vector<16x128xf32>
    %167 = arith.divf %165, %166 : vector<16x128xf32>
    %168 = arith.mulf %159, %135 : vector<16x128xf32>
    %169 = arith.mulf %153, %161 : vector<16x128xf32>
    %170 = arith.addf %168, %169 : vector<16x128xf32>
    %171 = math.tanh %170 : vector<16x128xf32>
    %172 = arith.mulf %167, %171 : vector<16x128xf32>
    %173 = arith.truncf %172 : vector<16x128xf32> to vector<16x128xbf16>
    %174 = arith.index_cast %c4_i32 : i32 to index
    %c0_40 = arith.constant 0 : index
    %c0_41 = arith.constant 0 : index
    %175 = vector.load %arg3[%174, %c0_40, %c0_41] : memref<9x16x128xbf16, #tpu.memory_space<vmem>>, vector<1x16x128xbf16>
    %176 = vector.shape_cast %175 : vector<1x16x128xbf16> to vector<16x128xbf16>
    %177 = vector.shape_cast %173 : vector<16x128xbf16> to vector<1x16x128xbf16>
    tpu.vector_store %arg3[%174, %c0_40, %c0_41], %177 {strides = array<i32>} : memref<9x16x128xbf16, #tpu.memory_space<vmem>>, vector<1x16x128xbf16>,
    %c5_i32 = arith.constant 5 : i32
    %178 = arith.index_cast %c5_i32 : i32 to index
    %c0_42 = arith.constant 0 : index
    %c0_43 = arith.constant 0 : index
    %179 = vector.load %arg1[%178, %c0_42, %c0_43] : memref<9x16x512xf32, #tpu.memory_space<vmem>>, vector<1x16x512xf32>
    %180 = vector.shape_cast %179 : vector<1x16x512xf32> to vector<16x512xf32>
    %cst_44 = arith.constant dense<0.000000e+00> : vector<16x512xf32>
    %181 = tpu.matmul %173, %0, %cst_44 {dimension_numbers = #tpu.dot_dimension_numbers<[1], [0], [0], [1], [0, 0, 1, 1], [], []>} : vector<16x128xbf16>, vector<128x512xbf16>, vector<16x512xf32> -> vector<16x512xf32>
    %182 = arith.addf %180, %181 : vector<16x512xf32>
    %183 = vector.extract_strided_slice %182 {offsets = [0, 0], sizes = [16, 128], strides = [1, 1]} : vector<16x512xf32> to vector<16x128xf32>
    %184 = arith.negf %183 : vector<16x128xf32>
    %185 = math.exp %184 : vector<16x128xf32>
    %cst_45 = arith.constant 1.000000e+00 : f32
    %186 = vector.broadcast %cst_45 : f32 to vector<16x128xf32>
    %187 = arith.addf %186, %185 : vector<16x128xf32>
    %188 = arith.divf %186, %187 : vector<16x128xf32>
    %189 = vector.extract_strided_slice %182 {offsets = [0, 128], sizes = [16, 128], strides = [1, 1]} : vector<16x512xf32> to vector<16x128xf32>
    %190 = arith.negf %189 : vector<16x128xf32>
    %191 = math.exp %190 : vector<16x128xf32>
    %cst_46 = arith.constant 1.000000e+00 : f32
    %192 = vector.broadcast %cst_46 : f32 to vector<16x128xf32>
    %193 = arith.addf %192, %191 : vector<16x128xf32>
    %194 = arith.divf %192, %193 : vector<16x128xf32>
    %195 = vector.extract_strided_slice %182 {offsets = [0, 256], sizes = [16, 128], strides = [1, 1]} : vector<16x512xf32> to vector<16x128xf32>
    %196 = math.tanh %195 : vector<16x128xf32>
    %197 = vector.extract_strided_slice %182 {offsets = [0, 384], sizes = [16, 128], strides = [1, 1]} : vector<16x512xf32> to vector<16x128xf32>
    %198 = arith.negf %197 : vector<16x128xf32>
    %199 = math.exp %198 : vector<16x128xf32>
    %cst_47 = arith.constant 1.000000e+00 : f32
    %200 = vector.broadcast %cst_47 : f32 to vector<16x128xf32>
    %201 = arith.addf %200, %199 : vector<16x128xf32>
    %202 = arith.divf %200, %201 : vector<16x128xf32>
    %203 = arith.mulf %194, %170 : vector<16x128xf32>
    %204 = arith.mulf %188, %196 : vector<16x128xf32>
    %205 = arith.addf %203, %204 : vector<16x128xf32>
    %206 = math.tanh %205 : vector<16x128xf32>
    %207 = arith.mulf %202, %206 : vector<16x128xf32>
    %208 = arith.truncf %207 : vector<16x128xf32> to vector<16x128xbf16>
    %209 = arith.index_cast %c5_i32 : i32 to index
    %c0_48 = arith.constant 0 : index
    %c0_49 = arith.constant 0 : index
    %210 = vector.load %arg3[%209, %c0_48, %c0_49] : memref<9x16x128xbf16, #tpu.memory_space<vmem>>, vector<1x16x128xbf16>
    %211 = vector.shape_cast %210 : vector<1x16x128xbf16> to vector<16x128xbf16>
    %212 = vector.shape_cast %208 : vector<16x128xbf16> to vector<1x16x128xbf16>
    tpu.vector_store %arg3[%209, %c0_48, %c0_49], %212 {strides = array<i32>} : memref<9x16x128xbf16, #tpu.memory_space<vmem>>, vector<1x16x128xbf16>,
    %c6_i32 = arith.constant 6 : i32
    %213 = arith.index_cast %c6_i32 : i32 to index
    %c0_50 = arith.constant 0 : index
    %c0_51 = arith.constant 0 : index
    %214 = vector.load %arg1[%213, %c0_50, %c0_51] : memref<9x16x512xf32, #tpu.memory_space<vmem>>, vector<1x16x512xf32>
    %215 = vector.shape_cast %214 : vector<1x16x512xf32> to vector<16x512xf32>
    %cst_52 = arith.constant dense<0.000000e+00> : vector<16x512xf32>
    %216 = tpu.matmul %208, %0, %cst_52 {dimension_numbers = #tpu.dot_dimension_numbers<[1], [0], [0], [1], [0, 0, 1, 1], [], []>} : vector<16x128xbf16>, vector<128x512xbf16>, vector<16x512xf32> -> vector<16x512xf32>
    %217 = arith.addf %215, %216 : vector<16x512xf32>
    %218 = vector.extract_strided_slice %217 {offsets = [0, 0], sizes = [16, 128], strides = [1, 1]} : vector<16x512xf32> to vector<16x128xf32>
    %219 = arith.negf %218 : vector<16x128xf32>
    %220 = math.exp %219 : vector<16x128xf32>
    %cst_53 = arith.constant 1.000000e+00 : f32
    %221 = vector.broadcast %cst_53 : f32 to vector<16x128xf32>
    %222 = arith.addf %221, %220 : vector<16x128xf32>
    %223 = arith.divf %221, %222 : vector<16x128xf32>
    %224 = vector.extract_strided_slice %217 {offsets = [0, 128], sizes = [16, 128], strides = [1, 1]} : vector<16x512xf32> to vector<16x128xf32>
    %225 = arith.negf %224 : vector<16x128xf32>
    %226 = math.exp %225 : vector<16x128xf32>
    %cst_54 = arith.constant 1.000000e+00 : f32
    %227 = vector.broadcast %cst_54 : f32 to vector<16x128xf32>
    %228 = arith.addf %227, %226 : vector<16x128xf32>
    %229 = arith.divf %227, %228 : vector<16x128xf32>
    %230 = vector.extract_strided_slice %217 {offsets = [0, 256], sizes = [16, 128], strides = [1, 1]} : vector<16x512xf32> to vector<16x128xf32>
    %231 = math.tanh %230 : vector<16x128xf32>
    %232 = vector.extract_strided_slice %217 {offsets = [0, 384], sizes = [16, 128], strides = [1, 1]} : vector<16x512xf32> to vector<16x128xf32>
    %233 = arith.negf %232 : vector<16x128xf32>
    %234 = math.exp %233 : vector<16x128xf32>
    %cst_55 = arith.constant 1.000000e+00 : f32
    %235 = vector.broadcast %cst_55 : f32 to vector<16x128xf32>
    %236 = arith.addf %235, %234 : vector<16x128xf32>
    %237 = arith.divf %235, %236 : vector<16x128xf32>
    %238 = arith.mulf %229, %205 : vector<16x128xf32>
    %239 = arith.mulf %223, %231 : vector<16x128xf32>
    %240 = arith.addf %238, %239 : vector<16x128xf32>
    %241 = math.tanh %240 : vector<16x128xf32>
    %242 = arith.mulf %237, %241 : vector<16x128xf32>
    %243 = arith.truncf %242 : vector<16x128xf32> to vector<16x128xbf16>
    %244 = arith.index_cast %c6_i32 : i32 to index
    %c0_56 = arith.constant 0 : index
    %c0_57 = arith.constant 0 : index
    %245 = vector.load %arg3[%244, %c0_56, %c0_57] : memref<9x16x128xbf16, #tpu.memory_space<vmem>>, vector<1x16x128xbf16>
    %246 = vector.shape_cast %245 : vector<1x16x128xbf16> to vector<16x128xbf16>
    %247 = vector.shape_cast %243 : vector<16x128xbf16> to vector<1x16x128xbf16>
    tpu.vector_store %arg3[%244, %c0_56, %c0_57], %247 {strides = array<i32>} : memref<9x16x128xbf16, #tpu.memory_space<vmem>>, vector<1x16x128xbf16>,
    %c7_i32 = arith.constant 7 : i32
    %248 = arith.index_cast %c7_i32 : i32 to index
    %c0_58 = arith.constant 0 : index
    %c0_59 = arith.constant 0 : index
    %249 = vector.load %arg1[%248, %c0_58, %c0_59] : memref<9x16x512xf32, #tpu.memory_space<vmem>>, vector<1x16x512xf32>
    %250 = vector.shape_cast %249 : vector<1x16x512xf32> to vector<16x512xf32>
    %cst_60 = arith.constant dense<0.000000e+00> : vector<16x512xf32>
    %251 = tpu.matmul %243, %0, %cst_60 {dimension_numbers = #tpu.dot_dimension_numbers<[1], [0], [0], [1], [0, 0, 1, 1], [], []>} : vector<16x128xbf16>, vector<128x512xbf16>, vector<16x512xf32> -> vector<16x512xf32>
    %252 = arith.addf %250, %251 : vector<16x512xf32>
    %253 = vector.extract_strided_slice %252 {offsets = [0, 0], sizes = [16, 128], strides = [1, 1]} : vector<16x512xf32> to vector<16x128xf32>
    %254 = arith.negf %253 : vector<16x128xf32>
    %255 = math.exp %254 : vector<16x128xf32>
    %cst_61 = arith.constant 1.000000e+00 : f32
    %256 = vector.broadcast %cst_61 : f32 to vector<16x128xf32>
    %257 = arith.addf %256, %255 : vector<16x128xf32>
    %258 = arith.divf %256, %257 : vector<16x128xf32>
    %259 = vector.extract_strided_slice %252 {offsets = [0, 128], sizes = [16, 128], strides = [1, 1]} : vector<16x512xf32> to vector<16x128xf32>
    %260 = arith.negf %259 : vector<16x128xf32>
    %261 = math.exp %260 : vector<16x128xf32>
    %cst_62 = arith.constant 1.000000e+00 : f32
    %262 = vector.broadcast %cst_62 : f32 to vector<16x128xf32>
    %263 = arith.addf %262, %261 : vector<16x128xf32>
    %264 = arith.divf %262, %263 : vector<16x128xf32>
    %265 = vector.extract_strided_slice %252 {offsets = [0, 256], sizes = [16, 128], strides = [1, 1]} : vector<16x512xf32> to vector<16x128xf32>
    %266 = math.tanh %265 : vector<16x128xf32>
    %267 = vector.extract_strided_slice %252 {offsets = [0, 384], sizes = [16, 128], strides = [1, 1]} : vector<16x512xf32> to vector<16x128xf32>
    %268 = arith.negf %267 : vector<16x128xf32>
    %269 = math.exp %268 : vector<16x128xf32>
    %cst_63 = arith.constant 1.000000e+00 : f32
    %270 = vector.broadcast %cst_63 : f32 to vector<16x128xf32>
    %271 = arith.addf %270, %269 : vector<16x128xf32>
    %272 = arith.divf %270, %271 : vector<16x128xf32>
    %273 = arith.mulf %264, %240 : vector<16x128xf32>
    %274 = arith.mulf %258, %266 : vector<16x128xf32>
    %275 = arith.addf %273, %274 : vector<16x128xf32>
    %276 = math.tanh %275 : vector<16x128xf32>
    %277 = arith.mulf %272, %276 : vector<16x128xf32>
    %278 = arith.truncf %277 : vector<16x128xf32> to vector<16x128xbf16>
    %279 = arith.index_cast %c7_i32 : i32 to index
    %c0_64 = arith.constant 0 : index
    %c0_65 = arith.constant 0 : index
    %280 = vector.load %arg3[%279, %c0_64, %c0_65] : memref<9x16x128xbf16, #tpu.memory_space<vmem>>, vector<1x16x128xbf16>
    %281 = vector.shape_cast %280 : vector<1x16x128xbf16> to vector<16x128xbf16>
    %282 = vector.shape_cast %278 : vector<16x128xbf16> to vector<1x16x128xbf16>
    tpu.vector_store %arg3[%279, %c0_64, %c0_65], %282 {strides = array<i32>} : memref<9x16x128xbf16, #tpu.memory_space<vmem>>, vector<1x16x128xbf16>,
    %c8_i32 = arith.constant 8 : i32
    %283 = arith.index_cast %c8_i32 : i32 to index
    %c0_66 = arith.constant 0 : index
    %c0_67 = arith.constant 0 : index
    %284 = vector.load %arg1[%283, %c0_66, %c0_67] : memref<9x16x512xf32, #tpu.memory_space<vmem>>, vector<1x16x512xf32>
    %285 = vector.shape_cast %284 : vector<1x16x512xf32> to vector<16x512xf32>
    %cst_68 = arith.constant dense<0.000000e+00> : vector<16x512xf32>
    %286 = tpu.matmul %278, %0, %cst_68 {dimension_numbers = #tpu.dot_dimension_numbers<[1], [0], [0], [1], [0, 0, 1, 1], [], []>} : vector<16x128xbf16>, vector<128x512xbf16>, vector<16x512xf32> -> vector<16x512xf32>
    %287 = arith.addf %285, %286 : vector<16x512xf32>
    %288 = vector.extract_strided_slice %287 {offsets = [0, 0], sizes = [16, 128], strides = [1, 1]} : vector<16x512xf32> to vector<16x128xf32>
    %289 = arith.negf %288 : vector<16x128xf32>
    %290 = math.exp %289 : vector<16x128xf32>
    %cst_69 = arith.constant 1.000000e+00 : f32
    %291 = vector.broadcast %cst_69 : f32 to vector<16x128xf32>
    %292 = arith.addf %291, %290 : vector<16x128xf32>
    %293 = arith.divf %291, %292 : vector<16x128xf32>
    %294 = vector.extract_strided_slice %287 {offsets = [0, 128], sizes = [16, 128], strides = [1, 1]} : vector<16x512xf32> to vector<16x128xf32>
    %295 = arith.negf %294 : vector<16x128xf32>
    %296 = math.exp %295 : vector<16x128xf32>
    %cst_70 = arith.constant 1.000000e+00 : f32
    %297 = vector.broadcast %cst_70 : f32 to vector<16x128xf32>
    %298 = arith.addf %297, %296 : vector<16x128xf32>
    %299 = arith.divf %297, %298 : vector<16x128xf32>
    %300 = vector.extract_strided_slice %287 {offsets = [0, 256], sizes = [16, 128], strides = [1, 1]} : vector<16x512xf32> to vector<16x128xf32>
    %301 = math.tanh %300 : vector<16x128xf32>
    %302 = vector.extract_strided_slice %287 {offsets = [0, 384], sizes = [16, 128], strides = [1, 1]} : vector<16x512xf32> to vector<16x128xf32>
    %303 = arith.negf %302 : vector<16x128xf32>
    %304 = math.exp %303 : vector<16x128xf32>
    %cst_71 = arith.constant 1.000000e+00 : f32
    %305 = vector.broadcast %cst_71 : f32 to vector<16x128xf32>
    %306 = arith.addf %305, %304 : vector<16x128xf32>
    %307 = arith.divf %305, %306 : vector<16x128xf32>
    %308 = arith.mulf %299, %275 : vector<16x128xf32>
    %309 = arith.mulf %293, %301 : vector<16x128xf32>
    %310 = arith.addf %308, %309 : vector<16x128xf32>
    %311 = math.tanh %310 : vector<16x128xf32>
    %312 = arith.mulf %307, %311 : vector<16x128xf32>
    %313 = arith.truncf %312 : vector<16x128xf32> to vector<16x128xbf16>
    %314 = arith.index_cast %c8_i32 : i32 to index
    %c0_72 = arith.constant 0 : index
    %c0_73 = arith.constant 0 : index
    %315 = vector.load %arg3[%314, %c0_72, %c0_73] : memref<9x16x128xbf16, #tpu.memory_space<vmem>>, vector<1x16x128xbf16>
    %316 = vector.shape_cast %315 : vector<1x16x128xbf16> to vector<16x128xbf16>
    %317 = vector.shape_cast %313 : vector<16x128xbf16> to vector<1x16x128xbf16>
    tpu.vector_store %arg3[%314, %c0_72, %c0_73], %317 {strides = array<i32>} : memref<9x16x128xbf16, #tpu.memory_space<vmem>>, vector<1x16x128xbf16>,
    %c9_i32 = arith.constant 9 : i32
    return
  }
  func.func @transform_0(%arg0: i32) -> (i32, i32, i32) {
    %c0_i32 = arith.constant 0 : i32
    %c0_i32_0 = arith.constant 0 : i32
    %c0_i32_1 = arith.constant 0 : i32
    return %c0_i32, %arg0, %c0_i32_0 : i32, i32, i32
  }
  func.func @transform_1(%arg0: i32) -> (i32, i32) {
    %c0_i32 = arith.constant 0 : i32
    %c0_i32_0 = arith.constant 0 : i32
    %c0_i32_1 = arith.constant 0 : i32
    return %c0_i32, %c0_i32_0 : i32, i32
  }
  func.func @transform_2(%arg0: i32) -> (i32, i32, i32) {
    %c0_i32 = arith.constant 0 : i32
    %c0_i32_0 = arith.constant 0 : i32
    %c0_i32_1 = arith.constant 0 : i32
    return %c0_i32, %arg0, %c0_i32_0 : i32, i32, i32
  }
}

module attributes {stable_mosaic.version = 11 : i64} {
  func.func @matmul_bias_kernel(%arg0: i32, %arg1: i32, %arg2: memref<144x128xbf16, #tpu.memory_space<vmem>>, %arg3: memref<128x128xbf16, #tpu.memory_space<vmem>>, %arg4: memref<1x128xf32, #tpu.memory_space<vmem>>, %arg5: memref<144x128xf32, #tpu.memory_space<vmem>>) attributes {dimension_semantics = [#tpu.dimension_semantics<parallel>, #tpu.dimension_semantics<parallel>], iteration_bounds = array<i64: 1, 1>, scalar_prefetch = 0 : i64, scratch_operands = 0 : i64, tpu.core_type = #tpu.core_type<tc>, window_params = [{transform_indices = @transform_0, window_bounds = array<i64: 144, 128>}, {transform_indices = @transform_1, window_bounds = array<i64: 128, 128>}, {transform_indices = @transform_2, window_bounds = array<i64: 1, 128>}, {transform_indices = @transform_3, window_bounds = array<i64: 144, 128>}]} {
    %c0 = arith.constant 0 : index
    %c0_0 = arith.constant 0 : index
    %0 = vector.load %arg2[%c0, %c0_0] : memref<144x128xbf16, #tpu.memory_space<vmem>>, vector<144x128xbf16>
    %c0_1 = arith.constant 0 : index
    %c0_2 = arith.constant 0 : index
    %1 = vector.load %arg3[%c0_1, %c0_2] : memref<128x128xbf16, #tpu.memory_space<vmem>>, vector<128x128xbf16>
    %cst = arith.constant dense<0.000000e+00> : vector<144x128xf32>
    %2 = tpu.matmul %0, %1, %cst {dimension_numbers = #tpu.dot_dimension_numbers<[1], [0], [0], [1], [0, 0, 1, 1], [], []>} : vector<144x128xbf16>, vector<128x128xbf16>, vector<144x128xf32> -> vector<144x128xf32>
    %c0_3 = arith.constant 0 : index
    %c0_4 = arith.constant 0 : index
    %3 = vector.load %arg4[%c0_3, %c0_4] : memref<1x128xf32, #tpu.memory_space<vmem>>, vector<1x128xf32>
    %4 = vector.broadcast %3 : vector<1x128xf32> to vector<144x128xf32>
    %5 = arith.addf %2, %4 : vector<144x128xf32>
    %c0_5 = arith.constant 0 : index
    %c0_6 = arith.constant 0 : index
    %6 = vector.load %arg5[%c0_5, %c0_6] : memref<144x128xf32, #tpu.memory_space<vmem>>, vector<144x128xf32>
    tpu.vector_store %arg5[%c0_5, %c0_6], %5 {strides = array<i32>} : memref<144x128xf32, #tpu.memory_space<vmem>>, vector<144x128xf32>,
    return
  }
  func.func @transform_0(%arg0: i32, %arg1: i32) -> (i32, i32) {
    %c0_i32 = arith.constant 0 : i32
    %c0_i32_0 = arith.constant 0 : i32
    return %arg0, %c0_i32 : i32, i32
  }
  func.func @transform_1(%arg0: i32, %arg1: i32) -> (i32, i32) {
    %c0_i32 = arith.constant 0 : i32
    %c0_i32_0 = arith.constant 0 : i32
    return %c0_i32, %arg1 : i32, i32
  }
  func.func @transform_2(%arg0: i32, %arg1: i32) -> (i32, i32) {
    %c0_i32 = arith.constant 0 : i32
    %c0_i32_0 = arith.constant 0 : i32
    return %c0_i32, %arg1 : i32, i32
  }
  func.func @transform_3(%arg0: i32, %arg1: i32) -> (i32, i32) {
    %c0_i32 = arith.constant 0 : i32
    return %arg0, %arg1 : i32, i32
  }
}

</mosaic_0001>

<llo_original>
// kernel: caption_decoder_forward.5
$region0: #{caption_decoder_forward.5}
  #allocation0 [shape = 'u32[]', space=smem, size = 0x4, offset = 0x4, fixed_abs, tag = 'smem constant byte address 0x4 - core index']
  #allocation1 [shape = 'u32[72,128]{1,0:T(1,128)}', space=vmem, size = 0x9000, scoped, tag = 'internal scratch']
  %s0 = inlined_call_operand.vmem [shape: bf16[144,128], index: 0, kind: input, shape index: {}]
  %s1 = inlined_call_operand.vmem [shape: bf16[128,128], index: 1, kind: input, shape index: {}]
  %s2 = inlined_call_operand.vmem [shape: f32[1,128], index: 2, kind: input, shape index: {}]
  %s3 = inlined_call_operand.vmem [shape: f32[144,128], index: 3, kind: output, shape index: {}]
  %s4 = sld [smem:[#allocation0]]
  $region22: #{caption_decoder_forward.5} parent=0
    _
  %s6 = ssub.s32 1, %s4
  %s7 = scalar_select 0, %s6, %s4
  // Predicated region
  $region2: #{caption_decoder_forward.5} parent=0 // pred_check
    _
  $region3: #{caption_decoder_forward.5} parent=0 // pred_check_branch
    %9 = sbr.rel (0) target = $region5
  $region4: #{caption_decoder_forward.5} parent=0 // pred_region
    _
  $region5: #{caption_decoder_forward.5} parent=0 // pred_fallthru
    _
  // Predicated region
  $region6: #{caption_decoder_forward.5} parent=0 // pred_check
    _
  $region7: #{caption_decoder_forward.5} parent=0 // pred_check_branch
    %11 = sbr.rel (0) target = $region9
  $region8: #{caption_decoder_forward.5} parent=0 // pred_region
    _
  $region9: #{caption_decoder_forward.5} parent=0 // pred_fallthru
    _
  // Predicated region
  $region10: #{caption_decoder_forward.5} parent=0 // pred_check
    _
  $region11: #{caption_decoder_forward.5} parent=0 // pred_check_branch
    %13 = sbr.rel (0) target = $region13
  $region12: #{caption_decoder_forward.5} parent=0 // pred_region
    _
  $region13: #{caption_decoder_forward.5} parent=0 // pred_fallthru
    _
  %v14 = vld [vmem:[%s0] sm:$0xf]
  %v15 = vld [vmem:[%s0 + $0x4] sm:$0xf]
  %v16 = vld [vmem:[%s0 + $0x8] sm:$0xf]
  %v17 = vld [vmem:[%s0 + $0xc] sm:$0xf]
  %v18 = vld [vmem:[%s0 + $0x10] sm:$0xf]
  %v19 = vld [vmem:[%s0 + $0x14] sm:$0xf]
  %v20 = vld [vmem:[%s0 + $0x18] sm:$0xf]
  %v21 = vld [vmem:[%s0 + $0x1c] sm:$0xf]
  %v22 = vld [vmem:[%s0 + $0x20] sm:$0xf]
  %v23 = vld [vmem:[%s0 + $0x24] sm:$0xf]
  %v24 = vld [vmem:[%s0 + $0x28] sm:$0xf]
  %v25 = vld [vmem:[%s0 + $0x2c] sm:$0xf]
  %v26 = vld [vmem:[%s0 + $0x30] sm:$0xf]
  %v27 = vld [vmem:[%s0 + $0x34] sm:$0xf]
  %v28 = vld [vmem:[%s0 + $0x38] sm:$0xf]
  %v29 = vld [vmem:[%s0 + $0x3c] sm:$0xf]
  %v30 = vld [vmem:[%s0 + $0x40] sm:$0xf]
  %v31 = vld [vmem:[%s0 + $0x44] sm:$0xf]
  %v32 = vld [vmem:[%s1] sm:$0xf]
  %v33 = vld [vmem:[%s1 + $0x4] sm:$0xf]
  %v34 = vld [vmem:[%s1 + $0x8] sm:$0xf]
  %v35 = vld [vmem:[%s1 + $0xc] sm:$0xf]
  %v36 = vld [vmem:[%s1 + $0x10] sm:$0xf]
  %v37 = vld [vmem:[%s1 + $0x14] sm:$0xf]
  %v38 = vld [vmem:[%s1 + $0x18] sm:$0xf]
  %v39 = vld [vmem:[%s1 + $0x1c] sm:$0xf]
  %v40 = vld [vmem:[%s1 + $0x20] sm:$0xf]
  %v41 = vld [vmem:[%s1 + $0x24] sm:$0xf]
  %v42 = vld [vmem:[%s1 + $0x28] sm:$0xf]
  %v43 = vld [vmem:[%s1 + $0x2c] sm:$0xf]
  %v44 = vld [vmem:[%s1 + $0x30] sm:$0xf]
  %v45 = vld [vmem:[%s1 + $0x34] sm:$0xf]
  %v46 = vld [vmem:[%s1 + $0x38] sm:$0xf]
  %v47 = vld [vmem:[%s1 + $0x3c] sm:$0xf]
  %v48 = vld [vmem:[%s2] sm:$0x1]
  %v50 = vperm.slane %v48, 0
  %v70 = vunpack.c.l.b16 %v14
  %v71 = vunpack.c.l.b16 %v15
  %v72 = vunpack.c.l.b16 %v16
  %v73 = vunpack.c.l.b16 %v17
  %v74 = vunpack.c.l.b16 %v18
  %v75 = vunpack.c.l.b16 %v19
  %v76 = vunpack.c.l.b16 %v20
  %v77 = vunpack.c.l.b16 %v21
  %v78 = vunpack.c.l.b16 %v22
  %v79 = vunpack.c.l.b16 %v23
  %v80 = vunpack.c.l.b16 %v24
  %v81 = vunpack.c.l.b16 %v25
  %v82 = vunpack.c.l.b16 %v26
  %v83 = vunpack.c.l.b16 %v27
  %v84 = vunpack.c.l.b16 %v28
  %v85 = vunpack.c.l.b16 %v29
  %v86 = vunpack.c.l.b16 %v30
  %v87 = vunpack.c.l.b16 %v31
  %v88 = vpack.c.b16 %v71, %v70
  %v89 = vpack.c.b16 %v73, %v72
  %v90 = vpack.c.b16 %v75, %v74
  %v91 = vpack.c.b16 %v77, %v76
  %v92 = vpack.c.b16 %v79, %v78
  %v93 = vpack.c.b16 %v81, %v80
  %v94 = vpack.c.b16 %v83, %v82
  %v95 = vpack.c.b16 %v85, %v84
  %v96 = vpack.c.b16 %v87, %v86
  %v122 = vunpack.c.l.b16 %v32
  %v123 = vunpack.c.l.b16 %v33
  %v124 = vunpack.c.l.b16 %v34
  %v125 = vunpack.c.l.b16 %v35
  %v126 = vunpack.c.l.b16 %v36
  %v127 = vunpack.c.l.b16 %v37
  %v128 = vunpack.c.l.b16 %v38
  %v129 = vunpack.c.l.b16 %v39
  %v130 = vunpack.c.l.b16 %v40
  %v131 = vunpack.c.l.b16 %v41
  %v132 = vunpack.c.l.b16 %v42
  %v133 = vunpack.c.l.b16 %v43
  %v134 = vunpack.c.l.b16 %v44
  %v135 = vunpack.c.l.b16 %v45
  %v136 = vunpack.c.l.b16 %v46
  %v137 = vunpack.c.l.b16 %v47
  %v138 = vpack.c.b16 %v123, %v122
  %v139 = vpack.c.b16 %v125, %v124
  %v140 = vpack.c.b16 %v127, %v126
  %v141 = vpack.c.b16 %v129, %v128
  %v142 = vpack.c.b16 %v131, %v130
  %v143 = vpack.c.b16 %v133, %v132
  %v144 = vpack.c.b16 %v135, %v134
  %v145 = vpack.c.b16 %v137, %v136
  %154 = vmatpush.bf16.msra.mxu0 %v145
  %155 = vmatpush.bf16.msra.mxu0 %v144
  %156 = vmatpush.bf16.msra.mxu0 %v143
  %157 = vmatpush.bf16.msra.mxu0 %v142
  %158 = vmatpush.bf16.msra.mxu0 %v141
  %159 = vmatpush.bf16.msra.mxu0 %v140
  %160 = vmatpush.bf16.msra.mxu0 %v139
  %161 = vmatpush.bf16.msra.mxu0 %v138
  %162 = vmatmul.bf16.gmra.mxu0 %v88
  %v163 = vpop.f32.mrf.mxu0
  %v164 = vadd.f32 %v50, %v163
  %v165 = vpop.f32.mrf.mxu0
  %v166 = vadd.f32 %v50, %v165
  %167 = vmatmul.bf16.gmra.mxu0 %v89
  %v168 = vpop.f32.mrf.mxu0
  %v169 = vadd.f32 %v50, %v168
  %v170 = vpop.f32.mrf.mxu0
  %v171 = vadd.f32 %v50, %v170
  %172 = vmatmul.bf16.gmra.mxu0 %v90
  %v173 = vpop.f32.mrf.mxu0
  %v174 = vadd.f32 %v50, %v173
  %v175 = vpop.f32.mrf.mxu0
  %v176 = vadd.f32 %v50, %v175
  %177 = vmatmul.bf16.gmra.mxu0 %v91
  %v178 = vpop.f32.mrf.mxu0
  %v179 = vadd.f32 %v50, %v178
  %v180 = vpop.f32.mrf.mxu0
  %v181 = vadd.f32 %v50, %v180
  %182 = vmatmul.bf16.gmra.mxu0 %v92
  %v183 = vpop.f32.mrf.mxu0
  %v184 = vadd.f32 %v50, %v183
  %v185 = vpop.f32.mrf.mxu0
  %v186 = vadd.f32 %v50, %v185
  %187 = vmatmul.bf16.gmra.mxu0 %v93
  %v188 = vpop.f32.mrf.mxu0
  %v189 = vadd.f32 %v50, %v188
  %v190 = vpop.f32.mrf.mxu0
  %v191 = vadd.f32 %v50, %v190
  %192 = vmatmul.bf16.gmra.mxu0 %v94
  %v193 = vpop.f32.mrf.mxu0
  %v194 = vadd.f32 %v50, %v193
  %v195 = vpop.f32.mrf.mxu0
  %v196 = vadd.f32 %v50, %v195
  %197 = vmatmul.bf16.gmra.mxu0 %v95
  %v198 = vpop.f32.mrf.mxu0
  %v199 = vadd.f32 %v50, %v198
  %v200 = vpop.f32.mrf.mxu0
  %v201 = vadd.f32 %v50, %v200
  %202 = vmatmul.bf16.gmra.mxu0 %v96
  %v203 = vpop.f32.mrf.mxu0
  %v204 = vadd.f32 %v50, %v203
  %v205 = vpop.f32.mrf.mxu0
  %v206 = vadd.f32 %v50, %v205
  %207 = vdwg.mxu0
  %208 = vst [vmem:[%s3] sm:$0xff] %v164
  %209 = vst [vmem:[%s3 + $0x8] sm:$0xff] %v166
  %210 = vst [vmem:[%s3 + $0x10] sm:$0xff] %v169
  %211 = vst [vmem:[%s3 + $0x18] sm:$0xff] %v171
  %212 = vst [vmem:[%s3 + $0x20] sm:$0xff] %v174
  %213 = vst [vmem:[%s3 + $0x28] sm:$0xff] %v176
  %214 = vst [vmem:[%s3 + $0x30] sm:$0xff] %v179
  %215 = vst [vmem:[%s3 + $0x38] sm:$0xff] %v181
  %216 = vst [vmem:[%s3 + $0x40] sm:$0xff] %v184
  %217 = vst [vmem:[%s3 + $0x48] sm:$0xff] %v186
  %218 = vst [vmem:[%s3 + $0x50] sm:$0xff] %v189
  %219 = vst [vmem:[%s3 + $0x58] sm:$0xff] %v191
  %220 = vst [vmem:[%s3 + $0x60] sm:$0xff] %v194
  %221 = vst [vmem:[%s3 + $0x68] sm:$0xff] %v196
  %222 = vst [vmem:[%s3 + $0x70] sm:$0xff] %v199
  %223 = vst [vmem:[%s3 + $0x78] sm:$0xff] %v201
  %224 = vst [vmem:[%s3 + $0x80] sm:$0xff] %v204
  %225 = vst [vmem:[%s3 + $0x88] sm:$0xff] %v206
  // Predicated region
  $region14: #{caption_decoder_forward.5} parent=0 // pred_check
    _
  $region15: #{caption_decoder_forward.5} parent=0 // pred_check_branch
    %227 = sbr.rel (0) target = $region17
  $region16: #{caption_decoder_forward.5} parent=0 // pred_region
    _
  $region17: #{caption_decoder_forward.5} parent=0 // pred_fallthru
    _
  // Predicated region
  $region18: #{caption_decoder_forward.5} parent=0 // pred_check
    _
  $region19: #{caption_decoder_forward.5} parent=0 // pred_check_branch
    %229 = sbr.rel (0) target = $region21
  $region20: #{caption_decoder_forward.5} parent=0 // pred_region
    _
  $region21: #{caption_decoder_forward.5} parent=0 // pred_fallthru
    _

// kernel: caption_decoder_forward.3
$region0: #{caption_decoder_forward.3}
  #allocation0 [shape = 'u32[]', space=smem, size = 0x4, offset = 0x4, fixed_abs, tag = 'smem constant byte address 0x4 - core index']
  #allocation1 [shape = 'u32[72,128]{1,0:T(1,128)}', space=vmem, size = 0x9000, scoped, tag = 'internal scratch']
  %s0 = inlined_call_operand.vmem [shape: bf16[144,128], index: 0, kind: input, shape index: {}]
  %s1 = inlined_call_operand.vmem [shape: bf16[128,512], index: 1, kind: input, shape index: {}]
  %s2 = inlined_call_operand.vmem [shape: f32[1,512], index: 2, kind: input, shape index: {}]
  %s3 = inlined_call_operand.vmem [shape: f32[144,512], index: 3, kind: output, shape index: {}]
  %s4 = sld [smem:[#allocation0]]
  $region22: #{caption_decoder_forward.3} parent=0
    _
  %s6 = ssub.s32 1, %s4
  %s7 = scalar_select 0, %s6, %s4
  // Predicated region
  $region2: #{caption_decoder_forward.3} parent=0 // pred_check
    _
  $region3: #{caption_decoder_forward.3} parent=0 // pred_check_branch
    %9 = sbr.rel (0) target = $region5
  $region4: #{caption_decoder_forward.3} parent=0 // pred_region
    _
  $region5: #{caption_decoder_forward.3} parent=0 // pred_fallthru
    _
  // Predicated region
  $region6: #{caption_decoder_forward.3} parent=0 // pred_check
    _
  $region7: #{caption_decoder_forward.3} parent=0 // pred_check_branch
    %11 = sbr.rel (0) target = $region9
  $region8: #{caption_decoder_forward.3} parent=0 // pred_region
    _
  $region9: #{caption_decoder_forward.3} parent=0 // pred_fallthru
    _
  // Predicated region
  $region10: #{caption_decoder_forward.3} parent=0 // pred_check
    _
  $region11: #{caption_decoder_forward.3} parent=0 // pred_check_branch
    %13 = sbr.rel (0) target = $region13
  $region12: #{caption_decoder_forward.3} parent=0 // pred_region
    _
  $region13: #{caption_decoder_forward.3} parent=0 // pred_fallthru
    _
  %v14 = vld [vmem:[%s0] sm:$0xf]
  %v15 = vld [vmem:[%s0 + $0x4] sm:$0xf]
  %v16 = vld [vmem:[%s0 + $0x8] sm:$0xf]
  %v17 = vld [vmem:[%s0 + $0xc] sm:$0xf]
  %v18 = vld [vmem:[%s0 + $0x10] sm:$0xf]
  %v19 = vld [vmem:[%s0 + $0x14] sm:$0xf]
  %v20 = vld [vmem:[%s0 + $0x18] sm:$0xf]
  %v21 = vld [vmem:[%s0 + $0x1c] sm:$0xf]
  %v22 = vld [vmem:[%s0 + $0x20] sm:$0xf]
  %v23 = vld [vmem:[%s0 + $0x24] sm:$0xf]
  %v24 = vld [vmem:[%s0 + $0x28] sm:$0xf]
  %v25 = vld [vmem:[%s0 + $0x2c] sm:$0xf]
  %v26 = vld [vmem:[%s0 + $0x30] sm:$0xf]
  %v27 = vld [vmem:[%s0 + $0x34] sm:$0xf]
  %v28 = vld [vmem:[%s0 + $0x38] sm:$0xf]
  %v29 = vld [vmem:[%s0 + $0x3c] sm:$0xf]
  %v30 = vld [vmem:[%s0 + $0x40] sm:$0xf]
  %v31 = vld [vmem:[%s0 + $0x44] sm:$0xf]
  %v32 = vld [vmem:[%s1] sm:$0xff]
  %v33 = vld [vmem:[%s1 + $0x8] sm:$0xff]
  %v34 = vld [vmem:[%s1 + $0x10] sm:$0xff]
  %v35 = vld [vmem:[%s1 + $0x18] sm:$0xff]
  %v36 = vld [vmem:[%s1 + $0x20] sm:$0xff]
  %v37 = vld [vmem:[%s1 + $0x28] sm:$0xff]
  %v38 = vld [vmem:[%s1 + $0x30] sm:$0xff]
  %v39 = vld [vmem:[%s1 + $0x38] sm:$0xff]
  %v40 = vld [vmem:[%s1 + $0x40] sm:$0xff]
  %v41 = vld [vmem:[%s1 + $0x48] sm:$0xff]
  %v42 = vld [vmem:[%s1 + $0x50] sm:$0xff]
  %v43 = vld [vmem:[%s1 + $0x58] sm:$0xff]
  %v44 = vld [vmem:[%s1 + $0x60] sm:$0xff]
  %v45 = vld [vmem:[%s1 + $0x68] sm:$0xff]
  %v46 = vld [vmem:[%s1 + $0x70] sm:$0xff]
  %v47 = vld [vmem:[%s1 + $0x78] sm:$0xff]
  %v48 = vld [vmem:[%s1 + $0x80] sm:$0xff]
  %v49 = vld [vmem:[%s1 + $0x88] sm:$0xff]
  %v50 = vld [vmem:[%s1 + $0x90] sm:$0xff]
  %v51 = vld [vmem:[%s1 + $0x98] sm:$0xff]
  %v52 = vld [vmem:[%s1 + $0xa0] sm:$0xff]
  %v53 = vld [vmem:[%s1 + $0xa8] sm:$0xff]
  %v54 = vld [vmem:[%s1 + $0xb0] sm:$0xff]
  %v55 = vld [vmem:[%s1 + $0xb8] sm:$0xff]
  %v56 = vld [vmem:[%s1 + $0xc0] sm:$0xff]
  %v57 = vld [vmem:[%s1 + $0xc8] sm:$0xff]
  %v58 = vld [vmem:[%s1 + $0xd0] sm:$0xff]
  %v59 = vld [vmem:[%s1 + $0xd8] sm:$0xff]
  %v60 = vld [vmem:[%s1 + $0xe0] sm:$0xff]
  %v61 = vld [vmem:[%s1 + $0xe8] sm:$0xff]
  %v62 = vld [vmem:[%s1 + $0xf0] sm:$0xff]
  %v63 = vld [vmem:[%s1 + $0xf8] sm:$0xff]
  %v64 = vld [vmem:[%s2] sm:$0xf]
  %v66 = vperm.slane %v64, 0
  %v67 = vperm.slane %v64, 1
  %v68 = vperm.slane %v64, 2
  %v69 = vperm.slane %v64, 3
  %v92 = vunpack.c.l.b16 %v14
  %v93 = vunpack.c.l.b16 %v15
  %v94 = vunpack.c.l.b16 %v16
  %v95 = vunpack.c.l.b16 %v17
  %v96 = vunpack.c.l.b16 %v18
  %v97 = vunpack.c.l.b16 %v19
  %v98 = vunpack.c.l.b16 %v20
  %v99 = vunpack.c.l.b16 %v21
  %v100 = vunpack.c.l.b16 %v22
  %v101 = vunpack.c.l.b16 %v23
  %v102 = vunpack.c.l.b16 %v24
  %v103 = vunpack.c.l.b16 %v25
  %v104 = vunpack.c.l.b16 %v26
  %v105 = vunpack.c.l.b16 %v27
  %v106 = vunpack.c.l.b16 %v28
  %v107 = vunpack.c.l.b16 %v29
  %v108 = vunpack.c.l.b16 %v30
  %v109 = vunpack.c.l.b16 %v31
  %v110 = vpack.c.b16 %v93, %v92
  %v111 = vpack.c.b16 %v95, %v94
  %v112 = vpack.c.b16 %v97, %v96
  %v113 = vpack.c.b16 %v99, %v98
  %v114 = vpack.c.b16 %v101, %v100
  %v115 = vpack.c.b16 %v103, %v102
  %v116 = vpack.c.b16 %v105, %v104
  %v117 = vpack.c.b16 %v107, %v106
  %v118 = vpack.c.b16 %v109, %v108
  %v160 = vunpack.c.l.b16 %v32
  %v161 = vunpack.c.h.b16 %v32
  %v162 = vunpack.c.l.b16 %v33
  %v163 = vunpack.c.h.b16 %v33
  %v164 = vunpack.c.l.b16 %v34
  %v165 = vunpack.c.h.b16 %v34
  %v166 = vunpack.c.l.b16 %v35
  %v167 = vunpack.c.h.b16 %v35
  %v168 = vunpack.c.l.b16 %v36
  %v169 = vunpack.c.h.b16 %v36
  %v170 = vunpack.c.l.b16 %v37
  %v171 = vunpack.c.h.b16 %v37
  %v172 = vunpack.c.l.b16 %v38
  %v173 = vunpack.c.h.b16 %v38
  %v174 = vunpack.c.l.b16 %v39
  %v175 = vunpack.c.h.b16 %v39
  %v176 = vunpack.c.l.b16 %v40
  %v177 = vunpack.c.h.b16 %v40
  %v178 = vunpack.c.l.b16 %v41
  %v179 = vunpack.c.h.b16 %v41
  %v180 = vunpack.c.l.b16 %v42
  %v181 = vunpack.c.h.b16 %v42
  %v182 = vunpack.c.l.b16 %v43
  %v183 = vunpack.c.h.b16 %v43
  %v184 = vunpack.c.l.b16 %v44
  %v185 = vunpack.c.h.b16 %v44
  %v186 = vunpack.c.l.b16 %v45
  %v187 = vunpack.c.h.b16 %v45
  %v188 = vunpack.c.l.b16 %v46
  %v189 = vunpack.c.h.b16 %v46
  %v190 = vunpack.c.l.b16 %v47
  %v191 = vunpack.c.h.b16 %v47
  %v192 = vunpack.c.l.b16 %v48
  %v193 = vunpack.c.h.b16 %v48
  %v194 = vunpack.c.l.b16 %v49
  %v195 = vunpack.c.h.b16 %v49
  %v196 = vunpack.c.l.b16 %v50
  %v197 = vunpack.c.h.b16 %v50
  %v198 = vunpack.c.l.b16 %v51
  %v199 = vunpack.c.h.b16 %v51
  %v200 = vunpack.c.l.b16 %v52
  %v201 = vunpack.c.h.b16 %v52
  %v202 = vunpack.c.l.b16 %v53
  %v203 = vunpack.c.h.b16 %v53
  %v204 = vunpack.c.l.b16 %v54
  %v205 = vunpack.c.h.b16 %v54
  %v206 = vunpack.c.l.b16 %v55
  %v207 = vunpack.c.h.b16 %v55
  %v208 = vunpack.c.l.b16 %v56
  %v209 = vunpack.c.h.b16 %v56
  %v210 = vunpack.c.l.b16 %v57
  %v211 = vunpack.c.h.b16 %v57
  %v212 = vunpack.c.l.b16 %v58
  %v213 = vunpack.c.h.b16 %v58
  %v214 = vunpack.c.l.b16 %v59
  %v215 = vunpack.c.h.b16 %v59
  %v216 = vunpack.c.l.b16 %v60
  %v217 = vunpack.c.h.b16 %v60
  %v218 = vunpack.c.l.b16 %v61
  %v219 = vunpack.c.h.b16 %v61
  %v220 = vunpack.c.l.b16 %v62
  %v221 = vunpack.c.h.b16 %v62
  %v222 = vunpack.c.l.b16 %v63
  %v223 = vunpack.c.h.b16 %v63
  %v224 = vpack.c.b16 %v164, %v160
  %v225 = vpack.c.b16 %v165, %v161
  %v226 = vpack.c.b16 %v166, %v162
  %v227 = vpack.c.b16 %v167, %v163
  %v228 = vpack.c.b16 %v172, %v168
  %v229 = vpack.c.b16 %v173, %v169
  %v230 = vpack.c.b16 %v174, %v170
  %v231 = vpack.c.b16 %v175, %v171
  %v232 = vpack.c.b16 %v180, %v176
  %v233 = vpack.c.b16 %v181, %v177
  %v234 = vpack.c.b16 %v182, %v178
  %v235 = vpack.c.b16 %v183, %v179
  %v236 = vpack.c.b16 %v188, %v184
  %v237 = vpack.c.b16 %v189, %v185
  %v238 = vpack.c.b16 %v190, %v186
  %v239 = vpack.c.b16 %v191, %v187
  %v240 = vpack.c.b16 %v196, %v192
  %v241 = vpack.c.b16 %v197, %v193
  %v242 = vpack.c.b16 %v198, %v194
  %v243 = vpack.c.b16 %v199, %v195
  %v244 = vpack.c.b16 %v204, %v200
  %v245 = vpack.c.b16 %v205, %v201
  %v246 = vpack.c.b16 %v206, %v202
  %v247 = vpack.c.b16 %v207, %v203
  %v248 = vpack.c.b16 %v212, %v208
  %v249 = vpack.c.b16 %v213, %v209
  %v250 = vpack.c.b16 %v214, %v210
  %v251 = vpack.c.b16 %v215, %v211
  %v252 = vpack.c.b16 %v220, %v216
  %v253 = vpack.c.b16 %v221, %v217
  %v254 = vpack.c.b16 %v222, %v218
  %v255 = vpack.c.b16 %v223, %v219
  %288 = vmatpush.bf16.msra.mxu0 %v252
  %289 = vmatpush.bf16.msra.mxu0 %v248
  %290 = vmatpush.bf16.msra.mxu0 %v244
  %291 = vmatpush.bf16.msra.mxu0 %v240
  %292 = vmatpush.bf16.msra.mxu0 %v236
  %293 = vmatpush.bf16.msra.mxu0 %v232
  %294 = vmatpush.bf16.msra.mxu0 %v228
  %295 = vmatpush.bf16.msra.mxu0 %v224
  %296 = vmatmul.bf16.gmra.mxu0 %v110
  %v297 = vpop.f32.mrf.mxu0
  %v298 = vadd.f32 %v66, %v297
  %v299 = vpop.f32.mrf.mxu0
  %v300 = vadd.f32 %v66, %v299
  %301 = vmatmul.bf16.gmra.mxu0 %v111
  %v302 = vpop.f32.mrf.mxu0
  %v303 = vadd.f32 %v66, %v302
  %v304 = vpop.f32.mrf.mxu0
  %v305 = vadd.f32 %v66, %v304
  %306 = vmatmul.bf16.gmra.mxu0 %v112
  %v307 = vpop.f32.mrf.mxu0
  %v308 = vadd.f32 %v66, %v307
  %v309 = vpop.f32.mrf.mxu0
  %v310 = vadd.f32 %v66, %v309
  %311 = vmatmul.bf16.gmra.mxu0 %v113
  %v312 = vpop.f32.mrf.mxu0
  %v313 = vadd.f32 %v66, %v312
  %v314 = vpop.f32.mrf.mxu0
  %v315 = vadd.f32 %v66, %v314
  %316 = vmatmul.bf16.gmra.mxu0 %v114
  %v317 = vpop.f32.mrf.mxu0
  %v318 = vadd.f32 %v66, %v317
  %v319 = vpop.f32.mrf.mxu0
  %v320 = vadd.f32 %v66, %v319
  %321 = vmatmul.bf16.gmra.mxu0 %v115
  %v322 = vpop.f32.mrf.mxu0
  %v323 = vadd.f32 %v66, %v322
  %v324 = vpop.f32.mrf.mxu0
  %v325 = vadd.f32 %v66, %v324
  %326 = vmatmul.bf16.gmra.mxu0 %v116
  %v327 = vpop.f32.mrf.mxu0
  %v328 = vadd.f32 %v66, %v327
  %v329 = vpop.f32.mrf.mxu0
  %v330 = vadd.f32 %v66, %v329
  %331 = vmatmul.bf16.gmra.mxu0 %v117
  %v332 = vpop.f32.mrf.mxu0
  %v333 = vadd.f32 %v66, %v332
  %v334 = vpop.f32.mrf.mxu0
  %v335 = vadd.f32 %v66, %v334
  %336 = vmatmul.bf16.gmra.mxu0 %v118
  %v337 = vpop.f32.mrf.mxu0
  %v338 = vadd.f32 %v66, %v337
  %v339 = vpop.f32.mrf.mxu0
  %v340 = vadd.f32 %v66, %v339
  %341 = vdwg.mxu0
  %342 = vmatpush.bf16.msra.mxu0 %v253
  %343 = vmatpush.bf16.msra.mxu0 %v249
  %344 = vmatpush.bf16.msra.mxu0 %v245
  %345 = vmatpush.bf16.msra.mxu0 %v241
  %346 = vmatpush.bf16.msra.mxu0 %v237
  %347 = vmatpush.bf16.msra.mxu0 %v233
  %348 = vmatpush.bf16.msra.mxu0 %v229
  %349 = vmatpush.bf16.msra.mxu0 %v225
  %350 = vmatmul.bf16.gmra.mxu0 %v110
  %v351 = vpop.f32.mrf.mxu0
  %v352 = vadd.f32 %v67, %v351
  %v353 = vpop.f32.mrf.mxu0
  %v354 = vadd.f32 %v67, %v353
  %355 = vmatmul.bf16.gmra.mxu0 %v111
  %v356 = vpop.f32.mrf.mxu0
  %v357 = vadd.f32 %v67, %v356
  %v358 = vpop.f32.mrf.mxu0
  %v359 = vadd.f32 %v67, %v358
  %360 = vmatmul.bf16.gmra.mxu0 %v112
  %v361 = vpop.f32.mrf.mxu0
  %v362 = vadd.f32 %v67, %v361
  %v363 = vpop.f32.mrf.mxu0
  %v364 = vadd.f32 %v67, %v363
  %365 = vmatmul.bf16.gmra.mxu0 %v113
  %v366 = vpop.f32.mrf.mxu0
  %v367 = vadd.f32 %v67, %v366
  %v368 = vpop.f32.mrf.mxu0
  %v369 = vadd.f32 %v67, %v368
  %370 = vmatmul.bf16.gmra.mxu0 %v114
  %v371 = vpop.f32.mrf.mxu0
  %v372 = vadd.f32 %v67, %v371
  %v373 = vpop.f32.mrf.mxu0
  %v374 = vadd.f32 %v67, %v373
  %375 = vmatmul.bf16.gmra.mxu0 %v115
  %v376 = vpop.f32.mrf.mxu0
  %v377 = vadd.f32 %v67, %v376
  %v378 = vpop.f32.mrf.mxu0
  %v379 = vadd.f32 %v67, %v378
  %380 = vmatmul.bf16.gmra.mxu0 %v116
  %v381 = vpop.f32.mrf.mxu0
  %v382 = vadd.f32 %v67, %v381
  %v383 = vpop.f32.mrf.mxu0
  %v384 = vadd.f32 %v67, %v383
  %385 = vmatmul.bf16.gmra.mxu0 %v117
  %v386 = vpop.f32.mrf.mxu0
  %v387 = vadd.f32 %v67, %v386
  %v388 = vpop.f32.mrf.mxu0
  %v389 = vadd.f32 %v67, %v388
  %390 = vmatmul.bf16.gmra.mxu0 %v118
  %v391 = vpop.f32.mrf.mxu0
  %v392 = vadd.f32 %v67, %v391
  %v393 = vpop.f32.mrf.mxu0
  %v394 = vadd.f32 %v67, %v393
  %395 = vdwg.mxu0
  %396 = vmatpush.bf16.msra.mxu0 %v254
  %397 = vmatpush.bf16.msra.mxu0 %v250
  %398 = vmatpush.bf16.msra.mxu0 %v246
  %399 = vmatpush.bf16.msra.mxu0 %v242
  %400 = vmatpush.bf16.msra.mxu0 %v238
  %401 = vmatpush.bf16.msra.mxu0 %v234
  %402 = vmatpush.bf16.msra.mxu0 %v230
  %403 = vmatpush.bf16.msra.mxu0 %v226
  %404 = vmatmul.bf16.gmra.mxu0 %v110
  %v405 = vpop.f32.mrf.mxu0
  %v406 = vadd.f32 %v68, %v405
  %v407 = vpop.f32.mrf.mxu0
  %v408 = vadd.f32 %v68, %v407
  %409 = vmatmul.bf16.gmra.mxu0 %v111
  %v410 = vpop.f32.mrf.mxu0
  %v411 = vadd.f32 %v68, %v410
  %v412 = vpop.f32.mrf.mxu0
  %v413 = vadd.f32 %v68, %v412
  %414 = vmatmul.bf16.gmra.mxu0 %v112
  %v415 = vpop.f32.mrf.mxu0
  %v416 = vadd.f32 %v68, %v415
  %v417 = vpop.f32.mrf.mxu0
  %v418 = vadd.f32 %v68, %v417
  %419 = vmatmul.bf16.gmra.mxu0 %v113
  %v420 = vpop.f32.mrf.mxu0
  %v421 = vadd.f32 %v68, %v420
  %v422 = vpop.f32.mrf.mxu0
  %v423 = vadd.f32 %v68, %v422
  %424 = vmatmul.bf16.gmra.mxu0 %v114
  %v425 = vpop.f32.mrf.mxu0
  %v426 = vadd.f32 %v68, %v425
  %v427 = vpop.f32.mrf.mxu0
  %v428 = vadd.f32 %v68, %v427
  %429 = vmatmul.bf16.gmra.mxu0 %v115
  %v430 = vpop.f32.mrf.mxu0
  %v431 = vadd.f32 %v68, %v430
  %v432 = vpop.f32.mrf.mxu0
  %v433 = vadd.f32 %v68, %v432
  %434 = vmatmul.bf16.gmra.mxu0 %v116
  %v435 = vpop.f32.mrf.mxu0
  %v436 = vadd.f32 %v68, %v435
  %v437 = vpop.f32.mrf.mxu0
  %v438 = vadd.f32 %v68, %v437
  %439 = vmatmul.bf16.gmra.mxu0 %v117
  %v440 = vpop.f32.mrf.mxu0
  %v441 = vadd.f32 %v68, %v440
  %v442 = vpop.f32.mrf.mxu0
  %v443 = vadd.f32 %v68, %v442
  %444 = vmatmul.bf16.gmra.mxu0 %v118
  %v445 = vpop.f32.mrf.mxu0
  %v446 = vadd.f32 %v68, %v445
  %v447 = vpop.f32.mrf.mxu0
  %v448 = vadd.f32 %v68, %v447
  %449 = vdwg.mxu0
  %450 = vmatpush.bf16.msra.mxu0 %v255
  %451 = vmatpush.bf16.msra.mxu0 %v251
  %452 = vmatpush.bf16.msra.mxu0 %v247
  %453 = vmatpush.bf16.msra.mxu0 %v243
  %454 = vmatpush.bf16.msra.mxu0 %v239
  %455 = vmatpush.bf16.msra.mxu0 %v235
  %456 = vmatpush.bf16.msra.mxu0 %v231
  %457 = vmatpush.bf16.msra.mxu0 %v227
  %458 = vmatmul.bf16.gmra.mxu0 %v110
  %v459 = vpop.f32.mrf.mxu0
  %v460 = vadd.f32 %v69, %v459
  %v461 = vpop.f32.mrf.mxu0
  %v462 = vadd.f32 %v69, %v461
  %463 = vmatmul.bf16.gmra.mxu0 %v111
  %v464 = vpop.f32.mrf.mxu0
  %v465 = vadd.f32 %v69, %v464
  %v466 = vpop.f32.mrf.mxu0
  %v467 = vadd.f32 %v69, %v466
  %468 = vmatmul.bf16.gmra.mxu0 %v112
  %v469 = vpop.f32.mrf.mxu0
  %v470 = vadd.f32 %v69, %v469
  %v471 = vpop.f32.mrf.mxu0
  %v472 = vadd.f32 %v69, %v471
  %473 = vmatmul.bf16.gmra.mxu0 %v113
  %v474 = vpop.f32.mrf.mxu0
  %v475 = vadd.f32 %v69, %v474
  %v476 = vpop.f32.mrf.mxu0
  %v477 = vadd.f32 %v69, %v476
  %478 = vmatmul.bf16.gmra.mxu0 %v114
  %v479 = vpop.f32.mrf.mxu0
  %v480 = vadd.f32 %v69, %v479
  %v481 = vpop.f32.mrf.mxu0
  %v482 = vadd.f32 %v69, %v481
  %483 = vmatmul.bf16.gmra.mxu0 %v115
  %v484 = vpop.f32.mrf.mxu0
  %v485 = vadd.f32 %v69, %v484
  %v486 = vpop.f32.mrf.mxu0
  %v487 = vadd.f32 %v69, %v486
  %488 = vmatmul.bf16.gmra.mxu0 %v116
  %v489 = vpop.f32.mrf.mxu0
  %v490 = vadd.f32 %v69, %v489
  %v491 = vpop.f32.mrf.mxu0
  %v492 = vadd.f32 %v69, %v491
  %493 = vmatmul.bf16.gmra.mxu0 %v117
  %v494 = vpop.f32.mrf.mxu0
  %v495 = vadd.f32 %v69, %v494
  %v496 = vpop.f32.mrf.mxu0
  %v497 = vadd.f32 %v69, %v496
  %498 = vmatmul.bf16.gmra.mxu0 %v118
  %v499 = vpop.f32.mrf.mxu0
  %v500 = vadd.f32 %v69, %v499
  %v501 = vpop.f32.mrf.mxu0
  %v502 = vadd.f32 %v69, %v501
  %503 = vdwg.mxu0
  %504 = vst [vmem:[%s3] sm:$0xff] %v298
  %505 = vst [vmem:[%s3 + $0x8] sm:$0xff] %v352
  %506 = vst [vmem:[%s3 + $0x10] sm:$0xff] %v406
  %507 = vst [vmem:[%s3 + $0x18] sm:$0xff] %v460
  %508 = vst [vmem:[%s3 + $0x20] sm:$0xff] %v300
  %509 = vst [vmem:[%s3 + $0x28] sm:$0xff] %v354
  %510 = vst [vmem:[%s3 + $0x30] sm:$0xff] %v408
  %511 = vst [vmem:[%s3 + $0x38] sm:$0xff] %v462
  %512 = vst [vmem:[%s3 + $0x40] sm:$0xff] %v303
  %513 = vst [vmem:[%s3 + $0x48] sm:$0xff] %v357
  %514 = vst [vmem:[%s3 + $0x50] sm:$0xff] %v411
  %515 = vst [vmem:[%s3 + $0x58] sm:$0xff] %v465
  %516 = vst [vmem:[%s3 + $0x60] sm:$0xff] %v305
  %517 = vst [vmem:[%s3 + $0x68] sm:$0xff] %v359
  %518 = vst [vmem:[%s3 + $0x70] sm:$0xff] %v413
  %519 = vst [vmem:[%s3 + $0x78] sm:$0xff] %v467
  %520 = vst [vmem:[%s3 + $0x80] sm:$0xff] %v308
  %521 = vst [vmem:[%s3 + $0x88] sm:$0xff] %v362
  %522 = vst [vmem:[%s3 + $0x90] sm:$0xff] %v416
  %523 = vst [vmem:[%s3 + $0x98] sm:$0xff] %v470
  %524 = vst [vmem:[%s3 + $0xa0] sm:$0xff] %v310
  %525 = vst [vmem:[%s3 + $0xa8] sm:$0xff] %v364
  %526 = vst [vmem:[%s3 + $0xb0] sm:$0xff] %v418
  %527 = vst [vmem:[%s3 + $0xb8] sm:$0xff] %v472
  %528 = vst [vmem:[%s3 + $0xc0] sm:$0xff] %v313
  %529 = vst [vmem:[%s3 + $0xc8] sm:$0xff] %v367
  %530 = vst [vmem:[%s3 + $0xd0] sm:$0xff] %v421
  %531 = vst [vmem:[%s3 + $0xd8] sm:$0xff] %v475
  %532 = vst [vmem:[%s3 + $0xe0] sm:$0xff] %v315
  %533 = vst [vmem:[%s3 + $0xe8] sm:$0xff] %v369
  %534 = vst [vmem:[%s3 + $0xf0] sm:$0xff] %v423
  %535 = vst [vmem:[%s3 + $0xf8] sm:$0xff] %v477
  %536 = vst [vmem:[%s3 + $0x100] sm:$0xff] %v318
  %537 = vst [vmem:[%s3 + $0x108] sm:$0xff] %v372
  %538 = vst [vmem:[%s3 + $0x110] sm:$0xff] %v426
  %539 = vst [vmem:[%s3 + $0x118] sm:$0xff] %v480
  %540 = vst [vmem:[%s3 + $0x120] sm:$0xff] %v320
  %541 = vst [vmem:[%s3 + $0x128] sm:$0xff] %v374
  %542 = vst [vmem:[%s3 + $0x130] sm:$0xff] %v428
  %543 = vst [vmem:[%s3 + $0x138] sm:$0xff] %v482
  %544 = vst [vmem:[%s3 + $0x140] sm:$0xff] %v323
  %545 = vst [vmem:[%s3 + $0x148] sm:$0xff] %v377
  %546 = vst [vmem:[%s3 + $0x150] sm:$0xff] %v431
  %547 = vst [vmem:[%s3 + $0x158] sm:$0xff] %v485
  %548 = vst [vmem:[%s3 + $0x160] sm:$0xff] %v325
  %549 = vst [vmem:[%s3 + $0x168] sm:$0xff] %v379
  %550 = vst [vmem:[%s3 + $0x170] sm:$0xff] %v433
  %551 = vst [vmem:[%s3 + $0x178] sm:$0xff] %v487
  %552 = vst [vmem:[%s3 + $0x180] sm:$0xff] %v328
  %553 = vst [vmem:[%s3 + $0x188] sm:$0xff] %v382
  %554 = vst [vmem:[%s3 + $0x190] sm:$0xff] %v436
  %555 = vst [vmem:[%s3 + $0x198] sm:$0xff] %v490
  %556 = vst [vmem:[%s3 + $0x1a0] sm:$0xff] %v330
  %557 = vst [vmem:[%s3 + $0x1a8] sm:$0xff] %v384
  %558 = vst [vmem:[%s3 + $0x1b0] sm:$0xff] %v438
  %559 = vst [vmem:[%s3 + $0x1b8] sm:$0xff] %v492
  %560 = vst [vmem:[%s3 + $0x1c0] sm:$0xff] %v333
  %561 = vst [vmem:[%s3 + $0x1c8] sm:$0xff] %v387
  %562 = vst [vmem:[%s3 + $0x1d0] sm:$0xff] %v441
  %563 = vst [vmem:[%s3 + $0x1d8] sm:$0xff] %v495
  %564 = vst [vmem:[%s3 + $0x1e0] sm:$0xff] %v335
  %565 = vst [vmem:[%s3 + $0x1e8] sm:$0xff] %v389
  %566 = vst [vmem:[%s3 + $0x1f0] sm:$0xff] %v443
  %567 = vst [vmem:[%s3 + $0x1f8] sm:$0xff] %v497
  %568 = vst [vmem:[%s3 + $0x200] sm:$0xff] %v338
  %569 = vst [vmem:[%s3 + $0x208] sm:$0xff] %v392
  %570 = vst [vmem:[%s3 + $0x210] sm:$0xff] %v446
  %571 = vst [vmem:[%s3 + $0x218] sm:$0xff] %v500
  %572 = vst [vmem:[%s3 + $0x220] sm:$0xff] %v340
  %573 = vst [vmem:[%s3 + $0x228] sm:$0xff] %v394
  %574 = vst [vmem:[%s3 + $0x230] sm:$0xff] %v448
  %575 = vst [vmem:[%s3 + $0x238] sm:$0xff] %v502
  // Predicated region
  $region14: #{caption_decoder_forward.3} parent=0 // pred_check
    _
  $region15: #{caption_decoder_forward.3} parent=0 // pred_check_branch
    %577 = sbr.rel (0) target = $region17
  $region16: #{caption_decoder_forward.3} parent=0 // pred_region
    _
  $region17: #{caption_decoder_forward.3} parent=0 // pred_fallthru
    _
  // Predicated region
  $region18: #{caption_decoder_forward.3} parent=0 // pred_check
    _
  $region19: #{caption_decoder_forward.3} parent=0 // pred_check_branch
    %579 = sbr.rel (0) target = $region21
  $region20: #{caption_decoder_forward.3} parent=0 // pred_region
    _
  $region21: #{caption_decoder_forward.3} parent=0 // pred_fallthru
    _

// kernel: caption_decoder_forward.4
$region0: #{caption_decoder_forward.4}
  #allocation0 [shape = 'u32[]', space=smem, size = 0x4, offset = 0x4, fixed_abs, tag = 'smem constant byte address 0x4 - core index']
  #allocation1 [shape = 'u32[72,128]{1,0:T(1,128)}', space=vmem, size = 0x9000, scoped, tag = 'internal scratch']
  %s0 = inlined_call_operand.vmem [shape: f32[9,16,512], index: 0, kind: input, shape index: {}]
  %s1 = inlined_call_operand.vmem [shape: bf16[128,512], index: 1, kind: input, shape index: {}]
  %s2 = inlined_call_operand.vmem [shape: bf16[9,16,128], index: 2, kind: output, shape index: {}]
  %s3 = sld [smem:[#allocation0]]
  $region18: #{caption_decoder_forward.4} parent=0
    _
  %s5 = ssub.s32 1, %s3
  %s6 = scalar_select 0, %s5, %s3
  // Predicated region
  $region2: #{caption_decoder_forward.4} parent=0 // pred_check
    _
  $region3: #{caption_decoder_forward.4} parent=0 // pred_check_branch
    %8 = sbr.rel (0) target = $region5
  $region4: #{caption_decoder_forward.4} parent=0 // pred_region
    _
  $region5: #{caption_decoder_forward.4} parent=0 // pred_fallthru
    _
  // Predicated region
  $region6: #{caption_decoder_forward.4} parent=0 // pred_check
    _
  $region7: #{caption_decoder_forward.4} parent=0 // pred_check_branch
    %10 = sbr.rel (0) target = $region9
  $region8: #{caption_decoder_forward.4} parent=0 // pred_region
    _
  $region9: #{caption_decoder_forward.4} parent=0 // pred_fallthru
    _
  %v12 = vld [vmem:[%s1] sm:$0xff]
  %v13 = vld [vmem:[%s1 + $0x8] sm:$0xff]
  %v14 = vld [vmem:[%s1 + $0x10] sm:$0xff]
  %v15 = vld [vmem:[%s1 + $0x18] sm:$0xff]
  %v16 = vld [vmem:[%s1 + $0x20] sm:$0xff]
  %v17 = vld [vmem:[%s1 + $0x28] sm:$0xff]
  %v18 = vld [vmem:[%s1 + $0x30] sm:$0xff]
  %v19 = vld [vmem:[%s1 + $0x38] sm:$0xff]
  %v20 = vld [vmem:[%s1 + $0x40] sm:$0xff]
  %v21 = vld [vmem:[%s1 + $0x48] sm:$0xff]
  %v22 = vld [vmem:[%s1 + $0x50] sm:$0xff]
  %v23 = vld [vmem:[%s1 + $0x58] sm:$0xff]
  %v24 = vld [vmem:[%s1 + $0x60] sm:$0xff]
  %v25 = vld [vmem:[%s1 + $0x68] sm:$0xff]
  %v26 = vld [vmem:[%s1 + $0x70] sm:$0xff]
  %v27 = vld [vmem:[%s1 + $0x78] sm:$0xff]
  %v28 = vld [vmem:[%s1 + $0x80] sm:$0xff]
  %v29 = vld [vmem:[%s1 + $0x88] sm:$0xff]
  %v30 = vld [vmem:[%s1 + $0x90] sm:$0xff]
  %v31 = vld [vmem:[%s1 + $0x98] sm:$0xff]
  %v32 = vld [vmem:[%s1 + $0xa0] sm:$0xff]
  %v33 = vld [vmem:[%s1 + $0xa8] sm:$0xff]
  %v34 = vld [vmem:[%s1 + $0xb0] sm:$0xff]
  %v35 = vld [vmem:[%s1 + $0xb8] sm:$0xff]
  %v36 = vld [vmem:[%s1 + $0xc0] sm:$0xff]
  %v37 = vld [vmem:[%s1 + $0xc8] sm:$0xff]
  %v38 = vld [vmem:[%s1 + $0xd0] sm:$0xff]
  %v39 = vld [vmem:[%s1 + $0xd8] sm:$0xff]
  %v40 = vld [vmem:[%s1 + $0xe0] sm:$0xff]
  %v41 = vld [vmem:[%s1 + $0xe8] sm:$0xff]
  %v42 = vld [vmem:[%s1 + $0xf0] sm:$0xff]
  %v43 = vld [vmem:[%s1 + $0xf8] sm:$0xff]
  %v44 = vld [vmem:[%s0] sm:$0xff]
  %v45 = vld [vmem:[%s0 + $0x8] sm:$0xff]
  %v46 = vld [vmem:[%s0 + $0x10] sm:$0xff]
  %v47 = vld [vmem:[%s0 + $0x18] sm:$0xff]
  %v48 = vld [vmem:[%s0 + $0x20] sm:$0xff]
  %v49 = vld [vmem:[%s0 + $0x28] sm:$0xff]
  %v50 = vld [vmem:[%s0 + $0x30] sm:$0xff]
  %v51 = vld [vmem:[%s0 + $0x38] sm:$0xff]
  %v84 = vunpack.c.l.b16 %v12
  %v85 = vunpack.c.h.b16 %v12
  %v86 = vunpack.c.l.b16 %v13
  %v87 = vunpack.c.h.b16 %v13
  %v88 = vunpack.c.l.b16 %v14
  %v89 = vunpack.c.h.b16 %v14
  %v90 = vunpack.c.l.b16 %v15
  %v91 = vunpack.c.h.b16 %v15
  %v92 = vunpack.c.l.b16 %v16
  %v93 = vunpack.c.h.b16 %v16
  %v94 = vunpack.c.l.b16 %v17
  %v95 = vunpack.c.h.b16 %v17
  %v96 = vunpack.c.l.b16 %v18
  %v97 = vunpack.c.h.b16 %v18
  %v98 = vunpack.c.l.b16 %v19
  %v99 = vunpack.c.h.b16 %v19
  %v100 = vunpack.c.l.b16 %v20
  %v101 = vunpack.c.h.b16 %v20
  %v102 = vunpack.c.l.b16 %v21
  %v103 = vunpack.c.h.b16 %v21
  %v104 = vunpack.c.l.b16 %v22
  %v105 = vunpack.c.h.b16 %v22
  %v106 = vunpack.c.l.b16 %v23
  %v107 = vunpack.c.h.b16 %v23
  %v108 = vunpack.c.l.b16 %v24
  %v109 = vunpack.c.h.b16 %v24
  %v110 = vunpack.c.l.b16 %v25
  %v111 = vunpack.c.h.b16 %v25
  %v112 = vunpack.c.l.b16 %v26
  %v113 = vunpack.c.h.b16 %v26
  %v114 = vunpack.c.l.b16 %v27
  %v115 = vunpack.c.h.b16 %v27
  %v116 = vunpack.c.l.b16 %v28
  %v117 = vunpack.c.h.b16 %v28
  %v118 = vunpack.c.l.b16 %v29
  %v119 = vunpack.c.h.b16 %v29
  %v120 = vunpack.c.l.b16 %v30
  %v121 = vunpack.c.h.b16 %v30
  %v122 = vunpack.c.l.b16 %v31
  %v123 = vunpack.c.h.b16 %v31
  %v124 = vunpack.c.l.b16 %v32
  %v125 = vunpack.c.h.b16 %v32
  %v126 = vunpack.c.l.b16 %v33
  %v127 = vunpack.c.h.b16 %v33
  %v128 = vunpack.c.l.b16 %v34
  %v129 = vunpack.c.h.b16 %v34
  %v130 = vunpack.c.l.b16 %v35
  %v131 = vunpack.c.h.b16 %v35
  %v132 = vunpack.c.l.b16 %v36
  %v133 = vunpack.c.h.b16 %v36
  %v134 = vunpack.c.l.b16 %v37
  %v135 = vunpack.c.h.b16 %v37
  %v136 = vunpack.c.l.b16 %v38
  %v137 = vunpack.c.h.b16 %v38
  %v138 = vunpack.c.l.b16 %v39
  %v139 = vunpack.c.h.b16 %v39
  %v140 = vunpack.c.l.b16 %v40
  %v141 = vunpack.c.h.b16 %v40
  %v142 = vunpack.c.l.b16 %v41
  %v143 = vunpack.c.h.b16 %v41
  %v144 = vunpack.c.l.b16 %v42
  %v145 = vunpack.c.h.b16 %v42
  %v146 = vunpack.c.l.b16 %v43
  %v147 = vunpack.c.h.b16 %v43
  %v148 = vpack.c.b16 %v88, %v84
  %v149 = vpack.c.b16 %v89, %v85
  %v150 = vpack.c.b16 %v90, %v86
  %v151 = vpack.c.b16 %v91, %v87
  %v152 = vpack.c.b16 %v96, %v92
  %v153 = vpack.c.b16 %v97, %v93
  %v154 = vpack.c.b16 %v98, %v94
  %v155 = vpack.c.b16 %v99, %v95
  %v156 = vpack.c.b16 %v104, %v100
  %v157 = vpack.c.b16 %v105, %v101
  %v158 = vpack.c.b16 %v106, %v102
  %v159 = vpack.c.b16 %v107, %v103
  %v160 = vpack.c.b16 %v112, %v108
  %v161 = vpack.c.b16 %v113, %v109
  %v162 = vpack.c.b16 %v114, %v110
  %v163 = vpack.c.b16 %v115, %v111
  %v164 = vpack.c.b16 %v120, %v116
  %v165 = vpack.c.b16 %v121, %v117
  %v166 = vpack.c.b16 %v122, %v118
  %v167 = vpack.c.b16 %v123, %v119
  %v168 = vpack.c.b16 %v128, %v124
  %v169 = vpack.c.b16 %v129, %v125
  %v170 = vpack.c.b16 %v130, %v126
  %v171 = vpack.c.b16 %v131, %v127
  %v172 = vpack.c.b16 %v136, %v132
  %v173 = vpack.c.b16 %v137, %v133
  %v174 = vpack.c.b16 %v138, %v134
  %v175 = vpack.c.b16 %v139, %v135
  %v176 = vpack.c.b16 %v144, %v140
  %v177 = vpack.c.b16 %v145, %v141
  %v178 = vpack.c.b16 %v146, %v142
  %v179 = vpack.c.b16 %v147, %v143
  %212 = vmatpush.bf16.msra.mxu0 %v176
  %213 = vmatpush.bf16.msra.mxu0 %v172
  %214 = vmatpush.bf16.msra.mxu0 %v168
  %215 = vmatpush.bf16.msra.mxu0 %v164
  %216 = vmatpush.bf16.msra.mxu0 %v160
  %217 = vmatpush.bf16.msra.mxu0 %v156
  %218 = vmatpush.bf16.msra.mxu0 %v152
  %219 = vmatpush.bf16.msra.mxu0 %v148
  %220 = vmatmul.bf16.gmra.mxu0 0
  %v221 = vpop.f32.mrf.mxu0
  %v222 = vadd.f32 0.0, %v221
  %v223 = vpop.f32.mrf.mxu0
  %v224 = vadd.f32 0.0, %v223
  %225 = vdwg.mxu0
  %226 = vmatpush.bf16.msra.mxu0 %v177
  %227 = vmatpush.bf16.msra.mxu0 %v173
  %228 = vmatpush.bf16.msra.mxu0 %v169
  %229 = vmatpush.bf16.msra.mxu0 %v165
  %230 = vmatpush.bf16.msra.mxu0 %v161
  %231 = vmatpush.bf16.msra.mxu0 %v157
  %232 = vmatpush.bf16.msra.mxu0 %v153
  %233 = vmatpush.bf16.msra.mxu0 %v149
  %234 = vmatmul.bf16.gmra.mxu0 0
  %v235 = vpop.f32.mrf.mxu0
  %v236 = vadd.f32 0.0, %v235
  %v237 = vpop.f32.mrf.mxu0
  %v238 = vadd.f32 0.0, %v237
  %239 = vdwg.mxu0
  %240 = vmatpush.bf16.msra.mxu0 %v178
  %241 = vmatpush.bf16.msra.mxu0 %v174
  %242 = vmatpush.bf16.msra.mxu0 %v170
  %243 = vmatpush.bf16.msra.mxu0 %v166
  %244 = vmatpush.bf16.msra.mxu0 %v162
  %245 = vmatpush.bf16.msra.mxu0 %v158
  %246 = vmatpush.bf16.msra.mxu0 %v154
  %247 = vmatpush.bf16.msra.mxu0 %v150
  %248 = vmatmul.bf16.gmra.mxu0 0
  %v249 = vpop.f32.mrf.mxu0
  %v250 = vadd.f32 0.0, %v249
  %v251 = vpop.f32.mrf.mxu0
  %v252 = vadd.f32 0.0, %v251
  %253 = vdwg.mxu0
  %254 = vmatpush.bf16.msra.mxu0 %v179
  %255 = vmatpush.bf16.msra.mxu0 %v175
  %256 = vmatpush.bf16.msra.mxu0 %v171
  %257 = vmatpush.bf16.msra.mxu0 %v167
  %258 = vmatpush.bf16.msra.mxu0 %v163
  %259 = vmatpush.bf16.msra.mxu0 %v159
  %260 = vmatpush.bf16.msra.mxu0 %v155
  %261 = vmatpush.bf16.msra.mxu0 %v151
  %262 = vmatmul.bf16.gmra.mxu0 0
  %v263 = vpop.f32.mrf.mxu0
  %v264 = vadd.f32 0.0, %v263
  %v265 = vpop.f32.mrf.mxu0
  %v266 = vadd.f32 0.0, %v265
  %267 = vdwg.mxu0
  %v268 = vadd.f32 %v44, %v222
  %v269 = vadd.f32 %v45, %v236
  %v270 = vadd.f32 %v46, %v250
  %v271 = vadd.f32 %v47, %v264
  %v272 = vadd.f32 %v48, %v224
  %v273 = vadd.f32 %v49, %v238
  %v274 = vadd.f32 %v50, %v252
  %v275 = vadd.f32 %v51, %v266
  %v276 = vxor.u32 %v268, 2147483648
  %v277 = vxor.u32 %v272, 2147483648
  %v278 = vmul.f32 %v276, 1.442695
  %v279 = vpow.pop %v278
  %v280 = vmul.f32 %v277, 1.442695
  %v281 = vpow.pop %v280
  %v282 = vadd.f32 %v279, 1.0
  %v283 = vadd.f32 %v281, 1.0
  %v284 = vrcp.pop %v282
  %v285 = vmul.f32 %v282, %v284
  %v286 = vsub.f32 1.0, %v285
  %v287 = vmul.f32 %v284, %v286
  %v288 = vadd.f32 %v284, %v287
  %vm289 = vweird.f32 %v282
  %vm290 = vweird.f32 %v284
  %vm291 = vmor %vm289, %vm290
  %v292 = vsel %vm291, %v284, %v288
  %v293 = vand.u32 2147483647, %v282
  %vm294 = vcmp.eq.f32.partialorder %v293, 8.507059e+37
  %v295 = vand.u32 %v282, 2147483648
  %v296 = vor.u32 1.1754944e-38, %v295
  %v297 = vsel %vm294, %v296, %v292
  %v298 = vmul.f32 1.0, %v297
  %v299 = vrcp.pop %v283
  %v300 = vmul.f32 %v283, %v299
  %v301 = vsub.f32 1.0, %v300
  %v302 = vmul.f32 %v299, %v301
  %v303 = vadd.f32 %v299, %v302
  %vm304 = vweird.f32 %v283
  %vm305 = vweird.f32 %v299
  %vm306 = vmor %vm304, %vm305
  %v307 = vsel %vm306, %v299, %v303
  %v308 = vand.u32 2147483647, %v283
  %vm309 = vcmp.eq.f32.partialorder %v308, 8.507059e+37
  %v310 = vand.u32 %v283, 2147483648
  %v311 = vor.u32 1.1754944e-38, %v310
  %v312 = vsel %vm309, %v311, %v307
  %v313 = vmul.f32 1.0, %v312
  %v314 = vxor.u32 %v269, 2147483648
  %v315 = vxor.u32 %v273, 2147483648
  %v316 = vmul.f32 %v314, 1.442695
  %v317 = vpow.pop %v316
  %v318 = vmul.f32 %v315, 1.442695
  %v319 = vpow.pop %v318
  %v320 = vadd.f32 %v317, 1.0
  %v321 = vadd.f32 %v319, 1.0
  %v322 = vrcp.pop %v320
  %v323 = vmul.f32 %v320, %v322
  %v324 = vsub.f32 1.0, %v323
  %v325 = vmul.f32 %v322, %v324
  %v326 = vadd.f32 %v322, %v325
  %vm327 = vweird.f32 %v320
  %vm328 = vweird.f32 %v322
  %vm329 = vmor %vm327, %vm328
  %v330 = vsel %vm329, %v322, %v326
  %v331 = vand.u32 2147483647, %v320
  %vm332 = vcmp.eq.f32.partialorder %v331, 8.507059e+37
  %v333 = vand.u32 %v320, 2147483648
  %v334 = vor.u32 1.1754944e-38, %v333
  %v335 = vsel %vm332, %v334, %v330
  %v336 = vmul.f32 1.0, %v335
  %v337 = vrcp.pop %v321
  %v338 = vmul.f32 %v321, %v337
  %v339 = vsub.f32 1.0, %v338
  %v340 = vmul.f32 %v337, %v339
  %v341 = vadd.f32 %v337, %v340
  %vm342 = vweird.f32 %v321
  %vm343 = vweird.f32 %v337
  %vm344 = vmor %vm342, %vm343
  %v345 = vsel %vm344, %v337, %v341
  %v346 = vand.u32 2147483647, %v321
  %vm347 = vcmp.eq.f32.partialorder %v346, 8.507059e+37
  %v348 = vand.u32 %v321, 2147483648
  %v349 = vor.u32 1.1754944e-38, %v348
  %v350 = vsel %vm347, %v349, %v345
  %v351 = vmul.f32 1.0, %v350
  %v352 = vtanh.pop %v270
  %v353 = vtanh.pop %v274
  %v354 = vxor.u32 %v271, 2147483648
  %v355 = vxor.u32 %v275, 2147483648
  %v356 = vmul.f32 %v354, 1.442695
  %v357 = vpow.pop %v356
  %v358 = vmul.f32 %v355, 1.442695
  %v359 = vpow.pop %v358
  %v360 = vadd.f32 %v357, 1.0
  %v361 = vadd.f32 %v359, 1.0
  %v362 = vrcp.pop %v360
  %v363 = vmul.f32 %v360, %v362
  %v364 = vsub.f32 1.0, %v363
  %v365 = vmul.f32 %v362, %v364
  %v366 = vadd.f32 %v362, %v365
  %vm367 = vweird.f32 %v360
  %vm368 = vweird.f32 %v362
  %vm369 = vmor %vm367, %vm368
  %v370 = vsel %vm369, %v362, %v366
  %v371 = vand.u32 2147483647, %v360
  %vm372 = vcmp.eq.f32.partialorder %v371, 8.507059e+37
  %v373 = vand.u32 %v360, 2147483648
  %v374 = vor.u32 1.1754944e-38, %v373
  %v375 = vsel %vm372, %v374, %v370
  %v376 = vmul.f32 1.0, %v375
  %v377 = vrcp.pop %v361
  %v378 = vmul.f32 %v361, %v377
  %v379 = vsub.f32 1.0, %v378
  %v380 = vmul.f32 %v377, %v379
  %v381 = vadd.f32 %v377, %v380
  %vm382 = vweird.f32 %v361
  %vm383 = vweird.f32 %v377
  %vm384 = vmor %vm382, %vm383
  %v385 = vsel %vm384, %v377, %v381
  %v386 = vand.u32 2147483647, %v361
  %vm387 = vcmp.eq.f32.partialorder %v386, 8.507059e+37
  %v388 = vand.u32 %v361, 2147483648
  %v389 = vor.u32 1.1754944e-38, %v388
  %v390 = vsel %vm387, %v389, %v385
  %v391 = vmul.f32 1.0, %v390
  %v392 = vmul.f32 %v336, 0.0
  %v393 = vmul.f32 %v351, 0.0
  %v394 = vmul.f32 %v298, %v352
  %v395 = vmul.f32 %v313, %v353
  %v396 = vadd.f32 %v392, %v394
  %v397 = vadd.f32 %v393, %v395
  %v398 = vtanh.pop %v396
  %v399 = vtanh.pop %v397
  %v400 = vmul.f32 %v376, %v398
  %v401 = vmul.f32 %v391, %v399
  %v402 = vpack.c.bf16 %v400, %v400
  %v403 = vpack.c.bf16 %v401, %v401
  %404 = vst [vmem:[%s2] sm:$0xf] %v402
  %405 = vst [vmem:[%s2 + $0x4] sm:$0xf] %v403
  %s406 = scalar_lea.vmem %s0, 64
  %v407 = vld [vmem:[%s406] sm:$0xff]
  %v408 = vld [vmem:[%s406 + $0x8] sm:$0xff]
  %v409 = vld [vmem:[%s406 + $0x10] sm:$0xff]
  %v410 = vld [vmem:[%s406 + $0x18] sm:$0xff]
  %v411 = vld [vmem:[%s406 + $0x20] sm:$0xff]
  %v412 = vld [vmem:[%s406 + $0x28] sm:$0xff]
  %v413 = vld [vmem:[%s406 + $0x30] sm:$0xff]
  %v414 = vld [vmem:[%s406 + $0x38] sm:$0xff]
  %v417 = vunpack.c.l.b16 %v402
  %v418 = vunpack.c.l.b16 %v403
  %v419 = vpack.c.b16 %v418, %v417
  %421 = vmatpush.bf16.msra.mxu0 %v176
  %422 = vmatpush.bf16.msra.mxu0 %v172
  %423 = vmatpush.bf16.msra.mxu0 %v168
  %424 = vmatpush.bf16.msra.mxu0 %v164
  %425 = vmatpush.bf16.msra.mxu0 %v160
  %426 = vmatpush.bf16.msra.mxu0 %v156
  %427 = vmatpush.bf16.msra.mxu0 %v152
  %428 = vmatpush.bf16.msra.mxu0 %v148
  %429 = vmatmul.bf16.gmra.mxu0 %v419
  %v430 = vpop.f32.mrf.mxu0
  %v431 = vadd.f32 0.0, %v430
  %v432 = vpop.f32.mrf.mxu0
  %v433 = vadd.f32 0.0, %v432
  %434 = vdwg.mxu0
  %435 = vmatpush.bf16.msra.mxu0 %v177
  %436 = vmatpush.bf16.msra.mxu0 %v173
  %437 = vmatpush.bf16.msra.mxu0 %v169
  %438 = vmatpush.bf16.msra.mxu0 %v165
  %439 = vmatpush.bf16.msra.mxu0 %v161
  %440 = vmatpush.bf16.msra.mxu0 %v157
  %441 = vmatpush.bf16.msra.mxu0 %v153
  %442 = vmatpush.bf16.msra.mxu0 %v149
  %443 = vmatmul.bf16.gmra.mxu0 %v419
  %v444 = vpop.f32.mrf.mxu0
  %v445 = vadd.f32 0.0, %v444
  %v446 = vpop.f32.mrf.mxu0
  %v447 = vadd.f32 0.0, %v446
  %448 = vdwg.mxu0
  %449 = vmatpush.bf16.msra.mxu0 %v178
  %450 = vmatpush.bf16.msra.mxu0 %v174
  %451 = vmatpush.bf16.msra.mxu0 %v170
  %452 = vmatpush.bf16.msra.mxu0 %v166
  %453 = vmatpush.bf16.msra.mxu0 %v162
  %454 = vmatpush.bf16.msra.mxu0 %v158
  %455 = vmatpush.bf16.msra.mxu0 %v154
  %456 = vmatpush.bf16.msra.mxu0 %v150
  %457 = vmatmul.bf16.gmra.mxu0 %v419
  %v458 = vpop.f32.mrf.mxu0
  %v459 = vadd.f32 0.0, %v458
  %v460 = vpop.f32.mrf.mxu0
  %v461 = vadd.f32 0.0, %v460
  %462 = vdwg.mxu0
  %463 = vmatpush.bf16.msra.mxu0 %v179
  %464 = vmatpush.bf16.msra.mxu0 %v175
  %465 = vmatpush.bf16.msra.mxu0 %v171
  %466 = vmatpush.bf16.msra.mxu0 %v167
  %467 = vmatpush.bf16.msra.mxu0 %v163
  %468 = vmatpush.bf16.msra.mxu0 %v159
  %469 = vmatpush.bf16.msra.mxu0 %v155
  %470 = vmatpush.bf16.msra.mxu0 %v151
  %471 = vmatmul.bf16.gmra.mxu0 %v419
  %v472 = vpop.f32.mrf.mxu0
  %v473 = vadd.f32 0.0, %v472
  %v474 = vpop.f32.mrf.mxu0
  %v475 = vadd.f32 0.0, %v474
  %476 = vdwg.mxu0
  %v477 = vadd.f32 %v407, %v431
  %v478 = vadd.f32 %v408, %v445
  %v479 = vadd.f32 %v409, %v459
  %v480 = vadd.f32 %v410, %v473
  %v481 = vadd.f32 %v411, %v433
  %v482 = vadd.f32 %v412, %v447
  %v483 = vadd.f32 %v413, %v461
  %v484 = vadd.f32 %v414, %v475
  %v485 = vxor.u32 %v477, 2147483648
  %v486 = vxor.u32 %v481, 2147483648
  %v487 = vmul.f32 %v485, 1.442695
  %v488 = vpow.pop %v487
  %v489 = vmul.f32 %v486, 1.442695
  %v490 = vpow.pop %v489
  %v491 = vadd.f32 %v488, 1.0
  %v492 = vadd.f32 %v490, 1.0
  %v493 = vrcp.pop %v491
  %v494 = vmul.f32 %v491, %v493
  %v495 = vsub.f32 1.0, %v494
  %v496 = vmul.f32 %v493, %v495
  %v497 = vadd.f32 %v493, %v496
  %vm498 = vweird.f32 %v491
  %vm499 = vweird.f32 %v493
  %vm500 = vmor %vm498, %vm499
  %v501 = vsel %vm500, %v493, %v497
  %v502 = vand.u32 2147483647, %v491
  %vm503 = vcmp.eq.f32.partialorder %v502, 8.507059e+37
  %v504 = vand.u32 %v491, 2147483648
  %v505 = vor.u32 1.1754944e-38, %v504
  %v506 = vsel %vm503, %v505, %v501
  %v507 = vmul.f32 1.0, %v506
  %v508 = vrcp.pop %v492
  %v509 = vmul.f32 %v492, %v508
  %v510 = vsub.f32 1.0, %v509
  %v511 = vmul.f32 %v508, %v510
  %v512 = vadd.f32 %v508, %v511
  %vm513 = vweird.f32 %v492
  %vm514 = vweird.f32 %v508
  %vm515 = vmor %vm513, %vm514
  %v516 = vsel %vm515, %v508, %v512
  %v517 = vand.u32 2147483647, %v492
  %vm518 = vcmp.eq.f32.partialorder %v517, 8.507059e+37
  %v519 = vand.u32 %v492, 2147483648
  %v520 = vor.u32 1.1754944e-38, %v519
  %v521 = vsel %vm518, %v520, %v516
  %v522 = vmul.f32 1.0, %v521
  %v523 = vxor.u32 %v478, 2147483648
  %v524 = vxor.u32 %v482, 2147483648
  %v525 = vmul.f32 %v523, 1.442695
  %v526 = vpow.pop %v525
  %v527 = vmul.f32 %v524, 1.442695
  %v528 = vpow.pop %v527
  %v529 = vadd.f32 %v526, 1.0
  %v530 = vadd.f32 %v528, 1.0
  %v531 = vrcp.pop %v529
  %v532 = vmul.f32 %v529, %v531
  %v533 = vsub.f32 1.0, %v532
  %v534 = vmul.f32 %v531, %v533
  %v535 = vadd.f32 %v531, %v534
  %vm536 = vweird.f32 %v529
  %vm537 = vweird.f32 %v531
  %vm538 = vmor %vm536, %vm537
  %v539 = vsel %vm538, %v531, %v535
  %v540 = vand.u32 2147483647, %v529
  %vm541 = vcmp.eq.f32.partialorder %v540, 8.507059e+37
  %v542 = vand.u32 %v529, 2147483648
  %v543 = vor.u32 1.1754944e-38, %v542
  %v544 = vsel %vm541, %v543, %v539
  %v545 = vmul.f32 1.0, %v544
  %v546 = vrcp.pop %v530
  %v547 = vmul.f32 %v530, %v546
  %v548 = vsub.f32 1.0, %v547
  %v549 = vmul.f32 %v546, %v548
  %v550 = vadd.f32 %v546, %v549
  %vm551 = vweird.f32 %v530
  %vm552 = vweird.f32 %v546
  %vm553 = vmor %vm551, %vm552
  %v554 = vsel %vm553, %v546, %v550
  %v555 = vand.u32 2147483647, %v530
  %vm556 = vcmp.eq.f32.partialorder %v555, 8.507059e+37
  %v557 = vand.u32 %v530, 2147483648
  %v558 = vor.u32 1.1754944e-38, %v557
  %v559 = vsel %vm556, %v558, %v554
  %v560 = vmul.f32 1.0, %v559
  %v561 = vtanh.pop %v479
  %v562 = vtanh.pop %v483
  %v563 = vxor.u32 %v480, 2147483648
  %v564 = vxor.u32 %v484, 2147483648
  %v565 = vmul.f32 %v563, 1.442695
  %v566 = vpow.pop %v565
  %v567 = vmul.f32 %v564, 1.442695
  %v568 = vpow.pop %v567
  %v569 = vadd.f32 %v566, 1.0
  %v570 = vadd.f32 %v568, 1.0
  %v571 = vrcp.pop %v569
  %v572 = vmul.f32 %v569, %v571
  %v573 = vsub.f32 1.0, %v572
  %v574 = vmul.f32 %v571, %v573
  %v575 = vadd.f32 %v571, %v574
  %vm576 = vweird.f32 %v569
  %vm577 = vweird.f32 %v571
  %vm578 = vmor %vm576, %vm577
  %v579 = vsel %vm578, %v571, %v575
  %v580 = vand.u32 2147483647, %v569
  %vm581 = vcmp.eq.f32.partialorder %v580, 8.507059e+37
  %v582 = vand.u32 %v569, 2147483648
  %v583 = vor.u32 1.1754944e-38, %v582
  %v584 = vsel %vm581, %v583, %v579
  %v585 = vmul.f32 1.0, %v584
  %v586 = vrcp.pop %v570
  %v587 = vmul.f32 %v570, %v586
  %v588 = vsub.f32 1.0, %v587
  %v589 = vmul.f32 %v586, %v588
  %v590 = vadd.f32 %v586, %v589
  %vm591 = vweird.f32 %v570
  %vm592 = vweird.f32 %v586
  %vm593 = vmor %vm591, %vm592
  %v594 = vsel %vm593, %v586, %v590
  %v595 = vand.u32 2147483647, %v570
  %vm596 = vcmp.eq.f32.partialorder %v595, 8.507059e+37
  %v597 = vand.u32 %v570, 2147483648
  %v598 = vor.u32 1.1754944e-38, %v597
  %v599 = vsel %vm596, %v598, %v594
  %v600 = vmul.f32 1.0, %v599
  %v601 = vmul.f32 %v545, %v396
  %v602 = vmul.f32 %v560, %v397
  %v603 = vmul.f32 %v507, %v561
  %v604 = vmul.f32 %v522, %v562
  %v605 = vadd.f32 %v601, %v603
  %v606 = vadd.f32 %v602, %v604
  %v607 = vtanh.pop %v605
  %v608 = vtanh.pop %v606
  %v609 = vmul.f32 %v585, %v607
  %v610 = vmul.f32 %v600, %v608
  %v611 = vpack.c.bf16 %v609, %v609
  %v612 = vpack.c.bf16 %v610, %v610
  %s613 = scalar_lea.vmem %s2, 8
  %614 = vst [vmem:[%s613] sm:$0xf] %v611
  %615 = vst [vmem:[%s613 + $0x4] sm:$0xf] %v612
  %s616 = scalar_lea.vmem %s0, 128
  %v617 = vld [vmem:[%s616] sm:$0xff]
  %v618 = vld [vmem:[%s616 + $0x8] sm:$0xff]
  %v619 = vld [vmem:[%s616 + $0x10] sm:$0xff]
  %v620 = vld [vmem:[%s616 + $0x18] sm:$0xff]
  %v621 = vld [vmem:[%s616 + $0x20] sm:$0xff]
  %v622 = vld [vmem:[%s616 + $0x28] sm:$0xff]
  %v623 = vld [vmem:[%s616 + $0x30] sm:$0xff]
  %v624 = vld [vmem:[%s616 + $0x38] sm:$0xff]
  %v627 = vunpack.c.l.b16 %v611
  %v628 = vunpack.c.l.b16 %v612
  %v629 = vpack.c.b16 %v628, %v627
  %631 = vmatpush.bf16.msra.mxu0 %v176
  %632 = vmatpush.bf16.msra.mxu0 %v172
  %633 = vmatpush.bf16.msra.mxu0 %v168
  %634 = vmatpush.bf16.msra.mxu0 %v164
  %635 = vmatpush.bf16.msra.mxu0 %v160
  %636 = vmatpush.bf16.msra.mxu0 %v156
  %637 = vmatpush.bf16.msra.mxu0 %v152
  %638 = vmatpush.bf16.msra.mxu0 %v148
  %639 = vmatmul.bf16.gmra.mxu0 %v629
  %v640 = vpop.f32.mrf.mxu0
  %v641 = vadd.f32 0.0, %v640
  %v642 = vpop.f32.mrf.mxu0
  %v643 = vadd.f32 0.0, %v642
  %644 = vdwg.mxu0
  %645 = vmatpush.bf16.msra.mxu0 %v177
  %646 = vmatpush.bf16.msra.mxu0 %v173
  %647 = vmatpush.bf16.msra.mxu0 %v169
  %648 = vmatpush.bf16.msra.mxu0 %v165
  %649 = vmatpush.bf16.msra.mxu0 %v161
  %650 = vmatpush.bf16.msra.mxu0 %v157
  %651 = vmatpush.bf16.msra.mxu0 %v153
  %652 = vmatpush.bf16.msra.mxu0 %v149
  %653 = vmatmul.bf16.gmra.mxu0 %v629
  %v654 = vpop.f32.mrf.mxu0
  %v655 = vadd.f32 0.0, %v654
  %v656 = vpop.f32.mrf.mxu0
  %v657 = vadd.f32 0.0, %v656
  %658 = vdwg.mxu0
  %659 = vmatpush.bf16.msra.mxu0 %v178
  %660 = vmatpush.bf16.msra.mxu0 %v174
  %661 = vmatpush.bf16.msra.mxu0 %v170
  %662 = vmatpush.bf16.msra.mxu0 %v166
  %663 = vmatpush.bf16.msra.mxu0 %v162
  %664 = vmatpush.bf16.msra.mxu0 %v158
  %665 = vmatpush.bf16.msra.mxu0 %v154
  %666 = vmatpush.bf16.msra.mxu0 %v150
  %667 = vmatmul.bf16.gmra.mxu0 %v629
  %v668 = vpop.f32.mrf.mxu0
  %v669 = vadd.f32 0.0, %v668
  %v670 = vpop.f32.mrf.mxu0
  %v671 = vadd.f32 0.0, %v670
  %672 = vdwg.mxu0
  %673 = vmatpush.bf16.msra.mxu0 %v179
  %674 = vmatpush.bf16.msra.mxu0 %v175
  %675 = vmatpush.bf16.msra.mxu0 %v171
  %676 = vmatpush.bf16.msra.mxu0 %v167
  %677 = vmatpush.bf16.msra.mxu0 %v163
  %678 = vmatpush.bf16.msra.mxu0 %v159
  %679 = vmatpush.bf16.msra.mxu0 %v155
  %680 = vmatpush.bf16.msra.mxu0 %v151
  %681 = vmatmul.bf16.gmra.mxu0 %v629
  %v682 = vpop.f32.mrf.mxu0
  %v683 = vadd.f32 0.0, %v682
  %v684 = vpop.f32.mrf.mxu0
  %v685 = vadd.f32 0.0, %v684
  %686 = vdwg.mxu0
  %v687 = vadd.f32 %v617, %v641
  %v688 = vadd.f32 %v618, %v655
  %v689 = vadd.f32 %v619, %v669
  %v690 = vadd.f32 %v620, %v683
  %v691 = vadd.f32 %v621, %v643
  %v692 = vadd.f32 %v622, %v657
  %v693 = vadd.f32 %v623, %v671
  %v694 = vadd.f32 %v624, %v685
  %v695 = vxor.u32 %v687, 2147483648
  %v696 = vxor.u32 %v691, 2147483648
  %v697 = vmul.f32 %v695, 1.442695
  %v698 = vpow.pop %v697
  %v699 = vmul.f32 %v696, 1.442695
  %v700 = vpow.pop %v699
  %v701 = vadd.f32 %v698, 1.0
  %v702 = vadd.f32 %v700, 1.0
  %v703 = vrcp.pop %v701
  %v704 = vmul.f32 %v701, %v703
  %v705 = vsub.f32 1.0, %v704
  %v706 = vmul.f32 %v703, %v705
  %v707 = vadd.f32 %v703, %v706
  %vm708 = vweird.f32 %v701
  %vm709 = vweird.f32 %v703
  %vm710 = vmor %vm708, %vm709
  %v711 = vsel %vm710, %v703, %v707
  %v712 = vand.u32 2147483647, %v701
  %vm713 = vcmp.eq.f32.partialorder %v712, 8.507059e+37
  %v714 = vand.u32 %v701, 2147483648
  %v715 = vor.u32 1.1754944e-38, %v714
  %v716 = vsel %vm713, %v715, %v711
  %v717 = vmul.f32 1.0, %v716
  %v718 = vrcp.pop %v702
  %v719 = vmul.f32 %v702, %v718
  %v720 = vsub.f32 1.0, %v719
  %v721 = vmul.f32 %v718, %v720
  %v722 = vadd.f32 %v718, %v721
  %vm723 = vweird.f32 %v702
  %vm724 = vweird.f32 %v718
  %vm725 = vmor %vm723, %vm724
  %v726 = vsel %vm725, %v718, %v722
  %v727 = vand.u32 2147483647, %v702
  %vm728 = vcmp.eq.f32.partialorder %v727, 8.507059e+37
  %v729 = vand.u32 %v702, 2147483648
  %v730 = vor.u32 1.1754944e-38, %v729
  %v731 = vsel %vm728, %v730, %v726
  %v732 = vmul.f32 1.0, %v731
  %v733 = vxor.u32 %v688, 2147483648
  %v734 = vxor.u32 %v692, 2147483648
  %v735 = vmul.f32 %v733, 1.442695
  %v736 = vpow.pop %v735
  %v737 = vmul.f32 %v734, 1.442695
  %v738 = vpow.pop %v737
  %v739 = vadd.f32 %v736, 1.0
  %v740 = vadd.f32 %v738, 1.0
  %v741 = vrcp.pop %v739
  %v742 = vmul.f32 %v739, %v741
  %v743 = vsub.f32 1.0, %v742
  %v744 = vmul.f32 %v741, %v743
  %v745 = vadd.f32 %v741, %v744
  %vm746 = vweird.f32 %v739
  %vm747 = vweird.f32 %v741
  %vm748 = vmor %vm746, %vm747
  %v749 = vsel %vm748, %v741, %v745
  %v750 = vand.u32 2147483647, %v739
  %vm751 = vcmp.eq.f32.partialorder %v750, 8.507059e+37
  %v752 = vand.u32 %v739, 2147483648
  %v753 = vor.u32 1.1754944e-38, %v752
  %v754 = vsel %vm751, %v753, %v749
  %v755 = vmul.f32 1.0, %v754
  %v756 = vrcp.pop %v740
  %v757 = vmul.f32 %v740, %v756
  %v758 = vsub.f32 1.0, %v757
  %v759 = vmul.f32 %v756, %v758
  %v760 = vadd.f32 %v756, %v759
  %vm761 = vweird.f32 %v740
  %vm762 = vweird.f32 %v756
  %vm763 = vmor %vm761, %vm762
  %v764 = vsel %vm763, %v756, %v760
  %v765 = vand.u32 2147483647, %v740
  %vm766 = vcmp.eq.f32.partialorder %v765, 8.507059e+37
  %v767 = vand.u32 %v740, 2147483648
  %v768 = vor.u32 1.1754944e-38, %v767
  %v769 = vsel %vm766, %v768, %v764
  %v770 = vmul.f32 1.0, %v769
  %v771 = vtanh.pop %v689
  %v772 = vtanh.pop %v693
  %v773 = vxor.u32 %v690, 2147483648
  %v774 = vxor.u32 %v694, 2147483648
  %v775 = vmul.f32 %v773, 1.442695
  %v776 = vpow.pop %v775
  %v777 = vmul.f32 %v774, 1.442695
  %v778 = vpow.pop %v777
  %v779 = vadd.f32 %v776, 1.0
  %v780 = vadd.f32 %v778, 1.0
  %v781 = vrcp.pop %v779
  %v782 = vmul.f32 %v779, %v781
  %v783 = vsub.f32 1.0, %v782
  %v784 = vmul.f32 %v781, %v783
  %v785 = vadd.f32 %v781, %v784
  %vm786 = vweird.f32 %v779
  %vm787 = vweird.f32 %v781
  %vm788 = vmor %vm786, %vm787
  %v789 = vsel %vm788, %v781, %v785
  %v790 = vand.u32 2147483647, %v779
  %vm791 = vcmp.eq.f32.partialorder %v790, 8.507059e+37
  %v792 = vand.u32 %v779, 2147483648
  %v793 = vor.u32 1.1754944e-38, %v792
  %v794 = vsel %vm791, %v793, %v789
  %v795 = vmul.f32 1.0, %v794
  %v796 = vrcp.pop %v780
  %v797 = vmul.f32 %v780, %v796
  %v798 = vsub.f32 1.0, %v797
  %v799 = vmul.f32 %v796, %v798
  %v800 = vadd.f32 %v796, %v799
  %vm801 = vweird.f32 %v780
  %vm802 = vweird.f32 %v796
  %vm803 = vmor %vm801, %vm802
  %v804 = vsel %vm803, %v796, %v800
  %v805 = vand.u32 2147483647, %v780
  %vm806 = vcmp.eq.f32.partialorder %v805, 8.507059e+37
  %v807 = vand.u32 %v780, 2147483648
  %v808 = vor.u32 1.1754944e-38, %v807
  %v809 = vsel %vm806, %v808, %v804
  %v810 = vmul.f32 1.0, %v809
  %v811 = vmul.f32 %v755, %v605
  %v812 = vmul.f32 %v770, %v606
  %v813 = vmul.f32 %v717, %v771
  %v814 = vmul.f32 %v732, %v772
  %v815 = vadd.f32 %v811, %v813
  %v816 = vadd.f32 %v812, %v814
  %v817 = vtanh.pop %v815
  %v818 = vtanh.pop %v816
  %v819 = vmul.f32 %v795, %v817
  %v820 = vmul.f32 %v810, %v818
  %v821 = vpack.c.bf16 %v819, %v819
  %v822 = vpack.c.bf16 %v820, %v820
  %s823 = scalar_lea.vmem %s2, 16
  %824 = vst [vmem:[%s823] sm:$0xf] %v821
  %825 = vst [vmem:[%s823 + $0x4] sm:$0xf] %v822
  %s826 = scalar_lea.vmem %s0, 192
  %v827 = vld [vmem:[%s826] sm:$0xff]
  %v828 = vld [vmem:[%s826 + $0x8] sm:$0xff]
  %v829 = vld [vmem:[%s826 + $0x10] sm:$0xff]
  %v830 = vld [vmem:[%s826 + $0x18] sm:$0xff]
  %v831 = vld [vmem:[%s826 + $0x20] sm:$0xff]
  %v832 = vld [vmem:[%s826 + $0x28] sm:$0xff]
  %v833 = vld [vmem:[%s826 + $0x30] sm:$0xff]
  %v834 = vld [vmem:[%s826 + $0x38] sm:$0xff]
  %v837 = vunpack.c.l.b16 %v821
  %v838 = vunpack.c.l.b16 %v822
  %v839 = vpack.c.b16 %v838, %v837
  %841 = vmatpush.bf16.msra.mxu0 %v176
  %842 = vmatpush.bf16.msra.mxu0 %v172
  %843 = vmatpush.bf16.msra.mxu0 %v168
  %844 = vmatpush.bf16.msra.mxu0 %v164
  %845 = vmatpush.bf16.msra.mxu0 %v160
  %846 = vmatpush.bf16.msra.mxu0 %v156
  %847 = vmatpush.bf16.msra.mxu0 %v152
  %848 = vmatpush.bf16.msra.mxu0 %v148
  %849 = vmatmul.bf16.gmra.mxu0 %v839
  %v850 = vpop.f32.mrf.mxu0
  %v851 = vadd.f32 0.0, %v850
  %v852 = vpop.f32.mrf.mxu0
  %v853 = vadd.f32 0.0, %v852
  %854 = vdwg.mxu0
  %855 = vmatpush.bf16.msra.mxu0 %v177
  %856 = vmatpush.bf16.msra.mxu0 %v173
  %857 = vmatpush.bf16.msra.mxu0 %v169
  %858 = vmatpush.bf16.msra.mxu0 %v165
  %859 = vmatpush.bf16.msra.mxu0 %v161
  %860 = vmatpush.bf16.msra.mxu0 %v157
  %861 = vmatpush.bf16.msra.mxu0 %v153
  %862 = vmatpush.bf16.msra.mxu0 %v149
  %863 = vmatmul.bf16.gmra.mxu0 %v839
  %v864 = vpop.f32.mrf.mxu0
  %v865 = vadd.f32 0.0, %v864
  %v866 = vpop.f32.mrf.mxu0
  %v867 = vadd.f32 0.0, %v866
  %868 = vdwg.mxu0
  %869 = vmatpush.bf16.msra.mxu0 %v178
  %870 = vmatpush.bf16.msra.mxu0 %v174
  %871 = vmatpush.bf16.msra.mxu0 %v170
  %872 = vmatpush.bf16.msra.mxu0 %v166
  %873 = vmatpush.bf16.msra.mxu0 %v162
  %874 = vmatpush.bf16.msra.mxu0 %v158
  %875 = vmatpush.bf16.msra.mxu0 %v154
  %876 = vmatpush.bf16.msra.mxu0 %v150
  %877 = vmatmul.bf16.gmra.mxu0 %v839
  %v878 = vpop.f32.mrf.mxu0
  %v879 = vadd.f32 0.0, %v878
  %v880 = vpop.f32.mrf.mxu0
  %v881 = vadd.f32 0.0, %v880
  %882 = vdwg.mxu0
  %883 = vmatpush.bf16.msra.mxu0 %v179
  %884 = vmatpush.bf16.msra.mxu0 %v175
  %885 = vmatpush.bf16.msra.mxu0 %v171
  %886 = vmatpush.bf16.msra.mxu0 %v167
  %887 = vmatpush.bf16.msra.mxu0 %v163
  %888 = vmatpush.bf16.msra.mxu0 %v159
  %889 = vmatpush.bf16.msra.mxu0 %v155
  %890 = vmatpush.bf16.msra.mxu0 %v151
  %891 = vmatmul.bf16.gmra.mxu0 %v839
  %v892 = vpop.f32.mrf.mxu0
  %v893 = vadd.f32 0.0, %v892
  %v894 = vpop.f32.mrf.mxu0
  %v895 = vadd.f32 0.0, %v894
  %896 = vdwg.mxu0
  %v897 = vadd.f32 %v827, %v851
  %v898 = vadd.f32 %v828, %v865
  %v899 = vadd.f32 %v829, %v879
  %v900 = vadd.f32 %v830, %v893
  %v901 = vadd.f32 %v831, %v853
  %v902 = vadd.f32 %v832, %v867
  %v903 = vadd.f32 %v833, %v881
  %v904 = vadd.f32 %v834, %v895
  %v905 = vxor.u32 %v897, 2147483648
  %v906 = vxor.u32 %v901, 2147483648
  %v907 = vmul.f32 %v905, 1.442695
  %v908 = vpow.pop %v907
  %v909 = vmul.f32 %v906, 1.442695
  %v910 = vpow.pop %v909
  %v911 = vadd.f32 %v908, 1.0
  %v912 = vadd.f32 %v910, 1.0
  %v913 = vrcp.pop %v911
  %v914 = vmul.f32 %v911, %v913
  %v915 = vsub.f32 1.0, %v914
  %v916 = vmul.f32 %v913, %v915
  %v917 = vadd.f32 %v913, %v916
  %vm918 = vweird.f32 %v911
  %vm919 = vweird.f32 %v913
  %vm920 = vmor %vm918, %vm919
  %v921 = vsel %vm920, %v913, %v917
  %v922 = vand.u32 2147483647, %v911
  %vm923 = vcmp.eq.f32.partialorder %v922, 8.507059e+37
  %v924 = vand.u32 %v911, 2147483648
  %v925 = vor.u32 1.1754944e-38, %v924
  %v926 = vsel %vm923, %v925, %v921
  %v927 = vmul.f32 1.0, %v926
  %v928 = vrcp.pop %v912
  %v929 = vmul.f32 %v912, %v928
  %v930 = vsub.f32 1.0, %v929
  %v931 = vmul.f32 %v928, %v930
  %v932 = vadd.f32 %v928, %v931
  %vm933 = vweird.f32 %v912
  %vm934 = vweird.f32 %v928
  %vm935 = vmor %vm933, %vm934
  %v936 = vsel %vm935, %v928, %v932
  %v937 = vand.u32 2147483647, %v912
  %vm938 = vcmp.eq.f32.partialorder %v937, 8.507059e+37
  %v939 = vand.u32 %v912, 2147483648
  %v940 = vor.u32 1.1754944e-38, %v939
  %v941 = vsel %vm938, %v940, %v936
  %v942 = vmul.f32 1.0, %v941
  %v943 = vxor.u32 %v898, 2147483648
  %v944 = vxor.u32 %v902, 2147483648
  %v945 = vmul.f32 %v943, 1.442695
  %v946 = vpow.pop %v945
  %v947 = vmul.f32 %v944, 1.442695
  %v948 = vpow.pop %v947
  %v949 = vadd.f32 %v946, 1.0
  %v950 = vadd.f32 %v948, 1.0
  %v951 = vrcp.pop %v949
  %v952 = vmul.f32 %v949, %v951
  %v953 = vsub.f32 1.0, %v952
  %v954 = vmul.f32 %v951, %v953
  %v955 = vadd.f32 %v951, %v954
  %vm956 = vweird.f32 %v949
  %vm957 = vweird.f32 %v951
  %vm958 = vmor %vm956, %vm957
  %v959 = vsel %vm958, %v951, %v955
  %v960 = vand.u32 2147483647, %v949
  %vm961 = vcmp.eq.f32.partialorder %v960, 8.507059e+37
  %v962 = vand.u32 %v949, 2147483648
  %v963 = vor.u32 1.1754944e-38, %v962
  %v964 = vsel %vm961, %v963, %v959
  %v965 = vmul.f32 1.0, %v964
  %v966 = vrcp.pop %v950
  %v967 = vmul.f32 %v950, %v966
  %v968 = vsub.f32 1.0, %v967
  %v969 = vmul.f32 %v966, %v968
  %v970 = vadd.f32 %v966, %v969
  %vm971 = vweird.f32 %v950
  %vm972 = vweird.f32 %v966
  %vm973 = vmor %vm971, %vm972
  %v974 = vsel %vm973, %v966, %v970
  %v975 = vand.u32 2147483647, %v950
  %vm976 = vcmp.eq.f32.partialorder %v975, 8.507059e+37
  %v977 = vand.u32 %v950, 2147483648
  %v978 = vor.u32 1.1754944e-38, %v977
  %v979 = vsel %vm976, %v978, %v974
  %v980 = vmul.f32 1.0, %v979
  %v981 = vtanh.pop %v899
  %v982 = vtanh.pop %v903
  %v983 = vxor.u32 %v900, 2147483648
  %v984 = vxor.u32 %v904, 2147483648
  %v985 = vmul.f32 %v983, 1.442695
  %v986 = vpow.pop %v985
  %v987 = vmul.f32 %v984, 1.442695
  %v988 = vpow.pop %v987
  %v989 = vadd.f32 %v986, 1.0
  %v990 = vadd.f32 %v988, 1.0
  %v991 = vrcp.pop %v989
  %v992 = vmul.f32 %v989, %v991
  %v993 = vsub.f32 1.0, %v992
  %v994 = vmul.f32 %v991, %v993
  %v995 = vadd.f32 %v991, %v994
  %vm996 = vweird.f32 %v989
  %vm997 = vweird.f32 %v991
  %vm998 = vmor %vm996, %vm997
  %v999 = vsel %vm998, %v991, %v995
  %v1000 = vand.u32 2147483647, %v989
  %vm1001 = vcmp.eq.f32.partialorder %v1000, 8.507059e+37
  %v1002 = vand.u32 %v989, 2147483648
  %v1003 = vor.u32 1.1754944e-38, %v1002
  %v1004 = vsel %vm1001, %v1003, %v999
  %v1005 = vmul.f32 1.0, %v1004
  %v1006 = vrcp.pop %v990
  %v1007 = vmul.f32 %v990, %v1006
  %v1008 = vsub.f32 1.0, %v1007
  %v1009 = vmul.f32 %v1006, %v1008
  %v1010 = vadd.f32 %v1006, %v1009
  %vm1011 = vweird.f32 %v990
  %vm1012 = vweird.f32 %v1006
  %vm1013 = vmor %vm1011, %vm1012
  %v1014 = vsel %vm1013, %v1006, %v1010
  %v1015 = vand.u32 2147483647, %v990
  %vm1016 = vcmp.eq.f32.partialorder %v1015, 8.507059e+37
  %v1017 = vand.u32 %v990, 2147483648
  %v1018 = vor.u32 1.1754944e-38, %v1017
  %v1019 = vsel %vm1016, %v1018, %v1014
  %v1020 = vmul.f32 1.0, %v1019
  %v1021 = vmul.f32 %v965, %v815
  %v1022 = vmul.f32 %v980, %v816
  %v1023 = vmul.f32 %v927, %v981
  %v1024 = vmul.f32 %v942, %v982
  %v1025 = vadd.f32 %v1021, %v1023
  %v1026 = vadd.f32 %v1022, %v1024
  %v1027 = vtanh.pop %v1025
  %v1028 = vtanh.pop %v1026
  %v1029 = vmul.f32 %v1005, %v1027
  %v1030 = vmul.f32 %v1020, %v1028
  %v1031 = vpack.c.bf16 %v1029, %v1029
  %v1032 = vpack.c.bf16 %v1030, %v1030
  %s1033 = scalar_lea.vmem %s2, 24
  %1034 = vst [vmem:[%s1033] sm:$0xf] %v1031
  %1035 = vst [vmem:[%s1033 + $0x4] sm:$0xf] %v1032
  %s1036 = scalar_lea.vmem %s0, 256
  %v1037 = vld [vmem:[%s1036] sm:$0xff]
  %v1038 = vld [vmem:[%s1036 + $0x8] sm:$0xff]
  %v1039 = vld [vmem:[%s1036 + $0x10] sm:$0xff]
  %v1040 = vld [vmem:[%s1036 + $0x18] sm:$0xff]
  %v1041 = vld [vmem:[%s1036 + $0x20] sm:$0xff]
  %v1042 = vld [vmem:[%s1036 + $0x28] sm:$0xff]
  %v1043 = vld [vmem:[%s1036 + $0x30] sm:$0xff]
  %v1044 = vld [vmem:[%s1036 + $0x38] sm:$0xff]
  %v1047 = vunpack.c.l.b16 %v1031
  %v1048 = vunpack.c.l.b16 %v1032
  %v1049 = vpack.c.b16 %v1048, %v1047
  %1051 = vmatpush.bf16.msra.mxu0 %v176
  %1052 = vmatpush.bf16.msra.mxu0 %v172
  %1053 = vmatpush.bf16.msra.mxu0 %v168
  %1054 = vmatpush.bf16.msra.mxu0 %v164
  %1055 = vmatpush.bf16.msra.mxu0 %v160
  %1056 = vmatpush.bf16.msra.mxu0 %v156
  %1057 = vmatpush.bf16.msra.mxu0 %v152
  %1058 = vmatpush.bf16.msra.mxu0 %v148
  %1059 = vmatmul.bf16.gmra.mxu0 %v1049
  %v1060 = vpop.f32.mrf.mxu0
  %v1061 = vadd.f32 0.0, %v1060
  %v1062 = vpop.f32.mrf.mxu0
  %v1063 = vadd.f32 0.0, %v1062
  %1064 = vdwg.mxu0
  %1065 = vmatpush.bf16.msra.mxu0 %v177
  %1066 = vmatpush.bf16.msra.mxu0 %v173
  %1067 = vmatpush.bf16.msra.mxu0 %v169
  %1068 = vmatpush.bf16.msra.mxu0 %v165
  %1069 = vmatpush.bf16.msra.mxu0 %v161
  %1070 = vmatpush.bf16.msra.mxu0 %v157
  %1071 = vmatpush.bf16.msra.mxu0 %v153
  %1072 = vmatpush.bf16.msra.mxu0 %v149
  %1073 = vmatmul.bf16.gmra.mxu0 %v1049
  %v1074 = vpop.f32.mrf.mxu0
  %v1075 = vadd.f32 0.0, %v1074
  %v1076 = vpop.f32.mrf.mxu0
  %v1077 = vadd.f32 0.0, %v1076
  %1078 = vdwg.mxu0
  %1079 = vmatpush.bf16.msra.mxu0 %v178
  %1080 = vmatpush.bf16.msra.mxu0 %v174
  %1081 = vmatpush.bf16.msra.mxu0 %v170
  %1082 = vmatpush.bf16.msra.mxu0 %v166
  %1083 = vmatpush.bf16.msra.mxu0 %v162
  %1084 = vmatpush.bf16.msra.mxu0 %v158
  %1085 = vmatpush.bf16.msra.mxu0 %v154
  %1086 = vmatpush.bf16.msra.mxu0 %v150
  %1087 = vmatmul.bf16.gmra.mxu0 %v1049
  %v1088 = vpop.f32.mrf.mxu0
  %v1089 = vadd.f32 0.0, %v1088
  %v1090 = vpop.f32.mrf.mxu0
  %v1091 = vadd.f32 0.0, %v1090
  %1092 = vdwg.mxu0
  %1093 = vmatpush.bf16.msra.mxu0 %v179
  %1094 = vmatpush.bf16.msra.mxu0 %v175
  %1095 = vmatpush.bf16.msra.mxu0 %v171
  %1096 = vmatpush.bf16.msra.mxu0 %v167
  %1097 = vmatpush.bf16.msra.mxu0 %v163
  %1098 = vmatpush.bf16.msra.mxu0 %v159
  %1099 = vmatpush.bf16.msra.mxu0 %v155
  %1100 = vmatpush.bf16.msra.mxu0 %v151
  %1101 = vmatmul.bf16.gmra.mxu0 %v1049
  %v1102 = vpop.f32.mrf.mxu0
  %v1103 = vadd.f32 0.0, %v1102
  %v1104 = vpop.f32.mrf.mxu0
  %v1105 = vadd.f32 0.0, %v1104
  %1106 = vdwg.mxu0
  %v1107 = vadd.f32 %v1037, %v1061
  %v1108 = vadd.f32 %v1038, %v1075
  %v1109 = vadd.f32 %v1039, %v1089
  %v1110 = vadd.f32 %v1040, %v1103
  %v1111 = vadd.f32 %v1041, %v1063
  %v1112 = vadd.f32 %v1042, %v1077
  %v1113 = vadd.f32 %v1043, %v1091
  %v1114 = vadd.f32 %v1044, %v1105
  %v1115 = vxor.u32 %v1107, 2147483648
  %v1116 = vxor.u32 %v1111, 2147483648
  %v1117 = vmul.f32 %v1115, 1.442695
  %v1118 = vpow.pop %v1117
  %v1119 = vmul.f32 %v1116, 1.442695
  %v1120 = vpow.pop %v1119
  %v1121 = vadd.f32 %v1118, 1.0
  %v1122 = vadd.f32 %v1120, 1.0
  %v1123 = vrcp.pop %v1121
  %v1124 = vmul.f32 %v1121, %v1123
  %v1125 = vsub.f32 1.0, %v1124
  %v1126 = vmul.f32 %v1123, %v1125
  %v1127 = vadd.f32 %v1123, %v1126
  %vm1128 = vweird.f32 %v1121
  %vm1129 = vweird.f32 %v1123
  %vm1130 = vmor %vm1128, %vm1129
  %v1131 = vsel %vm1130, %v1123, %v1127
  %v1132 = vand.u32 2147483647, %v1121
  %vm1133 = vcmp.eq.f32.partialorder %v1132, 8.507059e+37
  %v1134 = vand.u32 %v1121, 2147483648
  %v1135 = vor.u32 1.1754944e-38, %v1134
  %v1136 = vsel %vm1133, %v1135, %v1131
  %v1137 = vmul.f32 1.0, %v1136
  %v1138 = vrcp.pop %v1122
  %v1139 = vmul.f32 %v1122, %v1138
  %v1140 = vsub.f32 1.0, %v1139
  %v1141 = vmul.f32 %v1138, %v1140
  %v1142 = vadd.f32 %v1138, %v1141
  %vm1143 = vweird.f32 %v1122
  %vm1144 = vweird.f32 %v1138
  %vm1145 = vmor %vm1143, %vm1144
  %v1146 = vsel %vm1145, %v1138, %v1142
  %v1147 = vand.u32 2147483647, %v1122
  %vm1148 = vcmp.eq.f32.partialorder %v1147, 8.507059e+37
  %v1149 = vand.u32 %v1122, 2147483648
  %v1150 = vor.u32 1.1754944e-38, %v1149
  %v1151 = vsel %vm1148, %v1150, %v1146
  %v1152 = vmul.f32 1.0, %v1151
  %v1153 = vxor.u32 %v1108, 2147483648
  %v1154 = vxor.u32 %v1112, 2147483648
  %v1155 = vmul.f32 %v1153, 1.442695
  %v1156 = vpow.pop %v1155
  %v1157 = vmul.f32 %v1154, 1.442695
  %v1158 = vpow.pop %v1157
  %v1159 = vadd.f32 %v1156, 1.0
  %v1160 = vadd.f32 %v1158, 1.0
  %v1161 = vrcp.pop %v1159
  %v1162 = vmul.f32 %v1159, %v1161
  %v1163 = vsub.f32 1.0, %v1162
  %v1164 = vmul.f32 %v1161, %v1163
  %v1165 = vadd.f32 %v1161, %v1164
  %vm1166 = vweird.f32 %v1159
  %vm1167 = vweird.f32 %v1161
  %vm1168 = vmor %vm1166, %vm1167
  %v1169 = vsel %vm1168, %v1161, %v1165
  %v1170 = vand.u32 2147483647, %v1159
  %vm1171 = vcmp.eq.f32.partialorder %v1170, 8.507059e+37
  %v1172 = vand.u32 %v1159, 2147483648
  %v1173 = vor.u32 1.1754944e-38, %v1172
  %v1174 = vsel %vm1171, %v1173, %v1169
  %v1175 = vmul.f32 1.0, %v1174
  %v1176 = vrcp.pop %v1160
  %v1177 = vmul.f32 %v1160, %v1176
  %v1178 = vsub.f32 1.0, %v1177
  %v1179 = vmul.f32 %v1176, %v1178
  %v1180 = vadd.f32 %v1176, %v1179
  %vm1181 = vweird.f32 %v1160
  %vm1182 = vweird.f32 %v1176
  %vm1183 = vmor %vm1181, %vm1182
  %v1184 = vsel %vm1183, %v1176, %v1180
  %v1185 = vand.u32 2147483647, %v1160
  %vm1186 = vcmp.eq.f32.partialorder %v1185, 8.507059e+37
  %v1187 = vand.u32 %v1160, 2147483648
  %v1188 = vor.u32 1.1754944e-38, %v1187
  %v1189 = vsel %vm1186, %v1188, %v1184
  %v1190 = vmul.f32 1.0, %v1189
  %v1191 = vtanh.pop %v1109
  %v1192 = vtanh.pop %v1113
  %v1193 = vxor.u32 %v1110, 2147483648
  %v1194 = vxor.u32 %v1114, 2147483648
  %v1195 = vmul.f32 %v1193, 1.442695
  %v1196 = vpow.pop %v1195
  %v1197 = vmul.f32 %v1194, 1.442695
  %v1198 = vpow.pop %v1197
  %v1199 = vadd.f32 %v1196, 1.0
  %v1200 = vadd.f32 %v1198, 1.0
  %v1201 = vrcp.pop %v1199
  %v1202 = vmul.f32 %v1199, %v1201
  %v1203 = vsub.f32 1.0, %v1202
  %v1204 = vmul.f32 %v1201, %v1203
  %v1205 = vadd.f32 %v1201, %v1204
  %vm1206 = vweird.f32 %v1199
  %vm1207 = vweird.f32 %v1201
  %vm1208 = vmor %vm1206, %vm1207
  %v1209 = vsel %vm1208, %v1201, %v1205
  %v1210 = vand.u32 2147483647, %v1199
  %vm1211 = vcmp.eq.f32.partialorder %v1210, 8.507059e+37
  %v1212 = vand.u32 %v1199, 2147483648
  %v1213 = vor.u32 1.1754944e-38, %v1212
  %v1214 = vsel %vm1211, %v1213, %v1209
  %v1215 = vmul.f32 1.0, %v1214
  %v1216 = vrcp.pop %v1200
  %v1217 = vmul.f32 %v1200, %v1216
  %v1218 = vsub.f32 1.0, %v1217
  %v1219 = vmul.f32 %v1216, %v1218
  %v1220 = vadd.f32 %v1216, %v1219
  %vm1221 = vweird.f32 %v1200
  %vm1222 = vweird.f32 %v1216
  %vm1223 = vmor %vm1221, %vm1222
  %v1224 = vsel %vm1223, %v1216, %v1220
  %v1225 = vand.u32 2147483647, %v1200
  %vm1226 = vcmp.eq.f32.partialorder %v1225, 8.507059e+37
  %v1227 = vand.u32 %v1200, 2147483648
  %v1228 = vor.u32 1.1754944e-38, %v1227
  %v1229 = vsel %vm1226, %v1228, %v1224
  %v1230 = vmul.f32 1.0, %v1229
  %v1231 = vmul.f32 %v1175, %v1025
  %v1232 = vmul.f32 %v1190, %v1026
  %v1233 = vmul.f32 %v1137, %v1191
  %v1234 = vmul.f32 %v1152, %v1192
  %v1235 = vadd.f32 %v1231, %v1233
  %v1236 = vadd.f32 %v1232, %v1234
  %v1237 = vtanh.pop %v1235
  %v1238 = vtanh.pop %v1236
  %v1239 = vmul.f32 %v1215, %v1237
  %v1240 = vmul.f32 %v1230, %v1238
  %v1241 = vpack.c.bf16 %v1239, %v1239
  %v1242 = vpack.c.bf16 %v1240, %v1240
  %s1243 = scalar_lea.vmem %s2, 32
  %1244 = vst [vmem:[%s1243] sm:$0xf] %v1241
  %1245 = vst [vmem:[%s1243 + $0x4] sm:$0xf] %v1242
  %s1246 = scalar_lea.vmem %s0, 320
  %v1247 = vld [vmem:[%s1246] sm:$0xff]
  %v1248 = vld [vmem:[%s1246 + $0x8] sm:$0xff]
  %v1249 = vld [vmem:[%s1246 + $0x10] sm:$0xff]
  %v1250 = vld [vmem:[%s1246 + $0x18] sm:$0xff]
  %v1251 = vld [vmem:[%s1246 + $0x20] sm:$0xff]
  %v1252 = vld [vmem:[%s1246 + $0x28] sm:$0xff]
  %v1253 = vld [vmem:[%s1246 + $0x30] sm:$0xff]
  %v1254 = vld [vmem:[%s1246 + $0x38] sm:$0xff]
  %v1257 = vunpack.c.l.b16 %v1241
  %v1258 = vunpack.c.l.b16 %v1242
  %v1259 = vpack.c.b16 %v1258, %v1257
  %1261 = vmatpush.bf16.msra.mxu0 %v176
  %1262 = vmatpush.bf16.msra.mxu0 %v172
  %1263 = vmatpush.bf16.msra.mxu0 %v168
  %1264 = vmatpush.bf16.msra.mxu0 %v164
  %1265 = vmatpush.bf16.msra.mxu0 %v160
  %1266 = vmatpush.bf16.msra.mxu0 %v156
  %1267 = vmatpush.bf16.msra.mxu0 %v152
  %1268 = vmatpush.bf16.msra.mxu0 %v148
  %1269 = vmatmul.bf16.gmra.mxu0 %v1259
  %v1270 = vpop.f32.mrf.mxu0
  %v1271 = vadd.f32 0.0, %v1270
  %v1272 = vpop.f32.mrf.mxu0
  %v1273 = vadd.f32 0.0, %v1272
  %1274 = vdwg.mxu0
  %1275 = vmatpush.bf16.msra.mxu0 %v177
  %1276 = vmatpush.bf16.msra.mxu0 %v173
  %1277 = vmatpush.bf16.msra.mxu0 %v169
  %1278 = vmatpush.bf16.msra.mxu0 %v165
  %1279 = vmatpush.bf16.msra.mxu0 %v161
  %1280 = vmatpush.bf16.msra.mxu0 %v157
  %1281 = vmatpush.bf16.msra.mxu0 %v153
  %1282 = vmatpush.bf16.msra.mxu0 %v149
  %1283 = vmatmul.bf16.gmra.mxu0 %v1259
  %v1284 = vpop.f32.mrf.mxu0
  %v1285 = vadd.f32 0.0, %v1284
  %v1286 = vpop.f32.mrf.mxu0
  %v1287 = vadd.f32 0.0, %v1286
  %1288 = vdwg.mxu0
  %1289 = vmatpush.bf16.msra.mxu0 %v178
  %1290 = vmatpush.bf16.msra.mxu0 %v174
  %1291 = vmatpush.bf16.msra.mxu0 %v170
  %1292 = vmatpush.bf16.msra.mxu0 %v166
  %1293 = vmatpush.bf16.msra.mxu0 %v162
  %1294 = vmatpush.bf16.msra.mxu0 %v158
  %1295 = vmatpush.bf16.msra.mxu0 %v154
  %1296 = vmatpush.bf16.msra.mxu0 %v150
  %1297 = vmatmul.bf16.gmra.mxu0 %v1259
  %v1298 = vpop.f32.mrf.mxu0
  %v1299 = vadd.f32 0.0, %v1298
  %v1300 = vpop.f32.mrf.mxu0
  %v1301 = vadd.f32 0.0, %v1300
  %1302 = vdwg.mxu0
  %1303 = vmatpush.bf16.msra.mxu0 %v179
  %1304 = vmatpush.bf16.msra.mxu0 %v175
  %1305 = vmatpush.bf16.msra.mxu0 %v171
  %1306 = vmatpush.bf16.msra.mxu0 %v167
  %1307 = vmatpush.bf16.msra.mxu0 %v163
  %1308 = vmatpush.bf16.msra.mxu0 %v159
  %1309 = vmatpush.bf16.msra.mxu0 %v155
  %1310 = vmatpush.bf16.msra.mxu0 %v151
  %1311 = vmatmul.bf16.gmra.mxu0 %v1259
  %v1312 = vpop.f32.mrf.mxu0
  %v1313 = vadd.f32 0.0, %v1312
  %v1314 = vpop.f32.mrf.mxu0
  %v1315 = vadd.f32 0.0, %v1314
  %1316 = vdwg.mxu0
  %v1317 = vadd.f32 %v1247, %v1271
  %v1318 = vadd.f32 %v1248, %v1285
  %v1319 = vadd.f32 %v1249, %v1299
  %v1320 = vadd.f32 %v1250, %v1313
  %v1321 = vadd.f32 %v1251, %v1273
  %v1322 = vadd.f32 %v1252, %v1287
  %v1323 = vadd.f32 %v1253, %v1301
  %v1324 = vadd.f32 %v1254, %v1315
  %v1325 = vxor.u32 %v1317, 2147483648
  %v1326 = vxor.u32 %v1321, 2147483648
  %v1327 = vmul.f32 %v1325, 1.442695
  %v1328 = vpow.pop %v1327
  %v1329 = vmul.f32 %v1326, 1.442695
  %v1330 = vpow.pop %v1329
  %v1331 = vadd.f32 %v1328, 1.0
  %v1332 = vadd.f32 %v1330, 1.0
  %v1333 = vrcp.pop %v1331
  %v1334 = vmul.f32 %v1331, %v1333
  %v1335 = vsub.f32 1.0, %v1334
  %v1336 = vmul.f32 %v1333, %v1335
  %v1337 = vadd.f32 %v1333, %v1336
  %vm1338 = vweird.f32 %v1331
  %vm1339 = vweird.f32 %v1333
  %vm1340 = vmor %vm1338, %vm1339
  %v1341 = vsel %vm1340, %v1333, %v1337
  %v1342 = vand.u32 2147483647, %v1331
  %vm1343 = vcmp.eq.f32.partialorder %v1342, 8.507059e+37
  %v1344 = vand.u32 %v1331, 2147483648
  %v1345 = vor.u32 1.1754944e-38, %v1344
  %v1346 = vsel %vm1343, %v1345, %v1341
  %v1347 = vmul.f32 1.0, %v1346
  %v1348 = vrcp.pop %v1332
  %v1349 = vmul.f32 %v1332, %v1348
  %v1350 = vsub.f32 1.0, %v1349
  %v1351 = vmul.f32 %v1348, %v1350
  %v1352 = vadd.f32 %v1348, %v1351
  %vm1353 = vweird.f32 %v1332
  %vm1354 = vweird.f32 %v1348
  %vm1355 = vmor %vm1353, %vm1354
  %v1356 = vsel %vm1355, %v1348, %v1352
  %v1357 = vand.u32 2147483647, %v1332
  %vm1358 = vcmp.eq.f32.partialorder %v1357, 8.507059e+37
  %v1359 = vand.u32 %v1332, 2147483648
  %v1360 = vor.u32 1.1754944e-38, %v1359
  %v1361 = vsel %vm1358, %v1360, %v1356
  %v1362 = vmul.f32 1.0, %v1361
  %v1363 = vxor.u32 %v1318, 2147483648
  %v1364 = vxor.u32 %v1322, 2147483648
  %v1365 = vmul.f32 %v1363, 1.442695
  %v1366 = vpow.pop %v1365
  %v1367 = vmul.f32 %v1364, 1.442695
  %v1368 = vpow.pop %v1367
  %v1369 = vadd.f32 %v1366, 1.0
  %v1370 = vadd.f32 %v1368, 1.0
  %v1371 = vrcp.pop %v1369
  %v1372 = vmul.f32 %v1369, %v1371
  %v1373 = vsub.f32 1.0, %v1372
  %v1374 = vmul.f32 %v1371, %v1373
  %v1375 = vadd.f32 %v1371, %v1374
  %vm1376 = vweird.f32 %v1369
  %vm1377 = vweird.f32 %v1371
  %vm1378 = vmor %vm1376, %vm1377
  %v1379 = vsel %vm1378, %v1371, %v1375
  %v1380 = vand.u32 2147483647, %v1369
  %vm1381 = vcmp.eq.f32.partialorder %v1380, 8.507059e+37
  %v1382 = vand.u32 %v1369, 2147483648
  %v1383 = vor.u32 1.1754944e-38, %v1382
  %v1384 = vsel %vm1381, %v1383, %v1379
  %v1385 = vmul.f32 1.0, %v1384
  %v1386 = vrcp.pop %v1370
  %v1387 = vmul.f32 %v1370, %v1386
  %v1388 = vsub.f32 1.0, %v1387
  %v1389 = vmul.f32 %v1386, %v1388
  %v1390 = vadd.f32 %v1386, %v1389
  %vm1391 = vweird.f32 %v1370
  %vm1392 = vweird.f32 %v1386
  %vm1393 = vmor %vm1391, %vm1392
  %v1394 = vsel %vm1393, %v1386, %v1390
  %v1395 = vand.u32 2147483647, %v1370
  %vm1396 = vcmp.eq.f32.partialorder %v1395, 8.507059e+37
  %v1397 = vand.u32 %v1370, 2147483648
  %v1398 = vor.u32 1.1754944e-38, %v1397
  %v1399 = vsel %vm1396, %v1398, %v1394
  %v1400 = vmul.f32 1.0, %v1399
  %v1401 = vtanh.pop %v1319
  %v1402 = vtanh.pop %v1323
  %v1403 = vxor.u32 %v1320, 2147483648
  %v1404 = vxor.u32 %v1324, 2147483648
  %v1405 = vmul.f32 %v1403, 1.442695
  %v1406 = vpow.pop %v1405
  %v1407 = vmul.f32 %v1404, 1.442695
  %v1408 = vpow.pop %v1407
  %v1409 = vadd.f32 %v1406, 1.0
  %v1410 = vadd.f32 %v1408, 1.0
  %v1411 = vrcp.pop %v1409
  %v1412 = vmul.f32 %v1409, %v1411
  %v1413 = vsub.f32 1.0, %v1412
  %v1414 = vmul.f32 %v1411, %v1413
  %v1415 = vadd.f32 %v1411, %v1414
  %vm1416 = vweird.f32 %v1409
  %vm1417 = vweird.f32 %v1411
  %vm1418 = vmor %vm1416, %vm1417
  %v1419 = vsel %vm1418, %v1411, %v1415
  %v1420 = vand.u32 2147483647, %v1409
  %vm1421 = vcmp.eq.f32.partialorder %v1420, 8.507059e+37
  %v1422 = vand.u32 %v1409, 2147483648
  %v1423 = vor.u32 1.1754944e-38, %v1422
  %v1424 = vsel %vm1421, %v1423, %v1419
  %v1425 = vmul.f32 1.0, %v1424
  %v1426 = vrcp.pop %v1410
  %v1427 = vmul.f32 %v1410, %v1426
  %v1428 = vsub.f32 1.0, %v1427
  %v1429 = vmul.f32 %v1426, %v1428
  %v1430 = vadd.f32 %v1426, %v1429
  %vm1431 = vweird.f32 %v1410
  %vm1432 = vweird.f32 %v1426
  %vm1433 = vmor %vm1431, %vm1432
  %v1434 = vsel %vm1433, %v1426, %v1430
  %v1435 = vand.u32 2147483647, %v1410
  %vm1436 = vcmp.eq.f32.partialorder %v1435, 8.507059e+37
  %v1437 = vand.u32 %v1410, 2147483648
  %v1438 = vor.u32 1.1754944e-38, %v1437
  %v1439 = vsel %vm1436, %v1438, %v1434
  %v1440 = vmul.f32 1.0, %v1439
  %v1441 = vmul.f32 %v1385, %v1235
  %v1442 = vmul.f32 %v1400, %v1236
  %v1443 = vmul.f32 %v1347, %v1401
  %v1444 = vmul.f32 %v1362, %v1402
  %v1445 = vadd.f32 %v1441, %v1443
  %v1446 = vadd.f32 %v1442, %v1444
  %v1447 = vtanh.pop %v1445
  %v1448 = vtanh.pop %v1446
  %v1449 = vmul.f32 %v1425, %v1447
  %v1450 = vmul.f32 %v1440, %v1448
  %v1451 = vpack.c.bf16 %v1449, %v1449
  %v1452 = vpack.c.bf16 %v1450, %v1450
  %s1453 = scalar_lea.vmem %s2, 40
  %1454 = vst [vmem:[%s1453] sm:$0xf] %v1451
  %1455 = vst [vmem:[%s1453 + $0x4] sm:$0xf] %v1452
  %s1456 = scalar_lea.vmem %s0, 384
  %v1457 = vld [vmem:[%s1456] sm:$0xff]
  %v1458 = vld [vmem:[%s1456 + $0x8] sm:$0xff]
  %v1459 = vld [vmem:[%s1456 + $0x10] sm:$0xff]
  %v1460 = vld [vmem:[%s1456 + $0x18] sm:$0xff]
  %v1461 = vld [vmem:[%s1456 + $0x20] sm:$0xff]
  %v1462 = vld [vmem:[%s1456 + $0x28] sm:$0xff]
  %v1463 = vld [vmem:[%s1456 + $0x30] sm:$0xff]
  %v1464 = vld [vmem:[%s1456 + $0x38] sm:$0xff]
  %v1467 = vunpack.c.l.b16 %v1451
  %v1468 = vunpack.c.l.b16 %v1452
  %v1469 = vpack.c.b16 %v1468, %v1467
  %1471 = vmatpush.bf16.msra.mxu0 %v176
  %1472 = vmatpush.bf16.msra.mxu0 %v172
  %1473 = vmatpush.bf16.msra.mxu0 %v168
  %1474 = vmatpush.bf16.msra.mxu0 %v164
  %1475 = vmatpush.bf16.msra.mxu0 %v160
  %1476 = vmatpush.bf16.msra.mxu0 %v156
  %1477 = vmatpush.bf16.msra.mxu0 %v152
  %1478 = vmatpush.bf16.msra.mxu0 %v148
  %1479 = vmatmul.bf16.gmra.mxu0 %v1469
  %v1480 = vpop.f32.mrf.mxu0
  %v1481 = vadd.f32 0.0, %v1480
  %v1482 = vpop.f32.mrf.mxu0
  %v1483 = vadd.f32 0.0, %v1482
  %1484 = vdwg.mxu0
  %1485 = vmatpush.bf16.msra.mxu0 %v177
  %1486 = vmatpush.bf16.msra.mxu0 %v173
  %1487 = vmatpush.bf16.msra.mxu0 %v169
  %1488 = vmatpush.bf16.msra.mxu0 %v165
  %1489 = vmatpush.bf16.msra.mxu0 %v161
  %1490 = vmatpush.bf16.msra.mxu0 %v157
  %1491 = vmatpush.bf16.msra.mxu0 %v153
  %1492 = vmatpush.bf16.msra.mxu0 %v149
  %1493 = vmatmul.bf16.gmra.mxu0 %v1469
  %v1494 = vpop.f32.mrf.mxu0
  %v1495 = vadd.f32 0.0, %v1494
  %v1496 = vpop.f32.mrf.mxu0
  %v1497 = vadd.f32 0.0, %v1496
  %1498 = vdwg.mxu0
  %1499 = vmatpush.bf16.msra.mxu0 %v178
  %1500 = vmatpush.bf16.msra.mxu0 %v174
  %1501 = vmatpush.bf16.msra.mxu0 %v170
  %1502 = vmatpush.bf16.msra.mxu0 %v166
  %1503 = vmatpush.bf16.msra.mxu0 %v162
  %1504 = vmatpush.bf16.msra.mxu0 %v158
  %1505 = vmatpush.bf16.msra.mxu0 %v154
  %1506 = vmatpush.bf16.msra.mxu0 %v150
  %1507 = vmatmul.bf16.gmra.mxu0 %v1469
  %v1508 = vpop.f32.mrf.mxu0
  %v1509 = vadd.f32 0.0, %v1508
  %v1510 = vpop.f32.mrf.mxu0
  %v1511 = vadd.f32 0.0, %v1510
  %1512 = vdwg.mxu0
  %1513 = vmatpush.bf16.msra.mxu0 %v179
  %1514 = vmatpush.bf16.msra.mxu0 %v175
  %1515 = vmatpush.bf16.msra.mxu0 %v171
  %1516 = vmatpush.bf16.msra.mxu0 %v167
  %1517 = vmatpush.bf16.msra.mxu0 %v163
  %1518 = vmatpush.bf16.msra.mxu0 %v159
  %1519 = vmatpush.bf16.msra.mxu0 %v155
  %1520 = vmatpush.bf16.msra.mxu0 %v151
  %1521 = vmatmul.bf16.gmra.mxu0 %v1469
  %v1522 = vpop.f32.mrf.mxu0
  %v1523 = vadd.f32 0.0, %v1522
  %v1524 = vpop.f32.mrf.mxu0
  %v1525 = vadd.f32 0.0, %v1524
  %1526 = vdwg.mxu0
  %v1527 = vadd.f32 %v1457, %v1481
  %v1528 = vadd.f32 %v1458, %v1495
  %v1529 = vadd.f32 %v1459, %v1509
  %v1530 = vadd.f32 %v1460, %v1523
  %v1531 = vadd.f32 %v1461, %v1483
  %v1532 = vadd.f32 %v1462, %v1497
  %v1533 = vadd.f32 %v1463, %v1511
  %v1534 = vadd.f32 %v1464, %v1525
  %v1535 = vxor.u32 %v1527, 2147483648
  %v1536 = vxor.u32 %v1531, 2147483648
  %v1537 = vmul.f32 %v1535, 1.442695
  %v1538 = vpow.pop %v1537
  %v1539 = vmul.f32 %v1536, 1.442695
  %v1540 = vpow.pop %v1539
  %v1541 = vadd.f32 %v1538, 1.0
  %v1542 = vadd.f32 %v1540, 1.0
  %v1543 = vrcp.pop %v1541
  %v1544 = vmul.f32 %v1541, %v1543
  %v1545 = vsub.f32 1.0, %v1544
  %v1546 = vmul.f32 %v1543, %v1545
  %v1547 = vadd.f32 %v1543, %v1546
  %vm1548 = vweird.f32 %v1541
  %vm1549 = vweird.f32 %v1543
  %vm1550 = vmor %vm1548, %vm1549
  %v1551 = vsel %vm1550, %v1543, %v1547
  %v1552 = vand.u32 2147483647, %v1541
  %vm1553 = vcmp.eq.f32.partialorder %v1552, 8.507059e+37
  %v1554 = vand.u32 %v1541, 2147483648
  %v1555 = vor.u32 1.1754944e-38, %v1554
  %v1556 = vsel %vm1553, %v1555, %v1551
  %v1557 = vmul.f32 1.0, %v1556
  %v1558 = vrcp.pop %v1542
  %v1559 = vmul.f32 %v1542, %v1558
  %v1560 = vsub.f32 1.0, %v1559
  %v1561 = vmul.f32 %v1558, %v1560
  %v1562 = vadd.f32 %v1558, %v1561
  %vm1563 = vweird.f32 %v1542
  %vm1564 = vweird.f32 %v1558
  %vm1565 = vmor %vm1563, %vm1564
  %v1566 = vsel %vm1565, %v1558, %v1562
  %v1567 = vand.u32 2147483647, %v1542
  %vm1568 = vcmp.eq.f32.partialorder %v1567, 8.507059e+37
  %v1569 = vand.u32 %v1542, 2147483648
  %v1570 = vor.u32 1.1754944e-38, %v1569
  %v1571 = vsel %vm1568, %v1570, %v1566
  %v1572 = vmul.f32 1.0, %v1571
  %v1573 = vxor.u32 %v1528, 2147483648
  %v1574 = vxor.u32 %v1532, 2147483648
  %v1575 = vmul.f32 %v1573, 1.442695
  %v1576 = vpow.pop %v1575
  %v1577 = vmul.f32 %v1574, 1.442695
  %v1578 = vpow.pop %v1577
  %v1579 = vadd.f32 %v1576, 1.0
  %v1580 = vadd.f32 %v1578, 1.0
  %v1581 = vrcp.pop %v1579
  %v1582 = vmul.f32 %v1579, %v1581
  %v1583 = vsub.f32 1.0, %v1582
  %v1584 = vmul.f32 %v1581, %v1583
  %v1585 = vadd.f32 %v1581, %v1584
  %vm1586 = vweird.f32 %v1579
  %vm1587 = vweird.f32 %v1581
  %vm1588 = vmor %vm1586, %vm1587
  %v1589 = vsel %vm1588, %v1581, %v1585
  %v1590 = vand.u32 2147483647, %v1579
  %vm1591 = vcmp.eq.f32.partialorder %v1590, 8.507059e+37
  %v1592 = vand.u32 %v1579, 2147483648
  %v1593 = vor.u32 1.1754944e-38, %v1592
  %v1594 = vsel %vm1591, %v1593, %v1589
  %v1595 = vmul.f32 1.0, %v1594
  %v1596 = vrcp.pop %v1580
  %v1597 = vmul.f32 %v1580, %v1596
  %v1598 = vsub.f32 1.0, %v1597
  %v1599 = vmul.f32 %v1596, %v1598
  %v1600 = vadd.f32 %v1596, %v1599
  %vm1601 = vweird.f32 %v1580
  %vm1602 = vweird.f32 %v1596
  %vm1603 = vmor %vm1601, %vm1602
  %v1604 = vsel %vm1603, %v1596, %v1600
  %v1605 = vand.u32 2147483647, %v1580
  %vm1606 = vcmp.eq.f32.partialorder %v1605, 8.507059e+37
  %v1607 = vand.u32 %v1580, 2147483648
  %v1608 = vor.u32 1.1754944e-38, %v1607
  %v1609 = vsel %vm1606, %v1608, %v1604
  %v1610 = vmul.f32 1.0, %v1609
  %v1611 = vtanh.pop %v1529
  %v1612 = vtanh.pop %v1533
  %v1613 = vxor.u32 %v1530, 2147483648
  %v1614 = vxor.u32 %v1534, 2147483648
  %v1615 = vmul.f32 %v1613, 1.442695
  %v1616 = vpow.pop %v1615
  %v1617 = vmul.f32 %v1614, 1.442695
  %v1618 = vpow.pop %v1617
  %v1619 = vadd.f32 %v1616, 1.0
  %v1620 = vadd.f32 %v1618, 1.0
  %v1621 = vrcp.pop %v1619
  %v1622 = vmul.f32 %v1619, %v1621
  %v1623 = vsub.f32 1.0, %v1622
  %v1624 = vmul.f32 %v1621, %v1623
  %v1625 = vadd.f32 %v1621, %v1624
  %vm1626 = vweird.f32 %v1619
  %vm1627 = vweird.f32 %v1621
  %vm1628 = vmor %vm1626, %vm1627
  %v1629 = vsel %vm1628, %v1621, %v1625
  %v1630 = vand.u32 2147483647, %v1619
  %vm1631 = vcmp.eq.f32.partialorder %v1630, 8.507059e+37
  %v1632 = vand.u32 %v1619, 2147483648
  %v1633 = vor.u32 1.1754944e-38, %v1632
  %v1634 = vsel %vm1631, %v1633, %v1629
  %v1635 = vmul.f32 1.0, %v1634
  %v1636 = vrcp.pop %v1620
  %v1637 = vmul.f32 %v1620, %v1636
  %v1638 = vsub.f32 1.0, %v1637
  %v1639 = vmul.f32 %v1636, %v1638
  %v1640 = vadd.f32 %v1636, %v1639
  %vm1641 = vweird.f32 %v1620
  %vm1642 = vweird.f32 %v1636
  %vm1643 = vmor %vm1641, %vm1642
  %v1644 = vsel %vm1643, %v1636, %v1640
  %v1645 = vand.u32 2147483647, %v1620
  %vm1646 = vcmp.eq.f32.partialorder %v1645, 8.507059e+37
  %v1647 = vand.u32 %v1620, 2147483648
  %v1648 = vor.u32 1.1754944e-38, %v1647
  %v1649 = vsel %vm1646, %v1648, %v1644
  %v1650 = vmul.f32 1.0, %v1649
  %v1651 = vmul.f32 %v1595, %v1445
  %v1652 = vmul.f32 %v1610, %v1446
  %v1653 = vmul.f32 %v1557, %v1611
  %v1654 = vmul.f32 %v1572, %v1612
  %v1655 = vadd.f32 %v1651, %v1653
  %v1656 = vadd.f32 %v1652, %v1654
  %v1657 = vtanh.pop %v1655
  %v1658 = vtanh.pop %v1656
  %v1659 = vmul.f32 %v1635, %v1657
  %v1660 = vmul.f32 %v1650, %v1658
  %v1661 = vpack.c.bf16 %v1659, %v1659
  %v1662 = vpack.c.bf16 %v1660, %v1660
  %s1663 = scalar_lea.vmem %s2, 48
  %1664 = vst [vmem:[%s1663] sm:$0xf] %v1661
  %1665 = vst [vmem:[%s1663 + $0x4] sm:$0xf] %v1662
  %s1666 = scalar_lea.vmem %s0, 448
  %v1667 = vld [vmem:[%s1666] sm:$0xff]
  %v1668 = vld [vmem:[%s1666 + $0x8] sm:$0xff]
  %v1669 = vld [vmem:[%s1666 + $0x10] sm:$0xff]
  %v1670 = vld [vmem:[%s1666 + $0x18] sm:$0xff]
  %v1671 = vld [vmem:[%s1666 + $0x20] sm:$0xff]
  %v1672 = vld [vmem:[%s1666 + $0x28] sm:$0xff]
  %v1673 = vld [vmem:[%s1666 + $0x30] sm:$0xff]
  %v1674 = vld [vmem:[%s1666 + $0x38] sm:$0xff]
  %v1677 = vunpack.c.l.b16 %v1661
  %v1678 = vunpack.c.l.b16 %v1662
  %v1679 = vpack.c.b16 %v1678, %v1677
  %1681 = vmatpush.bf16.msra.mxu0 %v176
  %1682 = vmatpush.bf16.msra.mxu0 %v172
  %1683 = vmatpush.bf16.msra.mxu0 %v168
  %1684 = vmatpush.bf16.msra.mxu0 %v164
  %1685 = vmatpush.bf16.msra.mxu0 %v160
  %1686 = vmatpush.bf16.msra.mxu0 %v156
  %1687 = vmatpush.bf16.msra.mxu0 %v152
  %1688 = vmatpush.bf16.msra.mxu0 %v148
  %1689 = vmatmul.bf16.gmra.mxu0 %v1679
  %v1690 = vpop.f32.mrf.mxu0
  %v1691 = vadd.f32 0.0, %v1690
  %v1692 = vpop.f32.mrf.mxu0
  %v1693 = vadd.f32 0.0, %v1692
  %1694 = vdwg.mxu0
  %1695 = vmatpush.bf16.msra.mxu0 %v177
  %1696 = vmatpush.bf16.msra.mxu0 %v173
  %1697 = vmatpush.bf16.msra.mxu0 %v169
  %1698 = vmatpush.bf16.msra.mxu0 %v165
  %1699 = vmatpush.bf16.msra.mxu0 %v161
  %1700 = vmatpush.bf16.msra.mxu0 %v157
  %1701 = vmatpush.bf16.msra.mxu0 %v153
  %1702 = vmatpush.bf16.msra.mxu0 %v149
  %1703 = vmatmul.bf16.gmra.mxu0 %v1679
  %v1704 = vpop.f32.mrf.mxu0
  %v1705 = vadd.f32 0.0, %v1704
  %v1706 = vpop.f32.mrf.mxu0
  %v1707 = vadd.f32 0.0, %v1706
  %1708 = vdwg.mxu0
  %1709 = vmatpush.bf16.msra.mxu0 %v178
  %1710 = vmatpush.bf16.msra.mxu0 %v174
  %1711 = vmatpush.bf16.msra.mxu0 %v170
  %1712 = vmatpush.bf16.msra.mxu0 %v166
  %1713 = vmatpush.bf16.msra.mxu0 %v162
  %1714 = vmatpush.bf16.msra.mxu0 %v158
  %1715 = vmatpush.bf16.msra.mxu0 %v154
  %1716 = vmatpush.bf16.msra.mxu0 %v150
  %1717 = vmatmul.bf16.gmra.mxu0 %v1679
  %v1718 = vpop.f32.mrf.mxu0
  %v1719 = vadd.f32 0.0, %v1718
  %v1720 = vpop.f32.mrf.mxu0
  %v1721 = vadd.f32 0.0, %v1720
  %1722 = vdwg.mxu0
  %1723 = vmatpush.bf16.msra.mxu0 %v179
  %1724 = vmatpush.bf16.msra.mxu0 %v175
  %1725 = vmatpush.bf16.msra.mxu0 %v171
  %1726 = vmatpush.bf16.msra.mxu0 %v167
  %1727 = vmatpush.bf16.msra.mxu0 %v163
  %1728 = vmatpush.bf16.msra.mxu0 %v159
  %1729 = vmatpush.bf16.msra.mxu0 %v155
  %1730 = vmatpush.bf16.msra.mxu0 %v151
  %1731 = vmatmul.bf16.gmra.mxu0 %v1679
  %v1732 = vpop.f32.mrf.mxu0
  %v1733 = vadd.f32 0.0, %v1732
  %v1734 = vpop.f32.mrf.mxu0
  %v1735 = vadd.f32 0.0, %v1734
  %1736 = vdwg.mxu0
  %v1737 = vadd.f32 %v1667, %v1691
  %v1738 = vadd.f32 %v1668, %v1705
  %v1739 = vadd.f32 %v1669, %v1719
  %v1740 = vadd.f32 %v1670, %v1733
  %v1741 = vadd.f32 %v1671, %v1693
  %v1742 = vadd.f32 %v1672, %v1707
  %v1743 = vadd.f32 %v1673, %v1721
  %v1744 = vadd.f32 %v1674, %v1735
  %v1745 = vxor.u32 %v1737, 2147483648
  %v1746 = vxor.u32 %v1741, 2147483648
  %v1747 = vmul.f32 %v1745, 1.442695
  %v1748 = vpow.pop %v1747
  %v1749 = vmul.f32 %v1746, 1.442695
  %v1750 = vpow.pop %v1749
  %v1751 = vadd.f32 %v1748, 1.0
  %v1752 = vadd.f32 %v1750, 1.0
  %v1753 = vrcp.pop %v1751
  %v1754 = vmul.f32 %v1751, %v1753
  %v1755 = vsub.f32 1.0, %v1754
  %v1756 = vmul.f32 %v1753, %v1755
  %v1757 = vadd.f32 %v1753, %v1756
  %vm1758 = vweird.f32 %v1751
  %vm1759 = vweird.f32 %v1753
  %vm1760 = vmor %vm1758, %vm1759
  %v1761 = vsel %vm1760, %v1753, %v1757
  %v1762 = vand.u32 2147483647, %v1751
  %vm1763 = vcmp.eq.f32.partialorder %v1762, 8.507059e+37
  %v1764 = vand.u32 %v1751, 2147483648
  %v1765 = vor.u32 1.1754944e-38, %v1764
  %v1766 = vsel %vm1763, %v1765, %v1761
  %v1767 = vmul.f32 1.0, %v1766
  %v1768 = vrcp.pop %v1752
  %v1769 = vmul.f32 %v1752, %v1768
  %v1770 = vsub.f32 1.0, %v1769
  %v1771 = vmul.f32 %v1768, %v1770
  %v1772 = vadd.f32 %v1768, %v1771
  %vm1773 = vweird.f32 %v1752
  %vm1774 = vweird.f32 %v1768
  %vm1775 = vmor %vm1773, %vm1774
  %v1776 = vsel %vm1775, %v1768, %v1772
  %v1777 = vand.u32 2147483647, %v1752
  %vm1778 = vcmp.eq.f32.partialorder %v1777, 8.507059e+37
  %v1779 = vand.u32 %v1752, 2147483648
  %v1780 = vor.u32 1.1754944e-38, %v1779
  %v1781 = vsel %vm1778, %v1780, %v1776
  %v1782 = vmul.f32 1.0, %v1781
  %v1783 = vxor.u32 %v1738, 2147483648
  %v1784 = vxor.u32 %v1742, 2147483648
  %v1785 = vmul.f32 %v1783, 1.442695
  %v1786 = vpow.pop %v1785
  %v1787 = vmul.f32 %v1784, 1.442695
  %v1788 = vpow.pop %v1787
  %v1789 = vadd.f32 %v1786, 1.0
  %v1790 = vadd.f32 %v1788, 1.0
  %v1791 = vrcp.pop %v1789
  %v1792 = vmul.f32 %v1789, %v1791
  %v1793 = vsub.f32 1.0, %v1792
  %v1794 = vmul.f32 %v1791, %v1793
  %v1795 = vadd.f32 %v1791, %v1794
  %vm1796 = vweird.f32 %v1789
  %vm1797 = vweird.f32 %v1791
  %vm1798 = vmor %vm1796, %vm1797
  %v1799 = vsel %vm1798, %v1791, %v1795
  %v1800 = vand.u32 2147483647, %v1789
  %vm1801 = vcmp.eq.f32.partialorder %v1800, 8.507059e+37
  %v1802 = vand.u32 %v1789, 2147483648
  %v1803 = vor.u32 1.1754944e-38, %v1802
  %v1804 = vsel %vm1801, %v1803, %v1799
  %v1805 = vmul.f32 1.0, %v1804
  %v1806 = vrcp.pop %v1790
  %v1807 = vmul.f32 %v1790, %v1806
  %v1808 = vsub.f32 1.0, %v1807
  %v1809 = vmul.f32 %v1806, %v1808
  %v1810 = vadd.f32 %v1806, %v1809
  %vm1811 = vweird.f32 %v1790
  %vm1812 = vweird.f32 %v1806
  %vm1813 = vmor %vm1811, %vm1812
  %v1814 = vsel %vm1813, %v1806, %v1810
  %v1815 = vand.u32 2147483647, %v1790
  %vm1816 = vcmp.eq.f32.partialorder %v1815, 8.507059e+37
  %v1817 = vand.u32 %v1790, 2147483648
  %v1818 = vor.u32 1.1754944e-38, %v1817
  %v1819 = vsel %vm1816, %v1818, %v1814
  %v1820 = vmul.f32 1.0, %v1819
  %v1821 = vtanh.pop %v1739
  %v1822 = vtanh.pop %v1743
  %v1823 = vxor.u32 %v1740, 2147483648
  %v1824 = vxor.u32 %v1744, 2147483648
  %v1825 = vmul.f32 %v1823, 1.442695
  %v1826 = vpow.pop %v1825
  %v1827 = vmul.f32 %v1824, 1.442695
  %v1828 = vpow.pop %v1827
  %v1829 = vadd.f32 %v1826, 1.0
  %v1830 = vadd.f32 %v1828, 1.0
  %v1831 = vrcp.pop %v1829
  %v1832 = vmul.f32 %v1829, %v1831
  %v1833 = vsub.f32 1.0, %v1832
  %v1834 = vmul.f32 %v1831, %v1833
  %v1835 = vadd.f32 %v1831, %v1834
  %vm1836 = vweird.f32 %v1829
  %vm1837 = vweird.f32 %v1831
  %vm1838 = vmor %vm1836, %vm1837
  %v1839 = vsel %vm1838, %v1831, %v1835
  %v1840 = vand.u32 2147483647, %v1829
  %vm1841 = vcmp.eq.f32.partialorder %v1840, 8.507059e+37
  %v1842 = vand.u32 %v1829, 2147483648
  %v1843 = vor.u32 1.1754944e-38, %v1842
  %v1844 = vsel %vm1841, %v1843, %v1839
  %v1845 = vmul.f32 1.0, %v1844
  %v1846 = vrcp.pop %v1830
  %v1847 = vmul.f32 %v1830, %v1846
  %v1848 = vsub.f32 1.0, %v1847
  %v1849 = vmul.f32 %v1846, %v1848
  %v1850 = vadd.f32 %v1846, %v1849
  %vm1851 = vweird.f32 %v1830
  %vm1852 = vweird.f32 %v1846
  %vm1853 = vmor %vm1851, %vm1852
  %v1854 = vsel %vm1853, %v1846, %v1850
  %v1855 = vand.u32 2147483647, %v1830
  %vm1856 = vcmp.eq.f32.partialorder %v1855, 8.507059e+37
  %v1857 = vand.u32 %v1830, 2147483648
  %v1858 = vor.u32 1.1754944e-38, %v1857
  %v1859 = vsel %vm1856, %v1858, %v1854
  %v1860 = vmul.f32 1.0, %v1859
  %v1861 = vmul.f32 %v1805, %v1655
  %v1862 = vmul.f32 %v1820, %v1656
  %v1863 = vmul.f32 %v1767, %v1821
  %v1864 = vmul.f32 %v1782, %v1822
  %v1865 = vadd.f32 %v1861, %v1863
  %v1866 = vadd.f32 %v1862, %v1864
  %v1867 = vtanh.pop %v1865
  %v1868 = vtanh.pop %v1866
  %v1869 = vmul.f32 %v1845, %v1867
  %v1870 = vmul.f32 %v1860, %v1868
  %v1871 = vpack.c.bf16 %v1869, %v1869
  %v1872 = vpack.c.bf16 %v1870, %v1870
  %s1873 = scalar_lea.vmem %s2, 56
  %1874 = vst [vmem:[%s1873] sm:$0xf] %v1871
  %1875 = vst [vmem:[%s1873 + $0x4] sm:$0xf] %v1872
  %s1876 = scalar_lea.vmem %s0, 512
  %v1877 = vld [vmem:[%s1876] sm:$0xff]
  %v1878 = vld [vmem:[%s1876 + $0x8] sm:$0xff]
  %v1879 = vld [vmem:[%s1876 + $0x10] sm:$0xff]
  %v1880 = vld [vmem:[%s1876 + $0x18] sm:$0xff]
  %v1881 = vld [vmem:[%s1876 + $0x20] sm:$0xff]
  %v1882 = vld [vmem:[%s1876 + $0x28] sm:$0xff]
  %v1883 = vld [vmem:[%s1876 + $0x30] sm:$0xff]
  %v1884 = vld [vmem:[%s1876 + $0x38] sm:$0xff]
  %v1887 = vunpack.c.l.b16 %v1871
  %v1888 = vunpack.c.l.b16 %v1872
  %v1889 = vpack.c.b16 %v1888, %v1887
  %1891 = vmatpush.bf16.msra.mxu0 %v176
  %1892 = vmatpush.bf16.msra.mxu0 %v172
  %1893 = vmatpush.bf16.msra.mxu0 %v168
  %1894 = vmatpush.bf16.msra.mxu0 %v164
  %1895 = vmatpush.bf16.msra.mxu0 %v160
  %1896 = vmatpush.bf16.msra.mxu0 %v156
  %1897 = vmatpush.bf16.msra.mxu0 %v152
  %1898 = vmatpush.bf16.msra.mxu0 %v148
  %1899 = vmatmul.bf16.gmra.mxu0 %v1889
  %v1900 = vpop.f32.mrf.mxu0
  %v1901 = vadd.f32 0.0, %v1900
  %v1902 = vpop.f32.mrf.mxu0
  %v1903 = vadd.f32 0.0, %v1902
  %1904 = vdwg.mxu0
  %1905 = vmatpush.bf16.msra.mxu0 %v177
  %1906 = vmatpush.bf16.msra.mxu0 %v173
  %1907 = vmatpush.bf16.msra.mxu0 %v169
  %1908 = vmatpush.bf16.msra.mxu0 %v165
  %1909 = vmatpush.bf16.msra.mxu0 %v161
  %1910 = vmatpush.bf16.msra.mxu0 %v157
  %1911 = vmatpush.bf16.msra.mxu0 %v153
  %1912 = vmatpush.bf16.msra.mxu0 %v149
  %1913 = vmatmul.bf16.gmra.mxu0 %v1889
  %v1914 = vpop.f32.mrf.mxu0
  %v1915 = vadd.f32 0.0, %v1914
  %v1916 = vpop.f32.mrf.mxu0
  %v1917 = vadd.f32 0.0, %v1916
  %1918 = vdwg.mxu0
  %1919 = vmatpush.bf16.msra.mxu0 %v178
  %1920 = vmatpush.bf16.msra.mxu0 %v174
  %1921 = vmatpush.bf16.msra.mxu0 %v170
  %1922 = vmatpush.bf16.msra.mxu0 %v166
  %1923 = vmatpush.bf16.msra.mxu0 %v162
  %1924 = vmatpush.bf16.msra.mxu0 %v158
  %1925 = vmatpush.bf16.msra.mxu0 %v154
  %1926 = vmatpush.bf16.msra.mxu0 %v150
  %1927 = vmatmul.bf16.gmra.mxu0 %v1889
  %v1928 = vpop.f32.mrf.mxu0
  %v1929 = vadd.f32 0.0, %v1928
  %v1930 = vpop.f32.mrf.mxu0
  %v1931 = vadd.f32 0.0, %v1930
  %1932 = vdwg.mxu0
  %1933 = vmatpush.bf16.msra.mxu0 %v179
  %1934 = vmatpush.bf16.msra.mxu0 %v175
  %1935 = vmatpush.bf16.msra.mxu0 %v171
  %1936 = vmatpush.bf16.msra.mxu0 %v167
  %1937 = vmatpush.bf16.msra.mxu0 %v163
  %1938 = vmatpush.bf16.msra.mxu0 %v159
  %1939 = vmatpush.bf16.msra.mxu0 %v155
  %1940 = vmatpush.bf16.msra.mxu0 %v151
  %1941 = vmatmul.bf16.gmra.mxu0 %v1889
  %v1942 = vpop.f32.mrf.mxu0
  %v1943 = vadd.f32 0.0, %v1942
  %v1944 = vpop.f32.mrf.mxu0
  %v1945 = vadd.f32 0.0, %v1944
  %1946 = vdwg.mxu0
  %v1947 = vadd.f32 %v1877, %v1901
  %v1948 = vadd.f32 %v1878, %v1915
  %v1949 = vadd.f32 %v1879, %v1929
  %v1950 = vadd.f32 %v1880, %v1943
  %v1951 = vadd.f32 %v1881, %v1903
  %v1952 = vadd.f32 %v1882, %v1917
  %v1953 = vadd.f32 %v1883, %v1931
  %v1954 = vadd.f32 %v1884, %v1945
  %v1955 = vxor.u32 %v1947, 2147483648
  %v1956 = vxor.u32 %v1951, 2147483648
  %v1957 = vmul.f32 %v1955, 1.442695
  %v1958 = vpow.pop %v1957
  %v1959 = vmul.f32 %v1956, 1.442695
  %v1960 = vpow.pop %v1959
  %v1961 = vadd.f32 %v1958, 1.0
  %v1962 = vadd.f32 %v1960, 1.0
  %v1963 = vrcp.pop %v1961
  %v1964 = vmul.f32 %v1961, %v1963
  %v1965 = vsub.f32 1.0, %v1964
  %v1966 = vmul.f32 %v1963, %v1965
  %v1967 = vadd.f32 %v1963, %v1966
  %vm1968 = vweird.f32 %v1961
  %vm1969 = vweird.f32 %v1963
  %vm1970 = vmor %vm1968, %vm1969
  %v1971 = vsel %vm1970, %v1963, %v1967
  %v1972 = vand.u32 2147483647, %v1961
  %vm1973 = vcmp.eq.f32.partialorder %v1972, 8.507059e+37
  %v1974 = vand.u32 %v1961, 2147483648
  %v1975 = vor.u32 1.1754944e-38, %v1974
  %v1976 = vsel %vm1973, %v1975, %v1971
  %v1977 = vmul.f32 1.0, %v1976
  %v1978 = vrcp.pop %v1962
  %v1979 = vmul.f32 %v1962, %v1978
  %v1980 = vsub.f32 1.0, %v1979
  %v1981 = vmul.f32 %v1978, %v1980
  %v1982 = vadd.f32 %v1978, %v1981
  %vm1983 = vweird.f32 %v1962
  %vm1984 = vweird.f32 %v1978
  %vm1985 = vmor %vm1983, %vm1984
  %v1986 = vsel %vm1985, %v1978, %v1982
  %v1987 = vand.u32 2147483647, %v1962
  %vm1988 = vcmp.eq.f32.partialorder %v1987, 8.507059e+37
  %v1989 = vand.u32 %v1962, 2147483648
  %v1990 = vor.u32 1.1754944e-38, %v1989
  %v1991 = vsel %vm1988, %v1990, %v1986
  %v1992 = vmul.f32 1.0, %v1991
  %v1993 = vxor.u32 %v1948, 2147483648
  %v1994 = vxor.u32 %v1952, 2147483648
  %v1995 = vmul.f32 %v1993, 1.442695
  %v1996 = vpow.pop %v1995
  %v1997 = vmul.f32 %v1994, 1.442695
  %v1998 = vpow.pop %v1997
  %v1999 = vadd.f32 %v1996, 1.0
  %v2000 = vadd.f32 %v1998, 1.0
  %v2001 = vrcp.pop %v1999
  %v2002 = vmul.f32 %v1999, %v2001
  %v2003 = vsub.f32 1.0, %v2002
  %v2004 = vmul.f32 %v2001, %v2003
  %v2005 = vadd.f32 %v2001, %v2004
  %vm2006 = vweird.f32 %v1999
  %vm2007 = vweird.f32 %v2001
  %vm2008 = vmor %vm2006, %vm2007
  %v2009 = vsel %vm2008, %v2001, %v2005
  %v2010 = vand.u32 2147483647, %v1999
  %vm2011 = vcmp.eq.f32.partialorder %v2010, 8.507059e+37
  %v2012 = vand.u32 %v1999, 2147483648
  %v2013 = vor.u32 1.1754944e-38, %v2012
  %v2014 = vsel %vm2011, %v2013, %v2009
  %v2015 = vmul.f32 1.0, %v2014
  %v2016 = vrcp.pop %v2000
  %v2017 = vmul.f32 %v2000, %v2016
  %v2018 = vsub.f32 1.0, %v2017
  %v2019 = vmul.f32 %v2016, %v2018
  %v2020 = vadd.f32 %v2016, %v2019
  %vm2021 = vweird.f32 %v2000
  %vm2022 = vweird.f32 %v2016
  %vm2023 = vmor %vm2021, %vm2022
  %v2024 = vsel %vm2023, %v2016, %v2020
  %v2025 = vand.u32 2147483647, %v2000
  %vm2026 = vcmp.eq.f32.partialorder %v2025, 8.507059e+37
  %v2027 = vand.u32 %v2000, 2147483648
  %v2028 = vor.u32 1.1754944e-38, %v2027
  %v2029 = vsel %vm2026, %v2028, %v2024
  %v2030 = vmul.f32 1.0, %v2029
  %v2031 = vtanh.pop %v1949
  %v2032 = vtanh.pop %v1953
  %v2033 = vxor.u32 %v1950, 2147483648
  %v2034 = vxor.u32 %v1954, 2147483648
  %v2035 = vmul.f32 %v2033, 1.442695
  %v2036 = vpow.pop %v2035
  %v2037 = vmul.f32 %v2034, 1.442695
  %v2038 = vpow.pop %v2037
  %v2039 = vadd.f32 %v2036, 1.0
  %v2040 = vadd.f32 %v2038, 1.0
  %v2041 = vrcp.pop %v2039
  %v2042 = vmul.f32 %v2039, %v2041
  %v2043 = vsub.f32 1.0, %v2042
  %v2044 = vmul.f32 %v2041, %v2043
  %v2045 = vadd.f32 %v2041, %v2044
  %vm2046 = vweird.f32 %v2039
  %vm2047 = vweird.f32 %v2041
  %vm2048 = vmor %vm2046, %vm2047
  %v2049 = vsel %vm2048, %v2041, %v2045
  %v2050 = vand.u32 2147483647, %v2039
  %vm2051 = vcmp.eq.f32.partialorder %v2050, 8.507059e+37
  %v2052 = vand.u32 %v2039, 2147483648
  %v2053 = vor.u32 1.1754944e-38, %v2052
  %v2054 = vsel %vm2051, %v2053, %v2049
  %v2055 = vmul.f32 1.0, %v2054
  %v2056 = vrcp.pop %v2040
  %v2057 = vmul.f32 %v2040, %v2056
  %v2058 = vsub.f32 1.0, %v2057
  %v2059 = vmul.f32 %v2056, %v2058
  %v2060 = vadd.f32 %v2056, %v2059
  %vm2061 = vweird.f32 %v2040
  %vm2062 = vweird.f32 %v2056
  %vm2063 = vmor %vm2061, %vm2062
  %v2064 = vsel %vm2063, %v2056, %v2060
  %v2065 = vand.u32 2147483647, %v2040
  %vm2066 = vcmp.eq.f32.partialorder %v2065, 8.507059e+37
  %v2067 = vand.u32 %v2040, 2147483648
  %v2068 = vor.u32 1.1754944e-38, %v2067
  %v2069 = vsel %vm2066, %v2068, %v2064
  %v2070 = vmul.f32 1.0, %v2069
  %v2071 = vmul.f32 %v2015, %v1865
  %v2072 = vmul.f32 %v2030, %v1866
  %v2073 = vmul.f32 %v1977, %v2031
  %v2074 = vmul.f32 %v1992, %v2032
  %v2075 = vadd.f32 %v2071, %v2073
  %v2076 = vadd.f32 %v2072, %v2074
  %v2077 = vtanh.pop %v2075
  %v2078 = vtanh.pop %v2076
  %v2079 = vmul.f32 %v2055, %v2077
  %v2080 = vmul.f32 %v2070, %v2078
  %v2081 = vpack.c.bf16 %v2079, %v2079
  %v2082 = vpack.c.bf16 %v2080, %v2080
  %s2083 = scalar_lea.vmem %s2, 64
  %2084 = vst [vmem:[%s2083] sm:$0xf] %v2081
  %2085 = vst [vmem:[%s2083 + $0x4] sm:$0xf] %v2082
  // Predicated region
  $region10: #{caption_decoder_forward.4} parent=0 // pred_check
    _
  $region11: #{caption_decoder_forward.4} parent=0 // pred_check_branch
    %2087 = sbr.rel (0) target = $region13
  $region12: #{caption_decoder_forward.4} parent=0 // pred_region
    _
  $region13: #{caption_decoder_forward.4} parent=0 // pred_fallthru
    _
  // Predicated region
  $region14: #{caption_decoder_forward.4} parent=0 // pred_check
    _
  $region15: #{caption_decoder_forward.4} parent=0 // pred_check_branch
    %2089 = sbr.rel (0) target = $region17
  $region16: #{caption_decoder_forward.4} parent=0 // pred_region
    _
  $region17: #{caption_decoder_forward.4} parent=0 // pred_fallthru
    _

</llo_original>
